<compile_context>
chip_gen: v7x
topology: tpu7x:2x2x1
jax: 0.10.0
libtpu: 0.0.40
codegen_flags: <defaults>
</compile_context>

<pallas_src>
import functools

import numpy as np
import jax
import jax.numpy as jnp
from jax.experimental import pallas as pl
from jax.experimental.pallas import tpu as pltpu

NEG_SLOPE = 0.01   # LeakyReLU negative_slope
LN_EPS = 1e-5      # nn.LayerNorm default eps
BN_EPS = 1e-5      # nn.BatchNorm1d default eps

LANES = 128                       # feature dims padded to a multiple of this (not more)
VMEM_LIMIT = 48 * 1024 * 1024     # explicit scoped-VMEM cap with headroom (v7x: 64 MiB)
X_RESIDENT_BYTES = 8 * 1024 * 1024  # keep X fully VMEM-resident if its bf16 copy fits


def _round_up(x, m):
    return (x + m - 1) // m * m


def _pad2(x, rows, cols):
    return jnp.pad(x, ((0, rows - x.shape[0]), (0, cols - x.shape[1])))


def _leaky_relu(x):
    return jnp.where(x >= 0, x, NEG_SLOPE * x)


def pick_tile(n):
    """Square A_hat tile: as large as 1024, but keep >= 2 row tiles when possible
    (v7x has 2 TensorCores) and never below 256 (lane/sublane dense, low per-step
    overhead).  TM == TK always so n_pad is a multiple of a single tile size."""
    for t in (1024, 512):
        if _round_up(n, t) >= 2 * t:
            return t
    return 256


# ---------------------------------------------------------------------------
# Kernel 1: residual_fc  identity = X @ Wr + br   (tiled over rows, run once)
# ---------------------------------------------------------------------------
def _linear_kernel(x_ref, w_ref, b_ref, o_ref):
    h = jnp.dot(x_ref[...], w_ref[...], preferred_element_type=jnp.float32)
    o_ref[...] = (h + b_ref[...]).astype(o_ref.dtype)


def linear(x, w, b, *, tm, out_dtype=jnp.float32):
    n, fin = x.shape
    fout = w.shape[1]
    return pl.pallas_call(
        _linear_kernel,
        out_shape=jax.ShapeDtypeStruct((n, fout), out_dtype),
        grid_spec=pltpu.PrefetchScalarGridSpec(
            num_scalar_prefetch=0,
            grid=(n // tm,),
            in_specs=[
                pl.BlockSpec((tm, fin), lambda i: (i, 0)),
                pl.BlockSpec((fin, fout), lambda i: (0, 0)),   # weights: DMA once
                pl.BlockSpec((1, fout), lambda i: (0, 0)),
            ],
            out_specs=pl.BlockSpec((tm, fout), lambda i: (i, 0)),
        ),
        compiler_params=pltpu.CompilerParams(
            dimension_semantics=("parallel",),
            vmem_limit_bytes=VMEM_LIMIT,
        ),
    )(x, w, b)


# ---------------------------------------------------------------------------
# Kernel 2: fused GCN layer   Z = A_hat @ (X @ W)   (+ fused epilogues)
#   grid = (row tiles, nonzero k tiles per row);  f32 VMEM accumulator,
#   pl.when init/finalize, block-sparse skip via scalar-prefetched tile tables.
# ---------------------------------------------------------------------------
def _gcn_layer_kernel(ktab_ref, kcnt_ref, a_ref, x_ref, w_ref, s_ref, t_ref,
                      o_ref, acc_ref, *, tk, x_resident):
    i = pl.program_id(0)
    k = pl.program_id(1)

    @pl.when(k == 0)
    def _():
        acc_ref[...] = jnp.zeros_like(acc_ref)

    @pl.when(k < kcnt_ref[i])            # skip padded / all-zero A tiles
    def _():
        if x_resident:
            start = pl.multiple_of(ktab_ref[i, k] * tk, tk)
            x = x_ref[pl.ds(start, tk), :]
        else:
            x = x_ref[...]
        h = jnp.dot(x, w_ref[...], preferred_element_type=jnp.float32)
        acc_ref[...] += jnp.dot(a_ref[...], h.astype(jnp.bfloat16),
                                preferred_element_type=jnp.float32)

    @pl.when(k == pl.num_programs(1) - 1)
    def _():
        # BatchNorm1d (eval fold, conv bias folded into t) + LeakyReLU
        z = acc_ref[...] * s_ref[...] + t_ref[...]
        o_ref[...] = _leaky_relu(z).astype(o_ref.dtype)


def _gcn_final_kernel(ktab_ref, kcnt_ref, a_ref, x_ref, w_ref, s_ref, t_ref,
                      id_ref, lng_ref, lnb_ref, mask_ref,
                      o_ref, acc_ref, *, tk, x_resident, inv_d):
    i = pl.program_id(0)
    k = pl.program_id(1)

    @pl.when(k == 0)
    def _():
        acc_ref[...] = jnp.zeros_like(acc_ref)

    @pl.when(k < kcnt_ref[i])
    def _():
        if x_resident:
            start = pl.multiple_of(ktab_ref[i, k] * tk, tk)
            x = x_ref[pl.ds(start, tk), :]
        else:
            x = x_ref[...]
        h = jnp.dot(x, w_ref[...], preferred_element_type=jnp.float32)
        acc_ref[...] += jnp.dot(a_ref[...], h.astype(jnp.bfloat16),
                                preferred_element_type=jnp.float32)

    @pl.when(k == pl.num_programs(1) - 1)
    def _():
        # x = conv4(x) ; x = x + identity ; x = layer_norm(bn4(x))
        # (conv4 bias folded into t, so bn4(acc + b4 + id) == (acc + id)*s + t')
        z = (acc_ref[...] + id_ref[...]) * s_ref[...] + t_ref[...]
        mask = mask_ref[...]
        # padded lanes of z are exactly 0 (zero-padded W/s/t/identity), so the mean
        # over the real output_dim features only needs the 1/output_dim factor.
        mean = jnp.sum(z, axis=-1, keepdims=True) * inv_d
        cen = (z - mean) * mask
        var = jnp.sum(cen * cen, axis=-1, keepdims=True) * inv_d
        y = cen * jax.lax.rsqrt(var + LN_EPS)
        o_ref[...] = (y * lng_ref[...] + lnb_ref[...]).astype(o_ref.dtype)


def gcn_layer(a, x, w, s, t, ktab, kcnt, *, tile, final=False,
              identity=None, ln_g=None, ln_b=None, mask=None, out_dim_real=None,
              out_dtype=jnp.bfloat16):
    n = a.shape[0]
    fin = x.shape[1]
    f = w.shape[1]
    max_k = ktab.shape[1]
    x_resident = (n * fin * x.dtype.itemsize) <= X_RESIDENT_BYTES

    tile_a = lambda i, k, ktab, kcnt: (i, ktab[i, k])
    row = lambda i, k, ktab, kcnt: (i, 0)
    const = lambda i, k, ktab, kcnt: (0, 0)

    if x_resident:
        x_spec = pl.BlockSpec((n, fin), const)                       # DMA'd once
    else:
        x_spec = pl.BlockSpec((tile, fin), lambda i, k, ktab, kcnt: (ktab[i, k], 0))

    in_specs = [
        pl.BlockSpec((tile, tile), tile_a),   # A_hat tile (bf16, dominant HBM stream)
        x_spec,                               # X (bf16)
        pl.BlockSpec((fin, f), const),        # W (bf16, DMA'd once)
        pl.BlockSpec((1, f), const),          # BN scale
        pl.BlockSpec((1, f), const),          # BN shift (conv bias folded in)
    ]
    args = [a, x, w, s, t]

    if final:
        kernel = functools.partial(_gcn_final_kernel, tk=tile, x_resident=x_resident,
                                   inv_d=1.0 / float(out_dim_real))
        in_specs += [
            pl.BlockSpec((tile, f), row),     # residual identity rows (f32)
            pl.BlockSpec((1, f), const),      # LayerNorm gamma
            pl.BlockSpec((1, f), const),      # LayerNorm beta
            pl.BlockSpec((1, f), const),      # valid-feature mask
        ]
        args += [identity, ln_g, ln_b, mask]
    else:
        kernel = functools.partial(_gcn_layer_kernel, tk=tile, x_resident=x_resident)

    out_item = np.dtype(out_dtype).itemsize
    cost = pl.CostEstimate(
        flops=2 * n * n * f + 2 * n * fin * f * (n // tile),
        transcendentals=n if final else 0,
        bytes_accessed=n * n * a.dtype.itemsize
        + n * fin * x.dtype.itemsize * (1 if x_resident else n // tile)
        + n * f * out_item,
    )

    return pl.pallas_call(
        kernel,
        out_shape=jax.ShapeDtypeStruct((n, f), out_dtype),
        grid_spec=pltpu.PrefetchScalarGridSpec(
            num_scalar_prefetch=2,            # ktab, kcnt -> SMEM, drive index_maps
            grid=(n // tile, max_k),
            in_specs=in_specs,
            out_specs=pl.BlockSpec((tile, f), row),
            scratch_shapes=[pltpu.VMEM((tile, f), jnp.float32)],
        ),
        compiler_params=pltpu.CompilerParams(
            dimension_semantics=("parallel", "arbitrary"),
            vmem_limit_bytes=VMEM_LIMIT,
        ),
        cost_estimate=cost,
    )(ktab, kcnt, *args)


# ---------------------------------------------------------------------------
# Full model forward (1 linear + 4 fused GCN-layer pallas_calls, jitted together)
# ---------------------------------------------------------------------------
def gcn_model_forward(a_bf16, x_bf16, ktab, kcnt, pp, *, output_dim, tile):
    # residual_fc (Linear input_dim -> output_dim), hoisted out of the A-tile loops
    identity = linear(x_bf16, pp["wr"], pp["br"], tm=tile, out_dtype=jnp.float32)

    h = x_bf16
    for l in range(3):
        lp = pp["layers"][l]
        # leaky_relu(bn_l(A_hat @ (h @ W_l) + b_l)); dropout = identity in eval mode
        h = gcn_layer(a_bf16, h, lp["w"], lp["s"], lp["t"], ktab, kcnt,
                      tile=tile, out_dtype=jnp.bfloat16)

    lp = pp["layers"][3]
    out = gcn_layer(a_bf16, h, lp["w"], lp["s"], lp["t"], ktab, kcnt,
                    tile=tile, final=True, identity=identity,
                    ln_g=pp["lng"], ln_b=pp["lnb"], mask=pp["mask"],
                    out_dim_real=output_dim, out_dtype=jnp.float32)
    return out


# ---------------------------------------------------------------------------
# Graph / parameter construction (plain JAX / numpy glue)
# ---------------------------------------------------------------------------
def build_normalized_adjacency(edge_index, num_nodes):
    """A_hat = D^-1/2 (A + I) D^-1/2 from edge_index [2, E] (PyG GCNConv norm,
    scatter-add semantics for duplicate edges)."""
    src, dst = edge_index
    A = jnp.zeros((num_nodes, num_nodes), jnp.float32)
    A = A.at[dst, src].add(1.0)                            # message j -> i
    idx = jnp.arange(num_nodes)
    A = A.at[idx, idx].add(1.0)                            # add self loops
    deg = jnp.sum(A, axis=1)
    d_inv_sqrt = jax.lax.rsqrt(jnp.maximum(deg, 1e-12))
    return A * d_inv_sqrt[:, None] * d_inv_sqrt[None, :]


def build_tile_occupancy(a_pad, tile):
    """Per row tile: list (and count) of k tiles with any nonzero in A_hat.
    Padded entries repeat the last valid index so the pipeline skips re-DMA."""
    a_np = np.asarray(a_pad)
    nt = a_np.shape[0] // tile
    occ = (a_np.reshape(nt, tile, nt, tile) != 0).any(axis=(1, 3))
    kcnt = occ.sum(axis=1).astype(np.int32)
    max_k = max(int(kcnt.max()), 1)
    ktab = np.zeros((nt, max_k), np.int32)
    for i in range(nt):
        idxs = np.nonzero(occ[i])[0]
        if idxs.size:
            ktab[i, :idxs.size] = idxs
            ktab[i, idxs.size:] = idxs[-1]
    return jnp.asarray(ktab), jnp.asarray(kcnt)


def init_params(key, input_dim, hidden_dim, output_dim):
    """Deterministic synthetic parameters mirroring the PyTorch module (eval mode)."""
    def glorot(k, fi, fo):
        limit = jnp.sqrt(6.0 / (fi + fo))
        return jax.random.uniform(k, (fi, fo), jnp.float32, -limit, limit)

    dims = [(input_dim, hidden_dim), (hidden_dim, hidden_dim),
            (hidden_dim, hidden_dim), (hidden_dim, output_dim)]
    keys = jax.random.split(key, 10)
    layers = []
    for i, (fi, fo) in enumerate(dims):
        w = glorot(keys[2 * i], fi, fo)                    # GCNConv weight
        b = jax.random.uniform(keys[2 * i + 1], (1, fo), jnp.float32, -0.1, 0.1)
        gamma = jnp.ones((1, fo), jnp.float32)             # BatchNorm1d (eval fold)
        beta = jnp.zeros((1, fo), jnp.float32)
        run_mean = jnp.zeros((1, fo), jnp.float32)
        run_var = jnp.ones((1, fo), jnp.float32)
        scale = gamma * jax.lax.rsqrt(run_var + BN_EPS)
        shift = beta - run_mean * scale
        layers.append(dict(w=w, b=b, s=scale, t=shift))

    wr = glorot(keys[8], input_dim, output_dim)            # residual_fc
    br = jax.random.uniform(keys[9], (1, output_dim), jnp.float32, -0.1, 0.1)
    lng = jnp.ones((1, output_dim), jnp.float32)           # LayerNorm(output_dim)
    lnb = jnp.zeros((1, output_dim), jnp.float32)
    return dict(layers=layers, wr=wr, br=br, lng=lng, lnb=lnb)


def pad_params(p, input_dim, hidden_dim, output_dim):
    """Zero-pad feature axes to 128 lanes, fold conv bias into BN shift, cast W bf16."""
    fi_p = _round_up(input_dim, LANES)
    fh_p = _round_up(hidden_dim, LANES)
    fo_p = _round_up(output_dim, LANES)
    dims_p = [(fi_p, fh_p), (fh_p, fh_p), (fh_p, fh_p), (fh_p, fo_p)]
    layers = []
    for lp, (a, b) in zip(p["layers"], dims_p):
        t_fold = lp["b"] * lp["s"] + lp["t"]               # fold GCNConv bias into BN shift
        layers.append(dict(
            w=_pad2(lp["w"], a, b).astype(jnp.bfloat16),
            s=_pad2(lp["s"], 1, b),
            t=_pad2(t_fold, 1, b),
        ))
    mask = jnp.zeros((1, fo_p), jnp.float32).at[:, :output_dim].set(1.0)
    return dict(
        layers=layers,
        wr=_pad2(p["wr"], fi_p, fo_p).astype(jnp.bfloat16),
        br=_pad2(p["br"], 1, fo_p),
        lng=_pad2(p["lng"], 1, fo_p),
        lnb=_pad2(p["lnb"], 1, fo_p),
        mask=mask,
    ), fi_p, fo_p


if __name__ == "__main__":
    # Small deterministic problem: 16 nodes, input_dim=4, hidden_dim=32, output_dim=8.
    N, INPUT_DIM, HIDDEN_DIM, OUTPUT_DIM = 16, 4, 32, 8

    key = jax.random.PRNGKey(0)
    kx, kp = jax.random.split(key)

    # Node features [N, input_dim]
    x = jax.random.normal(kx, (N, INPUT_DIM), jnp.float32)

    # Synthetic bidirectional ring graph: edge_index [2, 2N]
    idx = jnp.arange(N)
    src = jnp.concatenate([idx, (idx + 1) % N])
    dst = jnp.concatenate([(idx + 1) % N, idx])
    edge_index = jnp.stack([src, dst], axis=0)

    # Dense symmetric-normalized adjacency, padded to the tile size, stored bf16.
    a_hat = build_normalized_adjacency(edge_index, N)
    tile = pick_tile(N)
    n_pad = _round_up(max(N, tile), tile)
    a_pad = _pad2(a_hat, n_pad, n_pad)
    a_bf16 = a_pad.astype(jnp.bfloat16)

    # Block-sparse tile tables (scalar-prefetched into SMEM).
    ktab, kcnt = build_tile_occupancy(a_pad, tile)

    # Parameters (real-sized, mirroring the nn.Module), then lane-padded / bias-folded.
    params = init_params(kp, INPUT_DIM, HIDDEN_DIM, OUTPUT_DIM)
    pp, fi_p, fo_p = pad_params(params, INPUT_DIM, HIDDEN_DIM, OUTPUT_DIM)

    x_bf16 = _pad2(x, n_pad, fi_p).astype(jnp.bfloat16)

    fwd = jax.jit(gcn_model_forward, static_argnames=("output_dim", "tile"))
    out_full = fwd(a_bf16, x_bf16, ktab, kcnt, pp, output_dim=OUTPUT_DIM, tile=tile)
    out = out_full[:N, :OUTPUT_DIM]
    jax.block_until_ready(out)

    assert out.shape == (N, OUTPUT_DIM)
    assert bool(jnp.all(jnp.isfinite(out)))
    print("KERNEL_OK")
</pallas_src>

<mosaic_0001>
module attributes {stable_mosaic.version = 11 : i64} {
  func.func @_linear_kernel(%arg0: i32, %arg1: memref<256x128xbf16, #tpu.memory_space<vmem>>, %arg2: memref<128x128xbf16, #tpu.memory_space<vmem>>, %arg3: memref<1x128xf32, #tpu.memory_space<vmem>>, %arg4: memref<256x128xf32, #tpu.memory_space<vmem>>) attributes {dimension_semantics = [#tpu.dimension_semantics<parallel>], iteration_bounds = array<i64: 1>, scalar_prefetch = 0 : i64, scratch_operands = 0 : i64, tpu.core_type = #tpu.core_type<tc>, window_params = [{transform_indices = @transform_0, window_bounds = array<i64: 256, 128>}, {pipeline_mode = #tpu.pipeline_mode<synchronous>, transform_indices = @transform_1, window_bounds = array<i64: 128, 128>}, {pipeline_mode = #tpu.pipeline_mode<synchronous>, transform_indices = @transform_2, window_bounds = array<i64: 1, 128>}, {transform_indices = @transform_3, window_bounds = array<i64: 256, 128>}]} {
    %c0 = arith.constant 0 : index
    %c0_0 = arith.constant 0 : index
    %0 = vector.load %arg1[%c0, %c0_0] : memref<256x128xbf16, #tpu.memory_space<vmem>>, vector<256x128xbf16>
    %c0_1 = arith.constant 0 : index
    %c0_2 = arith.constant 0 : index
    %1 = vector.load %arg2[%c0_1, %c0_2] : memref<128x128xbf16, #tpu.memory_space<vmem>>, vector<128x128xbf16>
    %cst = arith.constant dense<0.000000e+00> : vector<256x128xf32>
    %2 = tpu.matmul %0, %1, %cst {dimension_numbers = #tpu.dot_dimension_numbers<[1], [0], [0], [1], [0, 0, 1, 1], [], []>} : vector<256x128xbf16>, vector<128x128xbf16>, vector<256x128xf32> -> vector<256x128xf32>
    %c0_3 = arith.constant 0 : index
    %c0_4 = arith.constant 0 : index
    %3 = vector.load %arg3[%c0_3, %c0_4] : memref<1x128xf32, #tpu.memory_space<vmem>>, vector<1x128xf32>
    %4 = vector.broadcast %3 : vector<1x128xf32> to vector<256x128xf32>
    %5 = arith.addf %2, %4 : vector<256x128xf32>
    %c0_5 = arith.constant 0 : index
    %c0_6 = arith.constant 0 : index
    %6 = vector.load %arg4[%c0_5, %c0_6] : memref<256x128xf32, #tpu.memory_space<vmem>>, vector<256x128xf32>
    tpu.vector_store %arg4[%c0_5, %c0_6], %5 {strides = array<i32>} : memref<256x128xf32, #tpu.memory_space<vmem>>, vector<256x128xf32>,
    return
  }
  func.func @transform_0(%arg0: i32) -> (i32, i32) {
    %c0_i32 = arith.constant 0 : i32
    %c0_i32_0 = arith.constant 0 : i32
    return %arg0, %c0_i32 : i32, i32
  }
  func.func @transform_1(%arg0: i32) -> (i32, i32) {
    %c0_i32 = arith.constant 0 : i32
    %c0_i32_0 = arith.constant 0 : i32
    %c0_i32_1 = arith.constant 0 : i32
    return %c0_i32, %c0_i32_0 : i32, i32
  }
  func.func @transform_2(%arg0: i32) -> (i32, i32) {
    %c0_i32 = arith.constant 0 : i32
    %c0_i32_0 = arith.constant 0 : i32
    %c0_i32_1 = arith.constant 0 : i32
    return %c0_i32, %c0_i32_0 : i32, i32
  }
  func.func @transform_3(%arg0: i32) -> (i32, i32) {
    %c0_i32 = arith.constant 0 : i32
    %c0_i32_0 = arith.constant 0 : i32
    return %arg0, %c0_i32 : i32, i32
  }
}

module attributes {stable_mosaic.version = 11 : i64} {
  func.func @_gcn_final_kernel(%arg0: i32, %arg1: i32, %arg2: memref<1x1xi32, #tpu.memory_space<smem>>, %arg3: memref<1xi32, #tpu.memory_space<smem>>, %arg4: memref<256x256xbf16, #tpu.memory_space<vmem>>, %arg5: memref<256x128xbf16, #tpu.memory_space<vmem>>, %arg6: memref<128x128xbf16, #tpu.memory_space<vmem>>, %arg7: memref<1x128xf32, #tpu.memory_space<vmem>>, %arg8: memref<1x128xf32, #tpu.memory_space<vmem>>, %arg9: memref<256x128xf32, #tpu.memory_space<vmem>>, %arg10: memref<1x128xf32, #tpu.memory_space<vmem>>, %arg11: memref<1x128xf32, #tpu.memory_space<vmem>>, %arg12: memref<1x128xf32, #tpu.memory_space<vmem>>, %arg13: memref<256x128xf32, #tpu.memory_space<vmem>>, %arg14: memref<256x128xf32, #tpu.memory_space<vmem>>) attributes {dimension_semantics = [#tpu.dimension_semantics<parallel>, #tpu.dimension_semantics<arbitrary>], iteration_bounds = array<i64: 1, 1>, scalar_prefetch = 2 : i64, scratch_operands = 1 : i64, tpu.core_type = #tpu.core_type<tc>, window_params = [{transform_indices = @transform_0, window_bounds = array<i64: 256, 256>}, {pipeline_mode = #tpu.pipeline_mode<synchronous>, transform_indices = @transform_1, window_bounds = array<i64: 256, 128>}, {pipeline_mode = #tpu.pipeline_mode<synchronous>, transform_indices = @transform_2, window_bounds = array<i64: 128, 128>}, {pipeline_mode = #tpu.pipeline_mode<synchronous>, transform_indices = @transform_3, window_bounds = array<i64: 1, 128>}, {pipeline_mode = #tpu.pipeline_mode<synchronous>, transform_indices = @transform_4, window_bounds = array<i64: 1, 128>}, {transform_indices = @transform_5, window_bounds = array<i64: 256, 128>}, {pipeline_mode = #tpu.pipeline_mode<synchronous>, transform_indices = @transform_6, window_bounds = array<i64: 1, 128>}, {pipeline_mode = #tpu.pipeline_mode<synchronous>, transform_indices = @transform_7, window_bounds = array<i64: 1, 128>}, {pipeline_mode = #tpu.pipeline_mode<synchronous>, transform_indices = @transform_8, window_bounds = array<i64: 1, 128>}, {transform_indices = @transform_9, window_bounds = array<i64: 256, 128>}]} {
    %c0_i32 = arith.constant 0 : i32
    %0 = arith.cmpi eq, %arg1, %c0_i32 : i32
    %1 = arith.extui %0 : i1 to i32
    %c0_i32_0 = arith.constant 0 : i32
    %2 = arith.cmpi ne, %1, %c0_i32_0 : i32
    scf.if %2 {
      %cst = arith.constant 0.000000e+00 : f32
      %11 = vector.broadcast %cst : f32 to vector<256x128xf32>
      %c0 = arith.constant 0 : index
      %c0_4 = arith.constant 0 : index
      %12 = vector.load %arg14[%c0, %c0_4] : memref<256x128xf32, #tpu.memory_space<vmem>>, vector<256x128xf32>
      tpu.vector_store %arg14[%c0, %c0_4], %11 {strides = array<i32>} : memref<256x128xf32, #tpu.memory_space<vmem>>, vector<256x128xf32>,
    } else {
    }
    %3 = arith.index_cast %arg0 : i32 to index
    %4 = memref.load %arg3[%3] : memref<1xi32, #tpu.memory_space<smem>>
    %5 = arith.cmpi slt, %arg1, %4 : i32
    %6 = arith.extui %5 : i1 to i32
    %c0_i32_1 = arith.constant 0 : i32
    %7 = arith.cmpi ne, %6, %c0_i32_1 : i32
    scf.if %7 {
      %11 = arith.index_cast %arg0 : i32 to index
      %12 = arith.index_cast %arg1 : i32 to index
      %13 = memref.load %arg2[%11, %12] : memref<1x1xi32, #tpu.memory_space<smem>>
      %c256_i32 = arith.constant 256 : i32
      %14 = arith.muli %13, %c256_i32 : i32
      %15 = tpu.assume_multiple %14, 256 : i32
      %16 = arith.index_cast %15 : i32 to index
      %c0 = arith.constant 0 : index
      %17 = vector.load %arg5[%16, %c0] : memref<256x128xbf16, #tpu.memory_space<vmem>>, vector<256x128xbf16>
      %c0_4 = arith.constant 0 : index
      %c0_5 = arith.constant 0 : index
      %18 = vector.load %arg6[%c0_4, %c0_5] : memref<128x128xbf16, #tpu.memory_space<vmem>>, vector<128x128xbf16>
      %cst = arith.constant dense<0.000000e+00> : vector<256x128xf32>
      %19 = tpu.matmul %17, %18, %cst {dimension_numbers = #tpu.dot_dimension_numbers<[1], [0], [0], [1], [0, 0, 1, 1], [], []>} : vector<256x128xbf16>, vector<128x128xbf16>, vector<256x128xf32> -> vector<256x128xf32>
      %c0_6 = arith.constant 0 : index
      %c0_7 = arith.constant 0 : index
      %20 = vector.load %arg14[%c0_6, %c0_7] : memref<256x128xf32, #tpu.memory_space<vmem>>, vector<256x128xf32>
      %c0_8 = arith.constant 0 : index
      %c0_9 = arith.constant 0 : index
      %21 = vector.load %arg4[%c0_8, %c0_9] : memref<256x256xbf16, #tpu.memory_space<vmem>>, vector<256x256xbf16>
      %22 = arith.truncf %19 : vector<256x128xf32> to vector<256x128xbf16>
      %cst_10 = arith.constant dense<0.000000e+00> : vector<256x128xf32>
      %23 = tpu.matmul %21, %22, %cst_10 {dimension_numbers = #tpu.dot_dimension_numbers<[1], [0], [0], [1], [0, 0, 1, 1], [], []>} : vector<256x256xbf16>, vector<256x128xbf16>, vector<256x128xf32> -> vector<256x128xf32>
      %24 = arith.addf %20, %23 : vector<256x128xf32>
      %c0_11 = arith.constant 0 : index
      %c0_12 = arith.constant 0 : index
      %25 = vector.load %arg14[%c0_11, %c0_12] : memref<256x128xf32, #tpu.memory_space<vmem>>, vector<256x128xf32>
      tpu.vector_store %arg14[%c0_11, %c0_12], %24 {strides = array<i32>} : memref<256x128xf32, #tpu.memory_space<vmem>>, vector<256x128xf32>,
    } else {
    }
    %c0_i32_2 = arith.constant 0 : i32
    %8 = arith.cmpi eq, %arg1, %c0_i32_2 : i32
    %9 = arith.extui %8 : i1 to i32
    %c0_i32_3 = arith.constant 0 : i32
    %10 = arith.cmpi ne, %9, %c0_i32_3 : i32
    scf.if %10 {
      %c0 = arith.constant 0 : index
      %c0_4 = arith.constant 0 : index
      %11 = vector.load %arg14[%c0, %c0_4] : memref<256x128xf32, #tpu.memory_space<vmem>>, vector<256x128xf32>
      %c0_5 = arith.constant 0 : index
      %c0_6 = arith.constant 0 : index
      %12 = vector.load %arg9[%c0_5, %c0_6] : memref<256x128xf32, #tpu.memory_space<vmem>>, vector<256x128xf32>
      %13 = arith.addf %11, %12 : vector<256x128xf32>
      %c0_7 = arith.constant 0 : index
      %c0_8 = arith.constant 0 : index
      %14 = vector.load %arg7[%c0_7, %c0_8] : memref<1x128xf32, #tpu.memory_space<vmem>>, vector<1x128xf32>
      %15 = vector.broadcast %14 : vector<1x128xf32> to vector<256x128xf32>
      %16 = arith.mulf %13, %15 : vector<256x128xf32>
      %c0_9 = arith.constant 0 : index
      %c0_10 = arith.constant 0 : index
      %17 = vector.load %arg8[%c0_9, %c0_10] : memref<1x128xf32, #tpu.memory_space<vmem>>, vector<1x128xf32>
      %18 = vector.broadcast %17 : vector<1x128xf32> to vector<256x128xf32>
      %19 = arith.addf %16, %18 : vector<256x128xf32>
      %c0_11 = arith.constant 0 : index
      %c0_12 = arith.constant 0 : index
      %20 = vector.load %arg12[%c0_11, %c0_12] : memref<1x128xf32, #tpu.memory_space<vmem>>, vector<1x128xf32>
      %cst = arith.constant dense<0.000000e+00> : vector<256xf32>
      %21 = vector.multi_reduction <add>, %19, %cst [1] : vector<256x128xf32> to vector<256xf32>
      %22 = vector.shape_cast %21 : vector<256xf32> to vector<256x1xf32>
      %cst_13 = arith.constant 1.250000e-01 : f32
      %23 = vector.broadcast %cst_13 : f32 to vector<256x1xf32>
      %24 = arith.mulf %22, %23 : vector<256x1xf32>
      %25 = vector.broadcast %24 : vector<256x1xf32> to vector<256x128xf32>
      %26 = arith.subf %19, %25 : vector<256x128xf32>
      %27 = vector.broadcast %20 : vector<1x128xf32> to vector<256x128xf32>
      %28 = arith.mulf %26, %27 : vector<256x128xf32>
      %29 = arith.mulf %28, %28 : vector<256x128xf32>
      %cst_14 = arith.constant dense<0.000000e+00> : vector<256xf32>
      %30 = vector.multi_reduction <add>, %29, %cst_14 [1] : vector<256x128xf32> to vector<256xf32>
      %31 = vector.shape_cast %30 : vector<256xf32> to vector<256x1xf32>
      %cst_15 = arith.constant 1.250000e-01 : f32
      %32 = vector.broadcast %cst_15 : f32 to vector<256x1xf32>
      %33 = arith.mulf %31, %32 : vector<256x1xf32>
      %cst_16 = arith.constant 9.99999974E-6 : f32
      %34 = vector.broadcast %cst_16 : f32 to vector<256x1xf32>
      %35 = arith.addf %33, %34 : vector<256x1xf32>
      %36 = math.rsqrt %35 : vector<256x1xf32>
      %37 = vector.broadcast %36 : vector<256x1xf32> to vector<256x128xf32>
      %38 = arith.mulf %28, %37 : vector<256x128xf32>
      %c0_17 = arith.constant 0 : index
      %c0_18 = arith.constant 0 : index
      %39 = vector.load %arg10[%c0_17, %c0_18] : memref<1x128xf32, #tpu.memory_space<vmem>>, vector<1x128xf32>
      %40 = vector.broadcast %39 : vector<1x128xf32> to vector<256x128xf32>
      %41 = arith.mulf %38, %40 : vector<256x128xf32>
      %c0_19 = arith.constant 0 : index
      %c0_20 = arith.constant 0 : index
      %42 = vector.load %arg11[%c0_19, %c0_20] : memref<1x128xf32, #tpu.memory_space<vmem>>, vector<1x128xf32>
      %43 = vector.broadcast %42 : vector<1x128xf32> to vector<256x128xf32>
      %44 = arith.addf %41, %43 : vector<256x128xf32>
      %c0_21 = arith.constant 0 : index
      %c0_22 = arith.constant 0 : index
      %45 = vector.load %arg13[%c0_21, %c0_22] : memref<256x128xf32, #tpu.memory_space<vmem>>, vector<256x128xf32>
      tpu.vector_store %arg13[%c0_21, %c0_22], %44 {strides = array<i32>} : memref<256x128xf32, #tpu.memory_space<vmem>>, vector<256x128xf32>,
    } else {
    }
    return
  }
  func.func @transform_0(%arg0: i32, %arg1: i32, %arg2: memref<1x1xi32, #tpu.memory_space<smem>>, %arg3: memref<1xi32, #tpu.memory_space<smem>>) -> (i32, i32) {
    %0 = arith.index_cast %arg0 : i32 to index
    %1 = arith.index_cast %arg1 : i32 to index
    %2 = memref.load %arg2[%0, %1] : memref<1x1xi32, #tpu.memory_space<smem>>
    %c0_i32 = arith.constant 0 : i32
    return %arg0, %2 : i32, i32
  }
  func.func @transform_1(%arg0: i32, %arg1: i32, %arg2: memref<1x1xi32, #tpu.memory_space<smem>>, %arg3: memref<1xi32, #tpu.memory_space<smem>>) -> (i32, i32) {
    %c0_i32 = arith.constant 0 : i32
    %c0_i32_0 = arith.constant 0 : i32
    %c0_i32_1 = arith.constant 0 : i32
    return %c0_i32, %c0_i32_0 : i32, i32
  }
  func.func @transform_2(%arg0: i32, %arg1: i32, %arg2: memref<1x1xi32, #tpu.memory_space<smem>>, %arg3: memref<1xi32, #tpu.memory_space<smem>>) -> (i32, i32) {
    %c0_i32 = arith.constant 0 : i32
    %c0_i32_0 = arith.constant 0 : i32
    %c0_i32_1 = arith.constant 0 : i32
    return %c0_i32, %c0_i32_0 : i32, i32
  }
  func.func @transform_3(%arg0: i32, %arg1: i32, %arg2: memref<1x1xi32, #tpu.memory_space<smem>>, %arg3: memref<1xi32, #tpu.memory_space<smem>>) -> (i32, i32) {
    %c0_i32 = arith.constant 0 : i32
    %c0_i32_0 = arith.constant 0 : i32
    %c0_i32_1 = arith.constant 0 : i32
    return %c0_i32, %c0_i32_0 : i32, i32
  }
  func.func @transform_4(%arg0: i32, %arg1: i32, %arg2: memref<1x1xi32, #tpu.memory_space<smem>>, %arg3: memref<1xi32, #tpu.memory_space<smem>>) -> (i32, i32) {
    %c0_i32 = arith.constant 0 : i32
    %c0_i32_0 = arith.constant 0 : i32
    %c0_i32_1 = arith.constant 0 : i32
    return %c0_i32, %c0_i32_0 : i32, i32
  }
  func.func @transform_5(%arg0: i32, %arg1: i32, %arg2: memref<1x1xi32, #tpu.memory_space<smem>>, %arg3: memref<1xi32, #tpu.memory_space<smem>>) -> (i32, i32) {
    %c0_i32 = arith.constant 0 : i32
    %c0_i32_0 = arith.constant 0 : i32
    return %arg0, %c0_i32 : i32, i32
  }
  func.func @transform_6(%arg0: i32, %arg1: i32, %arg2: memref<1x1xi32, #tpu.memory_space<smem>>, %arg3: memref<1xi32, #tpu.memory_space<smem>>) -> (i32, i32) {
    %c0_i32 = arith.constant 0 : i32
    %c0_i32_0 = arith.constant 0 : i32
    %c0_i32_1 = arith.constant 0 : i32
    return %c0_i32, %c0_i32_0 : i32, i32
  }
  func.func @transform_7(%arg0: i32, %arg1: i32, %arg2: memref<1x1xi32, #tpu.memory_space<smem>>, %arg3: memref<1xi32, #tpu.memory_space<smem>>) -> (i32, i32) {
    %c0_i32 = arith.constant 0 : i32
    %c0_i32_0 = arith.constant 0 : i32
    %c0_i32_1 = arith.constant 0 : i32
    return %c0_i32, %c0_i32_0 : i32, i32
  }
  func.func @transform_8(%arg0: i32, %arg1: i32, %arg2: memref<1x1xi32, #tpu.memory_space<smem>>, %arg3: memref<1xi32, #tpu.memory_space<smem>>) -> (i32, i32) {
    %c0_i32 = arith.constant 0 : i32
    %c0_i32_0 = arith.constant 0 : i32
    %c0_i32_1 = arith.constant 0 : i32
    return %c0_i32, %c0_i32_0 : i32, i32
  }
  func.func @transform_9(%arg0: i32, %arg1: i32, %arg2: memref<1x1xi32, #tpu.memory_space<smem>>, %arg3: memref<1xi32, #tpu.memory_space<smem>>) -> (i32, i32) {
    %c0_i32 = arith.constant 0 : i32
    %c0_i32_0 = arith.constant 0 : i32
    return %arg0, %c0_i32 : i32, i32
  }
}

module attributes {stable_mosaic.version = 11 : i64} {
  func.func @_gcn_layer_kernel(%arg0: i32, %arg1: i32, %arg2: memref<1x1xi32, #tpu.memory_space<smem>>, %arg3: memref<1xi32, #tpu.memory_space<smem>>, %arg4: memref<256x256xbf16, #tpu.memory_space<vmem>>, %arg5: memref<256x128xbf16, #tpu.memory_space<vmem>>, %arg6: memref<128x128xbf16, #tpu.memory_space<vmem>>, %arg7: memref<1x128xf32, #tpu.memory_space<vmem>>, %arg8: memref<1x128xf32, #tpu.memory_space<vmem>>, %arg9: memref<256x128xbf16, #tpu.memory_space<vmem>>, %arg10: memref<256x128xf32, #tpu.memory_space<vmem>>) attributes {dimension_semantics = [#tpu.dimension_semantics<parallel>, #tpu.dimension_semantics<arbitrary>], iteration_bounds = array<i64: 1, 1>, scalar_prefetch = 2 : i64, scratch_operands = 1 : i64, tpu.core_type = #tpu.core_type<tc>, window_params = [{transform_indices = @transform_0, window_bounds = array<i64: 256, 256>}, {pipeline_mode = #tpu.pipeline_mode<synchronous>, transform_indices = @transform_1, window_bounds = array<i64: 256, 128>}, {pipeline_mode = #tpu.pipeline_mode<synchronous>, transform_indices = @transform_2, window_bounds = array<i64: 128, 128>}, {pipeline_mode = #tpu.pipeline_mode<synchronous>, transform_indices = @transform_3, window_bounds = array<i64: 1, 128>}, {pipeline_mode = #tpu.pipeline_mode<synchronous>, transform_indices = @transform_4, window_bounds = array<i64: 1, 128>}, {transform_indices = @transform_5, window_bounds = array<i64: 256, 128>}]} {
    %c0_i32 = arith.constant 0 : i32
    %0 = arith.cmpi eq, %arg1, %c0_i32 : i32
    %1 = arith.extui %0 : i1 to i32
    %c0_i32_0 = arith.constant 0 : i32
    %2 = arith.cmpi ne, %1, %c0_i32_0 : i32
    scf.if %2 {
      %cst = arith.constant 0.000000e+00 : f32
      %11 = vector.broadcast %cst : f32 to vector<256x128xf32>
      %c0 = arith.constant 0 : index
      %c0_4 = arith.constant 0 : index
      %12 = vector.load %arg10[%c0, %c0_4] : memref<256x128xf32, #tpu.memory_space<vmem>>, vector<256x128xf32>
      tpu.vector_store %arg10[%c0, %c0_4], %11 {strides = array<i32>} : memref<256x128xf32, #tpu.memory_space<vmem>>, vector<256x128xf32>,
    } else {
    }
    %3 = arith.index_cast %arg0 : i32 to index
    %4 = memref.load %arg3[%3] : memref<1xi32, #tpu.memory_space<smem>>
    %5 = arith.cmpi slt, %arg1, %4 : i32
    %6 = arith.extui %5 : i1 to i32
    %c0_i32_1 = arith.constant 0 : i32
    %7 = arith.cmpi ne, %6, %c0_i32_1 : i32
    scf.if %7 {
      %11 = arith.index_cast %arg0 : i32 to index
      %12 = arith.index_cast %arg1 : i32 to index
      %13 = memref.load %arg2[%11, %12] : memref<1x1xi32, #tpu.memory_space<smem>>
      %c256_i32 = arith.constant 256 : i32
      %14 = arith.muli %13, %c256_i32 : i32
      %15 = tpu.assume_multiple %14, 256 : i32
      %16 = arith.index_cast %15 : i32 to index
      %c0 = arith.constant 0 : index
      %17 = vector.load %arg5[%16, %c0] : memref<256x128xbf16, #tpu.memory_space<vmem>>, vector<256x128xbf16>
      %c0_4 = arith.constant 0 : index
      %c0_5 = arith.constant 0 : index
      %18 = vector.load %arg6[%c0_4, %c0_5] : memref<128x128xbf16, #tpu.memory_space<vmem>>, vector<128x128xbf16>
      %cst = arith.constant dense<0.000000e+00> : vector<256x128xf32>
      %19 = tpu.matmul %17, %18, %cst {dimension_numbers = #tpu.dot_dimension_numbers<[1], [0], [0], [1], [0, 0, 1, 1], [], []>} : vector<256x128xbf16>, vector<128x128xbf16>, vector<256x128xf32> -> vector<256x128xf32>
      %c0_6 = arith.constant 0 : index
      %c0_7 = arith.constant 0 : index
      %20 = vector.load %arg10[%c0_6, %c0_7] : memref<256x128xf32, #tpu.memory_space<vmem>>, vector<256x128xf32>
      %c0_8 = arith.constant 0 : index
      %c0_9 = arith.constant 0 : index
      %21 = vector.load %arg4[%c0_8, %c0_9] : memref<256x256xbf16, #tpu.memory_space<vmem>>, vector<256x256xbf16>
      %22 = arith.truncf %19 : vector<256x128xf32> to vector<256x128xbf16>
      %cst_10 = arith.constant dense<0.000000e+00> : vector<256x128xf32>
      %23 = tpu.matmul %21, %22, %cst_10 {dimension_numbers = #tpu.dot_dimension_numbers<[1], [0], [0], [1], [0, 0, 1, 1], [], []>} : vector<256x256xbf16>, vector<256x128xbf16>, vector<256x128xf32> -> vector<256x128xf32>
      %24 = arith.addf %20, %23 : vector<256x128xf32>
      %c0_11 = arith.constant 0 : index
      %c0_12 = arith.constant 0 : index
      %25 = vector.load %arg10[%c0_11, %c0_12] : memref<256x128xf32, #tpu.memory_space<vmem>>, vector<256x128xf32>
      tpu.vector_store %arg10[%c0_11, %c0_12], %24 {strides = array<i32>} : memref<256x128xf32, #tpu.memory_space<vmem>>, vector<256x128xf32>,
    } else {
    }
    %c0_i32_2 = arith.constant 0 : i32
    %8 = arith.cmpi eq, %arg1, %c0_i32_2 : i32
    %9 = arith.extui %8 : i1 to i32
    %c0_i32_3 = arith.constant 0 : i32
    %10 = arith.cmpi ne, %9, %c0_i32_3 : i32
    scf.if %10 {
      %c0 = arith.constant 0 : index
      %c0_4 = arith.constant 0 : index
      %11 = vector.load %arg10[%c0, %c0_4] : memref<256x128xf32, #tpu.memory_space<vmem>>, vector<256x128xf32>
      %c0_5 = arith.constant 0 : index
      %c0_6 = arith.constant 0 : index
      %12 = vector.load %arg7[%c0_5, %c0_6] : memref<1x128xf32, #tpu.memory_space<vmem>>, vector<1x128xf32>
      %13 = vector.broadcast %12 : vector<1x128xf32> to vector<256x128xf32>
      %14 = arith.mulf %11, %13 : vector<256x128xf32>
      %c0_7 = arith.constant 0 : index
      %c0_8 = arith.constant 0 : index
      %15 = vector.load %arg8[%c0_7, %c0_8] : memref<1x128xf32, #tpu.memory_space<vmem>>, vector<1x128xf32>
      %16 = vector.broadcast %15 : vector<1x128xf32> to vector<256x128xf32>
      %17 = arith.addf %14, %16 : vector<256x128xf32>
      %cst = arith.constant 0.000000e+00 : f32
      %18 = vector.broadcast %cst : f32 to vector<256x128xf32>
      %19 = arith.cmpf oge, %17, %18 : vector<256x128xf32>
      %cst_9 = arith.constant 0.00999999977 : f32
      %20 = vector.broadcast %cst_9 : f32 to vector<256x128xf32>
      %21 = arith.mulf %20, %17 : vector<256x128xf32>
      %22 = arith.select %19, %17, %21 : vector<256x128xi1>, vector<256x128xf32>
      %23 = arith.truncf %22 : vector<256x128xf32> to vector<256x128xbf16>
      %c0_10 = arith.constant 0 : index
      %c0_11 = arith.constant 0 : index
      %24 = vector.load %arg9[%c0_10, %c0_11] : memref<256x128xbf16, #tpu.memory_space<vmem>>, vector<256x128xbf16>
      tpu.vector_store %arg9[%c0_10, %c0_11], %23 {strides = array<i32>} : memref<256x128xbf16, #tpu.memory_space<vmem>>, vector<256x128xbf16>,
    } else {
    }
    return
  }
  func.func @transform_0(%arg0: i32, %arg1: i32, %arg2: memref<1x1xi32, #tpu.memory_space<smem>>, %arg3: memref<1xi32, #tpu.memory_space<smem>>) -> (i32, i32) {
    %0 = arith.index_cast %arg0 : i32 to index
    %1 = arith.index_cast %arg1 : i32 to index
    %2 = memref.load %arg2[%0, %1] : memref<1x1xi32, #tpu.memory_space<smem>>
    %c0_i32 = arith.constant 0 : i32
    return %arg0, %2 : i32, i32
  }
  func.func @transform_1(%arg0: i32, %arg1: i32, %arg2: memref<1x1xi32, #tpu.memory_space<smem>>, %arg3: memref<1xi32, #tpu.memory_space<smem>>) -> (i32, i32) {
    %c0_i32 = arith.constant 0 : i32
    %c0_i32_0 = arith.constant 0 : i32
    %c0_i32_1 = arith.constant 0 : i32
    return %c0_i32, %c0_i32_0 : i32, i32
  }
  func.func @transform_2(%arg0: i32, %arg1: i32, %arg2: memref<1x1xi32, #tpu.memory_space<smem>>, %arg3: memref<1xi32, #tpu.memory_space<smem>>) -> (i32, i32) {
    %c0_i32 = arith.constant 0 : i32
    %c0_i32_0 = arith.constant 0 : i32
    %c0_i32_1 = arith.constant 0 : i32
    return %c0_i32, %c0_i32_0 : i32, i32
  }
  func.func @transform_3(%arg0: i32, %arg1: i32, %arg2: memref<1x1xi32, #tpu.memory_space<smem>>, %arg3: memref<1xi32, #tpu.memory_space<smem>>) -> (i32, i32) {
    %c0_i32 = arith.constant 0 : i32
    %c0_i32_0 = arith.constant 0 : i32
    %c0_i32_1 = arith.constant 0 : i32
    return %c0_i32, %c0_i32_0 : i32, i32
  }
  func.func @transform_4(%arg0: i32, %arg1: i32, %arg2: memref<1x1xi32, #tpu.memory_space<smem>>, %arg3: memref<1xi32, #tpu.memory_space<smem>>) -> (i32, i32) {
    %c0_i32 = arith.constant 0 : i32
    %c0_i32_0 = arith.constant 0 : i32
    %c0_i32_1 = arith.constant 0 : i32
    return %c0_i32, %c0_i32_0 : i32, i32
  }
  func.func @transform_5(%arg0: i32, %arg1: i32, %arg2: memref<1x1xi32, #tpu.memory_space<smem>>, %arg3: memref<1xi32, #tpu.memory_space<smem>>) -> (i32, i32) {
    %c0_i32 = arith.constant 0 : i32
    %c0_i32_0 = arith.constant 0 : i32
    return %arg0, %c0_i32 : i32, i32
  }
}

module attributes {stable_mosaic.version = 11 : i64} {
  func.func @_gcn_layer_kernel(%arg0: i32, %arg1: i32, %arg2: memref<1x1xi32, #tpu.memory_space<smem>>, %arg3: memref<1xi32, #tpu.memory_space<smem>>, %arg4: memref<256x256xbf16, #tpu.memory_space<vmem>>, %arg5: memref<256x128xbf16, #tpu.memory_space<vmem>>, %arg6: memref<128x128xbf16, #tpu.memory_space<vmem>>, %arg7: memref<1x128xf32, #tpu.memory_space<vmem>>, %arg8: memref<1x128xf32, #tpu.memory_space<vmem>>, %arg9: memref<256x128xbf16, #tpu.memory_space<vmem>>, %arg10: memref<256x128xf32, #tpu.memory_space<vmem>>) attributes {dimension_semantics = [#tpu.dimension_semantics<parallel>, #tpu.dimension_semantics<arbitrary>], iteration_bounds = array<i64: 1, 1>, scalar_prefetch = 2 : i64, scratch_operands = 1 : i64, tpu.core_type = #tpu.core_type<tc>, window_params = [{transform_indices = @transform_0, window_bounds = array<i64: 256, 256>}, {pipeline_mode = #tpu.pipeline_mode<synchronous>, transform_indices = @transform_1, window_bounds = array<i64: 256, 128>}, {pipeline_mode = #tpu.pipeline_mode<synchronous>, transform_indices = @transform_2, window_bounds = array<i64: 128, 128>}, {pipeline_mode = #tpu.pipeline_mode<synchronous>, transform_indices = @transform_3, window_bounds = array<i64: 1, 128>}, {pipeline_mode = #tpu.pipeline_mode<synchronous>, transform_indices = @transform_4, window_bounds = array<i64: 1, 128>}, {transform_indices = @transform_5, window_bounds = array<i64: 256, 128>}]} {
    %c0_i32 = arith.constant 0 : i32
    %0 = arith.cmpi eq, %arg1, %c0_i32 : i32
    %1 = arith.extui %0 : i1 to i32
    %c0_i32_0 = arith.constant 0 : i32
    %2 = arith.cmpi ne, %1, %c0_i32_0 : i32
    scf.if %2 {
      %cst = arith.constant 0.000000e+00 : f32
      %11 = vector.broadcast %cst : f32 to vector<256x128xf32>
      %c0 = arith.constant 0 : index
      %c0_4 = arith.constant 0 : index
      %12 = vector.load %arg10[%c0, %c0_4] : memref<256x128xf32, #tpu.memory_space<vmem>>, vector<256x128xf32>
      tpu.vector_store %arg10[%c0, %c0_4], %11 {strides = array<i32>} : memref<256x128xf32, #tpu.memory_space<vmem>>, vector<256x128xf32>,
    } else {
    }
    %3 = arith.index_cast %arg0 : i32 to index
    %4 = memref.load %arg3[%3] : memref<1xi32, #tpu.memory_space<smem>>
    %5 = arith.cmpi slt, %arg1, %4 : i32
    %6 = arith.extui %5 : i1 to i32
    %c0_i32_1 = arith.constant 0 : i32
    %7 = arith.cmpi ne, %6, %c0_i32_1 : i32
    scf.if %7 {
      %11 = arith.index_cast %arg0 : i32 to index
      %12 = arith.index_cast %arg1 : i32 to index
      %13 = memref.load %arg2[%11, %12] : memref<1x1xi32, #tpu.memory_space<smem>>
      %c256_i32 = arith.constant 256 : i32
      %14 = arith.muli %13, %c256_i32 : i32
      %15 = tpu.assume_multiple %14, 256 : i32
      %16 = arith.index_cast %15 : i32 to index
      %c0 = arith.constant 0 : index
      %17 = vector.load %arg5[%16, %c0] : memref<256x128xbf16, #tpu.memory_space<vmem>>, vector<256x128xbf16>
      %c0_4 = arith.constant 0 : index
      %c0_5 = arith.constant 0 : index
      %18 = vector.load %arg6[%c0_4, %c0_5] : memref<128x128xbf16, #tpu.memory_space<vmem>>, vector<128x128xbf16>
      %cst = arith.constant dense<0.000000e+00> : vector<256x128xf32>
      %19 = tpu.matmul %17, %18, %cst {dimension_numbers = #tpu.dot_dimension_numbers<[1], [0], [0], [1], [0, 0, 1, 1], [], []>} : vector<256x128xbf16>, vector<128x128xbf16>, vector<256x128xf32> -> vector<256x128xf32>
      %c0_6 = arith.constant 0 : index
      %c0_7 = arith.constant 0 : index
      %20 = vector.load %arg10[%c0_6, %c0_7] : memref<256x128xf32, #tpu.memory_space<vmem>>, vector<256x128xf32>
      %c0_8 = arith.constant 0 : index
      %c0_9 = arith.constant 0 : index
      %21 = vector.load %arg4[%c0_8, %c0_9] : memref<256x256xbf16, #tpu.memory_space<vmem>>, vector<256x256xbf16>
      %22 = arith.truncf %19 : vector<256x128xf32> to vector<256x128xbf16>
      %cst_10 = arith.constant dense<0.000000e+00> : vector<256x128xf32>
      %23 = tpu.matmul %21, %22, %cst_10 {dimension_numbers = #tpu.dot_dimension_numbers<[1], [0], [0], [1], [0, 0, 1, 1], [], []>} : vector<256x256xbf16>, vector<256x128xbf16>, vector<256x128xf32> -> vector<256x128xf32>
      %24 = arith.addf %20, %23 : vector<256x128xf32>
      %c0_11 = arith.constant 0 : index
      %c0_12 = arith.constant 0 : index
      %25 = vector.load %arg10[%c0_11, %c0_12] : memref<256x128xf32, #tpu.memory_space<vmem>>, vector<256x128xf32>
      tpu.vector_store %arg10[%c0_11, %c0_12], %24 {strides = array<i32>} : memref<256x128xf32, #tpu.memory_space<vmem>>, vector<256x128xf32>,
    } else {
    }
    %c0_i32_2 = arith.constant 0 : i32
    %8 = arith.cmpi eq, %arg1, %c0_i32_2 : i32
    %9 = arith.extui %8 : i1 to i32
    %c0_i32_3 = arith.constant 0 : i32
    %10 = arith.cmpi ne, %9, %c0_i32_3 : i32
    scf.if %10 {
      %c0 = arith.constant 0 : index
      %c0_4 = arith.constant 0 : index
      %11 = vector.load %arg10[%c0, %c0_4] : memref<256x128xf32, #tpu.memory_space<vmem>>, vector<256x128xf32>
      %c0_5 = arith.constant 0 : index
      %c0_6 = arith.constant 0 : index
      %12 = vector.load %arg7[%c0_5, %c0_6] : memref<1x128xf32, #tpu.memory_space<vmem>>, vector<1x128xf32>
      %13 = vector.broadcast %12 : vector<1x128xf32> to vector<256x128xf32>
      %14 = arith.mulf %11, %13 : vector<256x128xf32>
      %c0_7 = arith.constant 0 : index
      %c0_8 = arith.constant 0 : index
      %15 = vector.load %arg8[%c0_7, %c0_8] : memref<1x128xf32, #tpu.memory_space<vmem>>, vector<1x128xf32>
      %16 = vector.broadcast %15 : vector<1x128xf32> to vector<256x128xf32>
      %17 = arith.addf %14, %16 : vector<256x128xf32>
      %cst = arith.constant 0.000000e+00 : f32
      %18 = vector.broadcast %cst : f32 to vector<256x128xf32>
      %19 = arith.cmpf oge, %17, %18 : vector<256x128xf32>
      %cst_9 = arith.constant 0.00999999977 : f32
      %20 = vector.broadcast %cst_9 : f32 to vector<256x128xf32>
      %21 = arith.mulf %20, %17 : vector<256x128xf32>
      %22 = arith.select %19, %17, %21 : vector<256x128xi1>, vector<256x128xf32>
      %23 = arith.truncf %22 : vector<256x128xf32> to vector<256x128xbf16>
      %c0_10 = arith.constant 0 : index
      %c0_11 = arith.constant 0 : index
      %24 = vector.load %arg9[%c0_10, %c0_11] : memref<256x128xbf16, #tpu.memory_space<vmem>>, vector<256x128xbf16>
      tpu.vector_store %arg9[%c0_10, %c0_11], %23 {strides = array<i32>} : memref<256x128xbf16, #tpu.memory_space<vmem>>, vector<256x128xbf16>,
    } else {
    }
    return
  }
  func.func @transform_0(%arg0: i32, %arg1: i32, %arg2: memref<1x1xi32, #tpu.memory_space<smem>>, %arg3: memref<1xi32, #tpu.memory_space<smem>>) -> (i32, i32) {
    %0 = arith.index_cast %arg0 : i32 to index
    %1 = arith.index_cast %arg1 : i32 to index
    %2 = memref.load %arg2[%0, %1] : memref<1x1xi32, #tpu.memory_space<smem>>
    %c0_i32 = arith.constant 0 : i32
    return %arg0, %2 : i32, i32
  }
  func.func @transform_1(%arg0: i32, %arg1: i32, %arg2: memref<1x1xi32, #tpu.memory_space<smem>>, %arg3: memref<1xi32, #tpu.memory_space<smem>>) -> (i32, i32) {
    %c0_i32 = arith.constant 0 : i32
    %c0_i32_0 = arith.constant 0 : i32
    %c0_i32_1 = arith.constant 0 : i32
    return %c0_i32, %c0_i32_0 : i32, i32
  }
  func.func @transform_2(%arg0: i32, %arg1: i32, %arg2: memref<1x1xi32, #tpu.memory_space<smem>>, %arg3: memref<1xi32, #tpu.memory_space<smem>>) -> (i32, i32) {
    %c0_i32 = arith.constant 0 : i32
    %c0_i32_0 = arith.constant 0 : i32
    %c0_i32_1 = arith.constant 0 : i32
    return %c0_i32, %c0_i32_0 : i32, i32
  }
  func.func @transform_3(%arg0: i32, %arg1: i32, %arg2: memref<1x1xi32, #tpu.memory_space<smem>>, %arg3: memref<1xi32, #tpu.memory_space<smem>>) -> (i32, i32) {
    %c0_i32 = arith.constant 0 : i32
    %c0_i32_0 = arith.constant 0 : i32
    %c0_i32_1 = arith.constant 0 : i32
    return %c0_i32, %c0_i32_0 : i32, i32
  }
  func.func @transform_4(%arg0: i32, %arg1: i32, %arg2: memref<1x1xi32, #tpu.memory_space<smem>>, %arg3: memref<1xi32, #tpu.memory_space<smem>>) -> (i32, i32) {
    %c0_i32 = arith.constant 0 : i32
    %c0_i32_0 = arith.constant 0 : i32
    %c0_i32_1 = arith.constant 0 : i32
    return %c0_i32, %c0_i32_0 : i32, i32
  }
  func.func @transform_5(%arg0: i32, %arg1: i32, %arg2: memref<1x1xi32, #tpu.memory_space<smem>>, %arg3: memref<1xi32, #tpu.memory_space<smem>>) -> (i32, i32) {
    %c0_i32 = arith.constant 0 : i32
    %c0_i32_0 = arith.constant 0 : i32
    return %arg0, %c0_i32 : i32, i32
  }
}

</mosaic_0001>

<llo_original>
// kernel: gcn_model_forward.5
$region0: #{gcn_model_forward.5}
  #allocation0 [shape = 'u32[]', space=smem, size = 0x4, offset = 0x4, fixed_abs, tag = 'smem constant byte address 0x4 - core index']
  #allocation1 [shape = 'u32[144,128]{1,0:T(1,128)}', space=vmem, size = 0x12000, scoped, tag = 'internal scratch']
  %s0 = inlined_call_operand.vmem [shape: bf16[256,128], index: 0, kind: input, shape index: {}]
  %s1 = inlined_call_operand.vmem [shape: bf16[128,128], index: 1, kind: input, shape index: {}]
  %s2 = inlined_call_operand.vmem [shape: f32[1,128], index: 2, kind: input, shape index: {}]
  %s3 = inlined_call_operand.vmem [shape: f32[256,128], index: 3, kind: output, shape index: {}]
  %s4 = sld [smem:[#allocation0]]
  $region22: #{gcn_model_forward.5} parent=0
    _
  %s6 = ssub.s32 1, %s4
  %s7 = scalar_select 0, %s6, %s4
  // Predicated region
  $region2: #{gcn_model_forward.5} parent=0 // pred_check
    _
  $region3: #{gcn_model_forward.5} parent=0 // pred_check_branch
    %9 = sbr.rel (0) target = $region5
  $region4: #{gcn_model_forward.5} parent=0 // pred_region
    _
  $region5: #{gcn_model_forward.5} parent=0 // pred_fallthru
    _
  // Predicated region
  $region6: #{gcn_model_forward.5} parent=0 // pred_check
    _
  $region7: #{gcn_model_forward.5} parent=0 // pred_check_branch
    %11 = sbr.rel (0) target = $region9
  $region8: #{gcn_model_forward.5} parent=0 // pred_region
    _
  $region9: #{gcn_model_forward.5} parent=0 // pred_fallthru
    _
  // Predicated region
  $region10: #{gcn_model_forward.5} parent=0 // pred_check
    _
  $region11: #{gcn_model_forward.5} parent=0 // pred_check_branch
    %13 = sbr.rel (0) target = $region13
  $region12: #{gcn_model_forward.5} parent=0 // pred_region
    _
  $region13: #{gcn_model_forward.5} parent=0 // pred_fallthru
    _
  %v15 = vld [vmem:[%s0] sm:$0xf]
  %v16 = vld [vmem:[%s0 + $0x4] sm:$0xf]
  %v17 = vld [vmem:[%s0 + $0x8] sm:$0xf]
  %v18 = vld [vmem:[%s0 + $0xc] sm:$0xf]
  %v19 = vld [vmem:[%s0 + $0x10] sm:$0xf]
  %v20 = vld [vmem:[%s0 + $0x14] sm:$0xf]
  %v21 = vld [vmem:[%s0 + $0x18] sm:$0xf]
  %v22 = vld [vmem:[%s0 + $0x1c] sm:$0xf]
  %v23 = vld [vmem:[%s0 + $0x20] sm:$0xf]
  %v24 = vld [vmem:[%s0 + $0x24] sm:$0xf]
  %v25 = vld [vmem:[%s0 + $0x28] sm:$0xf]
  %v26 = vld [vmem:[%s0 + $0x2c] sm:$0xf]
  %v27 = vld [vmem:[%s0 + $0x30] sm:$0xf]
  %v28 = vld [vmem:[%s0 + $0x34] sm:$0xf]
  %v29 = vld [vmem:[%s0 + $0x38] sm:$0xf]
  %v30 = vld [vmem:[%s0 + $0x3c] sm:$0xf]
  %v31 = vld [vmem:[%s0 + $0x40] sm:$0xf]
  %v32 = vld [vmem:[%s0 + $0x44] sm:$0xf]
  %v33 = vld [vmem:[%s0 + $0x48] sm:$0xf]
  %v34 = vld [vmem:[%s0 + $0x4c] sm:$0xf]
  %v35 = vld [vmem:[%s0 + $0x50] sm:$0xf]
  %v36 = vld [vmem:[%s0 + $0x54] sm:$0xf]
  %v37 = vld [vmem:[%s0 + $0x58] sm:$0xf]
  %v38 = vld [vmem:[%s0 + $0x5c] sm:$0xf]
  %v39 = vld [vmem:[%s0 + $0x60] sm:$0xf]
  %v40 = vld [vmem:[%s0 + $0x64] sm:$0xf]
  %v41 = vld [vmem:[%s0 + $0x68] sm:$0xf]
  %v42 = vld [vmem:[%s0 + $0x6c] sm:$0xf]
  %v43 = vld [vmem:[%s0 + $0x70] sm:$0xf]
  %v44 = vld [vmem:[%s0 + $0x74] sm:$0xf]
  %v45 = vld [vmem:[%s0 + $0x78] sm:$0xf]
  %v46 = vld [vmem:[%s0 + $0x7c] sm:$0xf]
  %v47 = vld [vmem:[%s1] sm:$0xf]
  %v48 = vld [vmem:[%s1 + $0x4] sm:$0xf]
  %v49 = vld [vmem:[%s1 + $0x8] sm:$0xf]
  %v50 = vld [vmem:[%s1 + $0xc] sm:$0xf]
  %v51 = vld [vmem:[%s1 + $0x10] sm:$0xf]
  %v52 = vld [vmem:[%s1 + $0x14] sm:$0xf]
  %v53 = vld [vmem:[%s1 + $0x18] sm:$0xf]
  %v54 = vld [vmem:[%s1 + $0x1c] sm:$0xf]
  %v55 = vld [vmem:[%s1 + $0x20] sm:$0xf]
  %v56 = vld [vmem:[%s1 + $0x24] sm:$0xf]
  %v57 = vld [vmem:[%s1 + $0x28] sm:$0xf]
  %v58 = vld [vmem:[%s1 + $0x2c] sm:$0xf]
  %v59 = vld [vmem:[%s1 + $0x30] sm:$0xf]
  %v60 = vld [vmem:[%s1 + $0x34] sm:$0xf]
  %v61 = vld [vmem:[%s1 + $0x38] sm:$0xf]
  %v62 = vld [vmem:[%s1 + $0x3c] sm:$0xf]
  %v63 = vld [vmem:[%s2] sm:$0x1]
  %v65 = vlaneseq
  %v66 = vshrl.u32 %v65, 7
  %v67 = vsub.s32 0, %v66
  %v68 = vrot.slane %v63, %v67
  %v102 = vunpack.c.l.b16 %v15
  %v103 = vunpack.c.l.b16 %v16
  %v104 = vunpack.c.l.b16 %v17
  %v105 = vunpack.c.l.b16 %v18
  %v106 = vunpack.c.l.b16 %v19
  %v107 = vunpack.c.l.b16 %v20
  %v108 = vunpack.c.l.b16 %v21
  %v109 = vunpack.c.l.b16 %v22
  %v110 = vunpack.c.l.b16 %v23
  %v111 = vunpack.c.l.b16 %v24
  %v112 = vunpack.c.l.b16 %v25
  %v113 = vunpack.c.l.b16 %v26
  %v114 = vunpack.c.l.b16 %v27
  %v115 = vunpack.c.l.b16 %v28
  %v116 = vunpack.c.l.b16 %v29
  %v117 = vunpack.c.l.b16 %v30
  %v118 = vunpack.c.l.b16 %v31
  %v119 = vunpack.c.l.b16 %v32
  %v120 = vunpack.c.l.b16 %v33
  %v121 = vunpack.c.l.b16 %v34
  %v122 = vunpack.c.l.b16 %v35
  %v123 = vunpack.c.l.b16 %v36
  %v124 = vunpack.c.l.b16 %v37
  %v125 = vunpack.c.l.b16 %v38
  %v126 = vunpack.c.l.b16 %v39
  %v127 = vunpack.c.l.b16 %v40
  %v128 = vunpack.c.l.b16 %v41
  %v129 = vunpack.c.l.b16 %v42
  %v130 = vunpack.c.l.b16 %v43
  %v131 = vunpack.c.l.b16 %v44
  %v132 = vunpack.c.l.b16 %v45
  %v133 = vunpack.c.l.b16 %v46
  %v134 = vpack.c.b16 %v103, %v102
  %v135 = vpack.c.b16 %v105, %v104
  %v136 = vpack.c.b16 %v107, %v106
  %v137 = vpack.c.b16 %v109, %v108
  %v138 = vpack.c.b16 %v111, %v110
  %v139 = vpack.c.b16 %v113, %v112
  %v140 = vpack.c.b16 %v115, %v114
  %v141 = vpack.c.b16 %v117, %v116
  %v142 = vpack.c.b16 %v119, %v118
  %v143 = vpack.c.b16 %v121, %v120
  %v144 = vpack.c.b16 %v123, %v122
  %v145 = vpack.c.b16 %v125, %v124
  %v146 = vpack.c.b16 %v127, %v126
  %v147 = vpack.c.b16 %v129, %v128
  %v148 = vpack.c.b16 %v131, %v130
  %v149 = vpack.c.b16 %v133, %v132
  %v182 = vunpack.c.l.b16 %v47
  %v183 = vunpack.c.l.b16 %v48
  %v184 = vunpack.c.l.b16 %v49
  %v185 = vunpack.c.l.b16 %v50
  %v186 = vunpack.c.l.b16 %v51
  %v187 = vunpack.c.l.b16 %v52
  %v188 = vunpack.c.l.b16 %v53
  %v189 = vunpack.c.l.b16 %v54
  %v190 = vunpack.c.l.b16 %v55
  %v191 = vunpack.c.l.b16 %v56
  %v192 = vunpack.c.l.b16 %v57
  %v193 = vunpack.c.l.b16 %v58
  %v194 = vunpack.c.l.b16 %v59
  %v195 = vunpack.c.l.b16 %v60
  %v196 = vunpack.c.l.b16 %v61
  %v197 = vunpack.c.l.b16 %v62
  %v198 = vpack.c.b16 %v183, %v182
  %v199 = vpack.c.b16 %v185, %v184
  %v200 = vpack.c.b16 %v187, %v186
  %v201 = vpack.c.b16 %v189, %v188
  %v202 = vpack.c.b16 %v191, %v190
  %v203 = vpack.c.b16 %v193, %v192
  %v204 = vpack.c.b16 %v195, %v194
  %v205 = vpack.c.b16 %v197, %v196
  %214 = vmatprep.subr.bf16.mxu0 0
  %215 = vmatpush1.bf16.msra.mxu0 %v198
  %216 = vmatprep.subr.bf16.mxu0 0
  %217 = vmatpush1.bf16.msra.mxu0 %v199
  %218 = vmatprep.subr.bf16.mxu0 0
  %219 = vmatpush1.bf16.msra.mxu0 %v200
  %220 = vmatprep.subr.bf16.mxu0 0
  %221 = vmatpush1.bf16.msra.mxu0 %v201
  %222 = vmatprep.subr.bf16.mxu0 0
  %223 = vmatpush1.bf16.msra.mxu0 %v202
  %224 = vmatprep.subr.bf16.mxu0 0
  %225 = vmatpush1.bf16.msra.mxu0 %v203
  %226 = vmatprep.subr.bf16.mxu0 0
  %227 = vmatpush1.bf16.msra.mxu0 %v204
  %228 = vmatprep.subr.bf16.mxu0 0
  %229 = vmatpush1.bf16.msra.mxu0 %v205
  %230 = vmatprep.subr.bf16.mxu0 0
  %231 = vmatpush1.bf16.msra.mxu0 0
  %232 = vmatprep.subr.bf16.mxu0 0
  %233 = vmatpush1.bf16.msra.mxu0 0
  %234 = vmatprep.subr.bf16.mxu0 0
  %235 = vmatpush1.bf16.msra.mxu0 0
  %236 = vmatprep.subr.bf16.mxu0 0
  %237 = vmatpush1.bf16.msra.mxu0 0
  %238 = vmatprep.subr.bf16.mxu0 0
  %239 = vmatpush1.bf16.msra.mxu0 0
  %240 = vmatprep.subr.bf16.mxu0 0
  %241 = vmatpush1.bf16.msra.mxu0 0
  %242 = vmatprep.subr.bf16.mxu0 0
  %243 = vmatpush1.bf16.msra.mxu0 0
  %244 = vmatprep.subr.bf16.mxu0 0
  %245 = vmatpush1.bf16.msra.mxu0 0
  %246 = vmatprep.mubr.bf16.mxu0 0
  %247 = vmatmul.mubr.bf16.gmra.mrb[0].mxu0 %v134
  %v248 = vpop.f32.mrb[0].mxu0
  %v249 = vadd.f32 %v68, %v248
  %v250 = vpop.f32.mrb[0].mxu0
  %v251 = vpop.f32.mrb[0].mxu0
  %v252 = vadd.f32 %v68, %v251
  %v253 = vpop.f32.mrb[0].mxu0
  %254 = vmatprep.mubr.bf16.mxu0 0
  %255 = vmatmul.mubr.bf16.gmra.mrb[0].mxu0 %v135
  %v256 = vpop.f32.mrb[0].mxu0
  %v257 = vadd.f32 %v68, %v256
  %v258 = vpop.f32.mrb[0].mxu0
  %v259 = vpop.f32.mrb[0].mxu0
  %v260 = vadd.f32 %v68, %v259
  %v261 = vpop.f32.mrb[0].mxu0
  %262 = vmatprep.mubr.bf16.mxu0 0
  %263 = vmatmul.mubr.bf16.gmra.mrb[0].mxu0 %v136
  %v264 = vpop.f32.mrb[0].mxu0
  %v265 = vadd.f32 %v68, %v264
  %v266 = vpop.f32.mrb[0].mxu0
  %v267 = vpop.f32.mrb[0].mxu0
  %v268 = vadd.f32 %v68, %v267
  %v269 = vpop.f32.mrb[0].mxu0
  %270 = vmatprep.mubr.bf16.mxu0 0
  %271 = vmatmul.mubr.bf16.gmra.mrb[0].mxu0 %v137
  %v272 = vpop.f32.mrb[0].mxu0
  %v273 = vadd.f32 %v68, %v272
  %v274 = vpop.f32.mrb[0].mxu0
  %v275 = vpop.f32.mrb[0].mxu0
  %v276 = vadd.f32 %v68, %v275
  %v277 = vpop.f32.mrb[0].mxu0
  %278 = vmatprep.mubr.bf16.mxu0 0
  %279 = vmatmul.mubr.bf16.gmra.mrb[0].mxu0 %v138
  %v280 = vpop.f32.mrb[0].mxu0
  %v281 = vadd.f32 %v68, %v280
  %v282 = vpop.f32.mrb[0].mxu0
  %v283 = vpop.f32.mrb[0].mxu0
  %v284 = vadd.f32 %v68, %v283
  %v285 = vpop.f32.mrb[0].mxu0
  %286 = vmatprep.mubr.bf16.mxu0 0
  %287 = vmatmul.mubr.bf16.gmra.mrb[0].mxu0 %v139
  %v288 = vpop.f32.mrb[0].mxu0
  %v289 = vadd.f32 %v68, %v288
  %v290 = vpop.f32.mrb[0].mxu0
  %v291 = vpop.f32.mrb[0].mxu0
  %v292 = vadd.f32 %v68, %v291
  %v293 = vpop.f32.mrb[0].mxu0
  %294 = vmatprep.mubr.bf16.mxu0 0
  %295 = vmatmul.mubr.bf16.gmra.mrb[0].mxu0 %v140
  %v296 = vpop.f32.mrb[0].mxu0
  %v297 = vadd.f32 %v68, %v296
  %v298 = vpop.f32.mrb[0].mxu0
  %v299 = vpop.f32.mrb[0].mxu0
  %v300 = vadd.f32 %v68, %v299
  %v301 = vpop.f32.mrb[0].mxu0
  %302 = vmatprep.mubr.bf16.mxu0 0
  %303 = vmatmul.mubr.bf16.gmra.mrb[0].mxu0 %v141
  %v304 = vpop.f32.mrb[0].mxu0
  %v305 = vadd.f32 %v68, %v304
  %v306 = vpop.f32.mrb[0].mxu0
  %v307 = vpop.f32.mrb[0].mxu0
  %v308 = vadd.f32 %v68, %v307
  %v309 = vpop.f32.mrb[0].mxu0
  %310 = vmatprep.mubr.bf16.mxu0 0
  %311 = vmatmul.mubr.bf16.gmra.mrb[0].mxu0 %v142
  %v312 = vpop.f32.mrb[0].mxu0
  %v313 = vadd.f32 %v68, %v312
  %v314 = vpop.f32.mrb[0].mxu0
  %v315 = vpop.f32.mrb[0].mxu0
  %v316 = vadd.f32 %v68, %v315
  %v317 = vpop.f32.mrb[0].mxu0
  %318 = vmatprep.mubr.bf16.mxu0 0
  %319 = vmatmul.mubr.bf16.gmra.mrb[0].mxu0 %v143
  %v320 = vpop.f32.mrb[0].mxu0
  %v321 = vadd.f32 %v68, %v320
  %v322 = vpop.f32.mrb[0].mxu0
  %v323 = vpop.f32.mrb[0].mxu0
  %v324 = vadd.f32 %v68, %v323
  %v325 = vpop.f32.mrb[0].mxu0
  %326 = vmatprep.mubr.bf16.mxu0 0
  %327 = vmatmul.mubr.bf16.gmra.mrb[0].mxu0 %v144
  %v328 = vpop.f32.mrb[0].mxu0
  %v329 = vadd.f32 %v68, %v328
  %v330 = vpop.f32.mrb[0].mxu0
  %v331 = vpop.f32.mrb[0].mxu0
  %v332 = vadd.f32 %v68, %v331
  %v333 = vpop.f32.mrb[0].mxu0
  %334 = vmatprep.mubr.bf16.mxu0 0
  %335 = vmatmul.mubr.bf16.gmra.mrb[0].mxu0 %v145
  %v336 = vpop.f32.mrb[0].mxu0
  %v337 = vadd.f32 %v68, %v336
  %v338 = vpop.f32.mrb[0].mxu0
  %v339 = vpop.f32.mrb[0].mxu0
  %v340 = vadd.f32 %v68, %v339
  %v341 = vpop.f32.mrb[0].mxu0
  %342 = vmatprep.mubr.bf16.mxu0 0
  %343 = vmatmul.mubr.bf16.gmra.mrb[0].mxu0 %v146
  %v344 = vpop.f32.mrb[0].mxu0
  %v345 = vadd.f32 %v68, %v344
  %v346 = vpop.f32.mrb[0].mxu0
  %v347 = vpop.f32.mrb[0].mxu0
  %v348 = vadd.f32 %v68, %v347
  %v349 = vpop.f32.mrb[0].mxu0
  %350 = vmatprep.mubr.bf16.mxu0 0
  %351 = vmatmul.mubr.bf16.gmra.mrb[0].mxu0 %v147
  %v352 = vpop.f32.mrb[0].mxu0
  %v353 = vadd.f32 %v68, %v352
  %v354 = vpop.f32.mrb[0].mxu0
  %v355 = vpop.f32.mrb[0].mxu0
  %v356 = vadd.f32 %v68, %v355
  %v357 = vpop.f32.mrb[0].mxu0
  %358 = vmatprep.mubr.bf16.mxu0 0
  %359 = vmatmul.mubr.bf16.gmra.mrb[0].mxu0 %v148
  %v360 = vpop.f32.mrb[0].mxu0
  %v361 = vadd.f32 %v68, %v360
  %v362 = vpop.f32.mrb[0].mxu0
  %v363 = vpop.f32.mrb[0].mxu0
  %v364 = vadd.f32 %v68, %v363
  %v365 = vpop.f32.mrb[0].mxu0
  %366 = vmatprep.mubr.bf16.mxu0 0
  %367 = vmatmul.mubr.bf16.gmra.mrb[0].mxu0 %v149
  %v368 = vpop.f32.mrb[0].mxu0
  %v369 = vadd.f32 %v68, %v368
  %v370 = vpop.f32.mrb[0].mxu0
  %v371 = vpop.f32.mrb[0].mxu0
  %v372 = vadd.f32 %v68, %v371
  %v373 = vpop.f32.mrb[0].mxu0
  %374 = vdwg.mxu0
  %375 = vst [vmem:[%s3] sm:$0xff] %v249
  %376 = vst [vmem:[%s3 + $0x8] sm:$0xff] %v252
  %377 = vst [vmem:[%s3 + $0x10] sm:$0xff] %v257
  %378 = vst [vmem:[%s3 + $0x18] sm:$0xff] %v260
  %379 = vst [vmem:[%s3 + $0x20] sm:$0xff] %v265
  %380 = vst [vmem:[%s3 + $0x28] sm:$0xff] %v268
  %381 = vst [vmem:[%s3 + $0x30] sm:$0xff] %v273
  %382 = vst [vmem:[%s3 + $0x38] sm:$0xff] %v276
  %383 = vst [vmem:[%s3 + $0x40] sm:$0xff] %v281
  %384 = vst [vmem:[%s3 + $0x48] sm:$0xff] %v284
  %385 = vst [vmem:[%s3 + $0x50] sm:$0xff] %v289
  %386 = vst [vmem:[%s3 + $0x58] sm:$0xff] %v292
  %387 = vst [vmem:[%s3 + $0x60] sm:$0xff] %v297
  %388 = vst [vmem:[%s3 + $0x68] sm:$0xff] %v300
  %389 = vst [vmem:[%s3 + $0x70] sm:$0xff] %v305
  %390 = vst [vmem:[%s3 + $0x78] sm:$0xff] %v308
  %391 = vst [vmem:[%s3 + $0x80] sm:$0xff] %v313
  %392 = vst [vmem:[%s3 + $0x88] sm:$0xff] %v316
  %393 = vst [vmem:[%s3 + $0x90] sm:$0xff] %v321
  %394 = vst [vmem:[%s3 + $0x98] sm:$0xff] %v324
  %395 = vst [vmem:[%s3 + $0xa0] sm:$0xff] %v329
  %396 = vst [vmem:[%s3 + $0xa8] sm:$0xff] %v332
  %397 = vst [vmem:[%s3 + $0xb0] sm:$0xff] %v337
  %398 = vst [vmem:[%s3 + $0xb8] sm:$0xff] %v340
  %399 = vst [vmem:[%s3 + $0xc0] sm:$0xff] %v345
  %400 = vst [vmem:[%s3 + $0xc8] sm:$0xff] %v348
  %401 = vst [vmem:[%s3 + $0xd0] sm:$0xff] %v353
  %402 = vst [vmem:[%s3 + $0xd8] sm:$0xff] %v356
  %403 = vst [vmem:[%s3 + $0xe0] sm:$0xff] %v361
  %404 = vst [vmem:[%s3 + $0xe8] sm:$0xff] %v364
  %405 = vst [vmem:[%s3 + $0xf0] sm:$0xff] %v369
  %406 = vst [vmem:[%s3 + $0xf8] sm:$0xff] %v372
  // Predicated region
  $region14: #{gcn_model_forward.5} parent=0 // pred_check
    _
  $region15: #{gcn_model_forward.5} parent=0 // pred_check_branch
    %408 = sbr.rel (0) target = $region17
  $region16: #{gcn_model_forward.5} parent=0 // pred_region
    _
  $region17: #{gcn_model_forward.5} parent=0 // pred_fallthru
    _
  // Predicated region
  $region18: #{gcn_model_forward.5} parent=0 // pred_check
    _
  $region19: #{gcn_model_forward.5} parent=0 // pred_check_branch
    %410 = sbr.rel (0) target = $region21
  $region20: #{gcn_model_forward.5} parent=0 // pred_region
    _
  $region21: #{gcn_model_forward.5} parent=0 // pred_fallthru
    _

// kernel: gcn_model_forward.9
$region0: #{gcn_model_forward.9}
  #allocation0 [shape = 'u32[]', space=smem, size = 0x4, offset = 0x4, fixed_abs, tag = 'smem constant byte address 0x4 - core index']
  #allocation1 [shape = 'u32[144,128]{1,0:T(1,128)}', space=vmem, size = 0x12000, scoped, tag = 'internal scratch']
  #allocation2 [shape = 'f32[256,128]{1,0:T(8,128)}', space=vmem, size = 0x20000, scoped, tag = 'scratch operand']
  #allocation3 [shape = 's32[1]{0}', space=sflag, size = 0x4, scoped, tag = 'scoped memory for gcn_model_forward.9']
  #allocation4 [shape = 's32[1,1]{1,0:T(1,128)S(6)}', space=smem, size = 0x200, scoped, tag = 'prefetched SMEM operand 0']
  #allocation5 [shape = 's32[1]{0:T(128)S(6)}', space=smem, size = 0x200, scoped, tag = 'prefetched SMEM operand 1']
  %s0 = inlined_call_operand.<no memory space> [shape: s32[1,1], index: 0, kind: input, shape index: {}]
  %s1 = inlined_call_operand.<no memory space> [shape: s32[1], index: 1, kind: input, shape index: {}]
  %s2 = inlined_call_operand.vmem [shape: bf16[256,256], index: 2, kind: input, shape index: {}]
  %s3 = inlined_call_operand.vmem [shape: bf16[256,128], index: 3, kind: input, shape index: {}]
  %s4 = inlined_call_operand.vmem [shape: bf16[128,128], index: 4, kind: input, shape index: {}]
  %s5 = inlined_call_operand.vmem [shape: f32[1,128], index: 5, kind: input, shape index: {}]
  %s6 = inlined_call_operand.vmem [shape: f32[1,128], index: 6, kind: input, shape index: {}]
  %s7 = inlined_call_operand.vmem [shape: f32[256,128], index: 7, kind: input, shape index: {}]
  %s8 = inlined_call_operand.vmem [shape: f32[1,128], index: 8, kind: input, shape index: {}]
  %s9 = inlined_call_operand.vmem [shape: f32[1,128], index: 9, kind: input, shape index: {}]
  %s10 = inlined_call_operand.vmem [shape: f32[1,128], index: 10, kind: input, shape index: {}]
  %s11 = inlined_call_operand.hbm [shape: f32[256,128], index: 11, kind: output, shape index: {}]
  %s12 = sld [smem:[#allocation0]]
  $region58: #{gcn_model_forward.9} parent=0
    _
  %s14 = ssub.s32 1, %s12
  %s15 = scalar_select 0, %s14, %s12
  %16 = sst [smem:[#allocation4]] %s0
  %17 = sst [smem:[#allocation5]] %s1
  $region1: #{gcn_model_forward.9} parent=0
    #allocation6 [shape = 'u8[131072]{0}', space=vmem, size = 0x20000, scoped, tag = 'output window, operand 0, single buffered']
    #allocation7 [shape = 's32[1]{0}', space=sflag, size = 0x4, scoped, tag = 'scoped memory for gcn_model_forward.9']
    %18 = vsyncpa [#allocation7], 0
    // Predicated region
    $region2: #{gcn_model_forward.9} parent=1 // pred_check
      _
    $region3: #{gcn_model_forward.9} parent=1 // pred_check_branch
      %20 = sbr.rel (0) target = $region5
    $region4: #{gcn_model_forward.9} parent=1 // pred_region
      %s21 = sadd.s32 0, 0
      %s22 = smul.u32 %s21, 128
      %s23 = sadd.s32 %s22, 0
      %s24 = sld [smem:[#allocation4 + %s23]]
      %s25 = smul.u32 2, %s24
      %p26 = scmp.lt.s32.totalorder %s25, 1
      %s27 = scalar_select %p26, %s25, 1
      %s28 = smul.addr %s27, 4
      %s29 = scalar_lea.vmem %s2, %s28
      %s30 = sadd.s32 0, 0
      %s31 = smul.u32 %s30, 128
      %s32 = sadd.s32 %s31, 0
      %s33 = sld [smem:[#allocation4 + %s32]]
      %s34 = smul.u32 2, %s33
    $region5: #{gcn_model_forward.9} parent=1 // pred_fallthru
      _
    // Predicated region
    $region6: #{gcn_model_forward.9} parent=1 // pred_check
      _
    $region7: #{gcn_model_forward.9} parent=1 // pred_check_branch
      %36 = sbr.rel (0) target = $region9
    $region8: #{gcn_model_forward.9} parent=1 // pred_region
      _
    $region9: #{gcn_model_forward.9} parent=1 // pred_fallthru
      _
    // Predicated region
    $region10: #{gcn_model_forward.9} parent=1 // pred_check
      _
    $region11: #{gcn_model_forward.9} parent=1 // pred_check_branch
      %38 = sbr.rel (0) target = $region13
    $region12: #{gcn_model_forward.9} parent=1 // pred_region
      _
    $region13: #{gcn_model_forward.9} parent=1 // pred_fallthru
      _
    // Predicated region
    $region14: #{gcn_model_forward.9} parent=1 // pred_check
      _
    $region15: #{gcn_model_forward.9} parent=1 // pred_check_branch
      %40 = sbr.rel (0) target = $region17
    $region16: #{gcn_model_forward.9} parent=1 // pred_region
      _
    $region17: #{gcn_model_forward.9} parent=1 // pred_fallthru
      _
    // Predicated region
    $region18: #{gcn_model_forward.9} parent=1 // pred_check
      _
    $region19: #{gcn_model_forward.9} parent=1 // pred_check_branch
      %42 = sbr.rel (0) target = $region21
    $region20: #{gcn_model_forward.9} parent=1 // pred_region
      _
    $region21: #{gcn_model_forward.9} parent=1 // pred_fallthru
      _
    // Predicated region
    $region22: #{gcn_model_forward.9} parent=1 // pred_check
      _
    $region23: #{gcn_model_forward.9} parent=1 // pred_check_branch
      %44 = sbr.rel (0) target = $region25
    $region24: #{gcn_model_forward.9} parent=1 // pred_region
      _
    $region25: #{gcn_model_forward.9} parent=1 // pred_fallthru
      _
    // Predicated region
    $region26: #{gcn_model_forward.9} parent=1 // pred_check
      _
    $region27: #{gcn_model_forward.9} parent=1 // pred_check_branch
      %46 = sbr.rel (0) target = $region29
    $region28: #{gcn_model_forward.9} parent=1 // pred_region
      _
    $region29: #{gcn_model_forward.9} parent=1 // pred_fallthru
      _
    // Predicated region
    $region30: #{gcn_model_forward.9} parent=1 // pred_check
      _
    $region31: #{gcn_model_forward.9} parent=1 // pred_check_branch
      %48 = sbr.rel (0) target = $region33
    $region32: #{gcn_model_forward.9} parent=1 // pred_region
      _
    $region33: #{gcn_model_forward.9} parent=1 // pred_fallthru
      _
    // Predicated region
    $region34: #{gcn_model_forward.9} parent=1 // pred_check
      _
    $region35: #{gcn_model_forward.9} parent=1 // pred_check_branch
      %50 = sbr.rel (0) target = $region37
    $region36: #{gcn_model_forward.9} parent=1 // pred_region
      _
    $region37: #{gcn_model_forward.9} parent=1 // pred_fallthru
      _
    %s51 = sadd.s32 0, 0
    %s52 = smul.u32 %s51, 128
    %s53 = sadd.s32 %s52, 0
    %s54 = sld [smem:[#allocation4 + %s53]]
    %s55 = smul.u32 2, %s54
    %p56 = scmp.lt.s32.totalorder %s55, 1
    %s57 = scalar_select %p56, %s55, 1
    %s58 = smul.addr %s57, 4
    %s59 = scalar_lea.vmem %s2, %s58
    %s60 = sadd.s32 0, 0
    %s61 = smul.u32 %s60, 128
    %s62 = sadd.s32 %s61, 0
    %s63 = sld [smem:[#allocation4 + %s62]]
    %s64 = smul.u32 2, %s63
    %p65 = scmp.lt.s32.totalorder %s64, 1
    %s66 = scalar_select %p65, %s64, 1
    %s67 = smul.addr %s66, 4
    %s68 = scalar_lea.vmem %s2, %s67
    %s69 = sadd.s32 0, 0
    %s70 = smul.u32 %s69, 128
    %s71 = sadd.s32 %s70, 0
    %s72 = sld [smem:[#allocation4 + %s71]]
    %s73 = smul.u32 2, %s72
    %p75 = scmp.eq.s32.totalorder 0, 0
    // Predicated region
    $region38: #{gcn_model_forward.9} parent=1 // pred_check
      %p76 = pneg %p75
    $region39: #{gcn_model_forward.9} parent=1 // pred_check_branch
      %78 = sbr.rel (%p76) target = $region41
    $region40: #{gcn_model_forward.9} parent=1 // pred_region
      %79 = vst [vmem:[#allocation2] sm:$0xff] 0.0
      %80 = vst [vmem:[#allocation2 + $0x8] sm:$0xff] 0.0
      %81 = vst [vmem:[#allocation2 + $0x10] sm:$0xff] 0.0
      %82 = vst [vmem:[#allocation2 + $0x18] sm:$0xff] 0.0
      %83 = vst [vmem:[#allocation2 + $0x20] sm:$0xff] 0.0
      %84 = vst [vmem:[#allocation2 + $0x28] sm:$0xff] 0.0
      %85 = vst [vmem:[#allocation2 + $0x30] sm:$0xff] 0.0
      %86 = vst [vmem:[#allocation2 + $0x38] sm:$0xff] 0.0
      %87 = vst [vmem:[#allocation2 + $0x40] sm:$0xff] 0.0
      %88 = vst [vmem:[#allocation2 + $0x48] sm:$0xff] 0.0
      %89 = vst [vmem:[#allocation2 + $0x50] sm:$0xff] 0.0
      %90 = vst [vmem:[#allocation2 + $0x58] sm:$0xff] 0.0
      %91 = vst [vmem:[#allocation2 + $0x60] sm:$0xff] 0.0
      %92 = vst [vmem:[#allocation2 + $0x68] sm:$0xff] 0.0
      %93 = vst [vmem:[#allocation2 + $0x70] sm:$0xff] 0.0
      %94 = vst [vmem:[#allocation2 + $0x78] sm:$0xff] 0.0
      %95 = vst [vmem:[#allocation2 + $0x80] sm:$0xff] 0.0
      %96 = vst [vmem:[#allocation2 + $0x88] sm:$0xff] 0.0
      %97 = vst [vmem:[#allocation2 + $0x90] sm:$0xff] 0.0
      %98 = vst [vmem:[#allocation2 + $0x98] sm:$0xff] 0.0
      %99 = vst [vmem:[#allocation2 + $0xa0] sm:$0xff] 0.0
      %100 = vst [vmem:[#allocation2 + $0xa8] sm:$0xff] 0.0
      %101 = vst [vmem:[#allocation2 + $0xb0] sm:$0xff] 0.0
      %102 = vst [vmem:[#allocation2 + $0xb8] sm:$0xff] 0.0
      %103 = vst [vmem:[#allocation2 + $0xc0] sm:$0xff] 0.0
      %104 = vst [vmem:[#allocation2 + $0xc8] sm:$0xff] 0.0
      %105 = vst [vmem:[#allocation2 + $0xd0] sm:$0xff] 0.0
      %106 = vst [vmem:[#allocation2 + $0xd8] sm:$0xff] 0.0
      %107 = vst [vmem:[#allocation2 + $0xe0] sm:$0xff] 0.0
      %108 = vst [vmem:[#allocation2 + $0xe8] sm:$0xff] 0.0
      %109 = vst [vmem:[#allocation2 + $0xf0] sm:$0xff] 0.0
      %110 = vst [vmem:[#allocation2 + $0xf8] sm:$0xff] 0.0
    $region41: #{gcn_model_forward.9} parent=1 // pred_fallthru
      _
    %s111 = sld [smem:[#allocation5]]
    %p112 = scmp.lt.s32.totalorder 0, %s111
    // Predicated region
    $region42: #{gcn_model_forward.9} parent=1 // pred_check
      %p113 = pneg %p112
    $region43: #{gcn_model_forward.9} parent=1 // pred_check_branch
      %115 = sbr.rel (%p113) target = $region45
    $region44: #{gcn_model_forward.9} parent=1 // pred_region
      %s116 = sadd.s32 0, 0
      %s117 = smul.u32 %s116, 128
      %s118 = sadd.s32 %s117, 0
      %s119 = sld [smem:[#allocation4 + %s118]]
      %s120 = smul.u32 %s119, 256
      %s121 = sshra.s32 %s120, 3
      %s122 = sand.u32 %s120, 7
      %s123 = smul.addr %s121, 4
      %s124 = scalar_lea.vmem %s3, %s123
      %v125 = vld [vmem:[%s124] sm:$0xf]
      %v126 = vld [vmem:[%s124 + $0x4] sm:$0xf]
      %v127 = vld [vmem:[%s124 + $0x8] sm:$0xf]
      %v128 = vld [vmem:[%s124 + $0xc] sm:$0xf]
      %v129 = vld [vmem:[%s124 + $0x10] sm:$0xf]
      %v130 = vld [vmem:[%s124 + $0x14] sm:$0xf]
      %v131 = vld [vmem:[%s124 + $0x18] sm:$0xf]
      %v132 = vld [vmem:[%s124 + $0x1c] sm:$0xf]
      %v133 = vld [vmem:[%s124 + $0x20] sm:$0xf]
      %v134 = vld [vmem:[%s124 + $0x24] sm:$0xf]
      %v135 = vld [vmem:[%s124 + $0x28] sm:$0xf]
      %v136 = vld [vmem:[%s124 + $0x2c] sm:$0xf]
      %v137 = vld [vmem:[%s124 + $0x30] sm:$0xf]
      %v138 = vld [vmem:[%s124 + $0x34] sm:$0xf]
      %v139 = vld [vmem:[%s124 + $0x38] sm:$0xf]
      %v140 = vld [vmem:[%s124 + $0x3c] sm:$0xf]
      %v141 = vld [vmem:[%s124 + $0x40] sm:$0xf]
      %v142 = vld [vmem:[%s124 + $0x44] sm:$0xf]
      %v143 = vld [vmem:[%s124 + $0x48] sm:$0xf]
      %v144 = vld [vmem:[%s124 + $0x4c] sm:$0xf]
      %v145 = vld [vmem:[%s124 + $0x50] sm:$0xf]
      %v146 = vld [vmem:[%s124 + $0x54] sm:$0xf]
      %v147 = vld [vmem:[%s124 + $0x58] sm:$0xf]
      %v148 = vld [vmem:[%s124 + $0x5c] sm:$0xf]
      %v149 = vld [vmem:[%s124 + $0x60] sm:$0xf]
      %v150 = vld [vmem:[%s124 + $0x64] sm:$0xf]
      %v151 = vld [vmem:[%s124 + $0x68] sm:$0xf]
      %v152 = vld [vmem:[%s124 + $0x6c] sm:$0xf]
      %v153 = vld [vmem:[%s124 + $0x70] sm:$0xf]
      %v154 = vld [vmem:[%s124 + $0x74] sm:$0xf]
      %v155 = vld [vmem:[%s124 + $0x78] sm:$0xf]
      %v156 = vld [vmem:[%s124 + $0x7c] sm:$0xf]
      %v157 = vld [vmem:[%s4] sm:$0xf]
      %v158 = vld [vmem:[%s4 + $0x4] sm:$0xf]
      %v159 = vld [vmem:[%s4 + $0x8] sm:$0xf]
      %v160 = vld [vmem:[%s4 + $0xc] sm:$0xf]
      %v161 = vld [vmem:[%s4 + $0x10] sm:$0xf]
      %v162 = vld [vmem:[%s4 + $0x14] sm:$0xf]
      %v163 = vld [vmem:[%s4 + $0x18] sm:$0xf]
      %v164 = vld [vmem:[%s4 + $0x1c] sm:$0xf]
      %v165 = vld [vmem:[%s4 + $0x20] sm:$0xf]
      %v166 = vld [vmem:[%s4 + $0x24] sm:$0xf]
      %v167 = vld [vmem:[%s4 + $0x28] sm:$0xf]
      %v168 = vld [vmem:[%s4 + $0x2c] sm:$0xf]
      %v169 = vld [vmem:[%s4 + $0x30] sm:$0xf]
      %v170 = vld [vmem:[%s4 + $0x34] sm:$0xf]
      %v171 = vld [vmem:[%s4 + $0x38] sm:$0xf]
      %v172 = vld [vmem:[%s4 + $0x3c] sm:$0xf]
      %v205 = vunpack.c.l.b16 %v125
      %v206 = vunpack.c.l.b16 %v126
      %v207 = vunpack.c.l.b16 %v127
      %v208 = vunpack.c.l.b16 %v128
      %v209 = vunpack.c.l.b16 %v129
      %v210 = vunpack.c.l.b16 %v130
      %v211 = vunpack.c.l.b16 %v131
      %v212 = vunpack.c.l.b16 %v132
      %v213 = vunpack.c.l.b16 %v133
      %v214 = vunpack.c.l.b16 %v134
      %v215 = vunpack.c.l.b16 %v135
      %v216 = vunpack.c.l.b16 %v136
      %v217 = vunpack.c.l.b16 %v137
      %v218 = vunpack.c.l.b16 %v138
      %v219 = vunpack.c.l.b16 %v139
      %v220 = vunpack.c.l.b16 %v140
      %v221 = vunpack.c.l.b16 %v141
      %v222 = vunpack.c.l.b16 %v142
      %v223 = vunpack.c.l.b16 %v143
      %v224 = vunpack.c.l.b16 %v144
      %v225 = vunpack.c.l.b16 %v145
      %v226 = vunpack.c.l.b16 %v146
      %v227 = vunpack.c.l.b16 %v147
      %v228 = vunpack.c.l.b16 %v148
      %v229 = vunpack.c.l.b16 %v149
      %v230 = vunpack.c.l.b16 %v150
      %v231 = vunpack.c.l.b16 %v151
      %v232 = vunpack.c.l.b16 %v152
      %v233 = vunpack.c.l.b16 %v153
      %v234 = vunpack.c.l.b16 %v154
      %v235 = vunpack.c.l.b16 %v155
      %v236 = vunpack.c.l.b16 %v156
      %v237 = vpack.c.b16 %v206, %v205
      %v238 = vpack.c.b16 %v208, %v207
      %v239 = vpack.c.b16 %v210, %v209
      %v240 = vpack.c.b16 %v212, %v211
      %v241 = vpack.c.b16 %v214, %v213
      %v242 = vpack.c.b16 %v216, %v215
      %v243 = vpack.c.b16 %v218, %v217
      %v244 = vpack.c.b16 %v220, %v219
      %v245 = vpack.c.b16 %v222, %v221
      %v246 = vpack.c.b16 %v224, %v223
      %v247 = vpack.c.b16 %v226, %v225
      %v248 = vpack.c.b16 %v228, %v227
      %v249 = vpack.c.b16 %v230, %v229
      %v250 = vpack.c.b16 %v232, %v231
      %v251 = vpack.c.b16 %v234, %v233
      %v252 = vpack.c.b16 %v236, %v235
      %v285 = vunpack.c.l.b16 %v157
      %v286 = vunpack.c.l.b16 %v158
      %v287 = vunpack.c.l.b16 %v159
      %v288 = vunpack.c.l.b16 %v160
      %v289 = vunpack.c.l.b16 %v161
      %v290 = vunpack.c.l.b16 %v162
      %v291 = vunpack.c.l.b16 %v163
      %v292 = vunpack.c.l.b16 %v164
      %v293 = vunpack.c.l.b16 %v165
      %v294 = vunpack.c.l.b16 %v166
      %v295 = vunpack.c.l.b16 %v167
      %v296 = vunpack.c.l.b16 %v168
      %v297 = vunpack.c.l.b16 %v169
      %v298 = vunpack.c.l.b16 %v170
      %v299 = vunpack.c.l.b16 %v171
      %v300 = vunpack.c.l.b16 %v172
      %v301 = vpack.c.b16 %v286, %v285
      %v302 = vpack.c.b16 %v288, %v287
      %v303 = vpack.c.b16 %v290, %v289
      %v304 = vpack.c.b16 %v292, %v291
      %v305 = vpack.c.b16 %v294, %v293
      %v306 = vpack.c.b16 %v296, %v295
      %v307 = vpack.c.b16 %v298, %v297
      %v308 = vpack.c.b16 %v300, %v299
      %317 = vmatprep.subr.bf16.mxu0 0
      %318 = vmatpush1.bf16.msra.mxu0 %v301
      %319 = vmatprep.subr.bf16.mxu0 0
      %320 = vmatpush1.bf16.msra.mxu0 %v302
      %321 = vmatprep.subr.bf16.mxu0 0
      %322 = vmatpush1.bf16.msra.mxu0 %v303
      %323 = vmatprep.subr.bf16.mxu0 0
      %324 = vmatpush1.bf16.msra.mxu0 %v304
      %325 = vmatprep.subr.bf16.mxu0 0
      %326 = vmatpush1.bf16.msra.mxu0 %v305
      %327 = vmatprep.subr.bf16.mxu0 0
      %328 = vmatpush1.bf16.msra.mxu0 %v306
      %329 = vmatprep.subr.bf16.mxu0 0
      %330 = vmatpush1.bf16.msra.mxu0 %v307
      %331 = vmatprep.subr.bf16.mxu0 0
      %332 = vmatpush1.bf16.msra.mxu0 %v308
      %333 = vmatprep.subr.bf16.mxu0 0
      %334 = vmatpush1.bf16.msra.mxu0 0
      %335 = vmatprep.subr.bf16.mxu0 0
      %336 = vmatpush1.bf16.msra.mxu0 0
      %337 = vmatprep.subr.bf16.mxu0 0
      %338 = vmatpush1.bf16.msra.mxu0 0
      %339 = vmatprep.subr.bf16.mxu0 0
      %340 = vmatpush1.bf16.msra.mxu0 0
      %341 = vmatprep.subr.bf16.mxu0 0
      %342 = vmatpush1.bf16.msra.mxu0 0
      %343 = vmatprep.subr.bf16.mxu0 0
      %344 = vmatpush1.bf16.msra.mxu0 0
      %345 = vmatprep.subr.bf16.mxu0 0
      %346 = vmatpush1.bf16.msra.mxu0 0
      %347 = vmatprep.subr.bf16.mxu0 0
      %348 = vmatpush1.bf16.msra.mxu0 0
      %349 = vmatprep.mubr.bf16.mxu0 0
      %350 = vmatmul.mubr.bf16.gmra.mrb[0].mxu0 %v237
      %v351 = vpop.f32.mrb[0].mxu0
      %v352 = vadd.f32 0.0, %v351
      %v353 = vpop.f32.mrb[0].mxu0
      %v354 = vpop.f32.mrb[0].mxu0
      %v355 = vadd.f32 0.0, %v354
      %v356 = vpop.f32.mrb[0].mxu0
      %357 = vmatprep.mubr.bf16.mxu0 0
      %358 = vmatmul.mubr.bf16.gmra.mrb[0].mxu0 %v238
      %v359 = vpop.f32.mrb[0].mxu0
      %v360 = vadd.f32 0.0, %v359
      %v361 = vpop.f32.mrb[0].mxu0
      %v362 = vpop.f32.mrb[0].mxu0
      %v363 = vadd.f32 0.0, %v362
      %v364 = vpop.f32.mrb[0].mxu0
      %365 = vmatprep.mubr.bf16.mxu0 0
      %366 = vmatmul.mubr.bf16.gmra.mrb[0].mxu0 %v239
      %v367 = vpop.f32.mrb[0].mxu0
      %v368 = vadd.f32 0.0, %v367
      %v369 = vpop.f32.mrb[0].mxu0
      %v370 = vpop.f32.mrb[0].mxu0
      %v371 = vadd.f32 0.0, %v370
      %v372 = vpop.f32.mrb[0].mxu0
      %373 = vmatprep.mubr.bf16.mxu0 0
      %374 = vmatmul.mubr.bf16.gmra.mrb[0].mxu0 %v240
      %v375 = vpop.f32.mrb[0].mxu0
      %v376 = vadd.f32 0.0, %v375
      %v377 = vpop.f32.mrb[0].mxu0
      %v378 = vpop.f32.mrb[0].mxu0
      %v379 = vadd.f32 0.0, %v378
      %v380 = vpop.f32.mrb[0].mxu0
      %381 = vmatprep.mubr.bf16.mxu0 0
      %382 = vmatmul.mubr.bf16.gmra.mrb[0].mxu0 %v241
      %v383 = vpop.f32.mrb[0].mxu0
      %v384 = vadd.f32 0.0, %v383
      %v385 = vpop.f32.mrb[0].mxu0
      %v386 = vpop.f32.mrb[0].mxu0
      %v387 = vadd.f32 0.0, %v386
      %v388 = vpop.f32.mrb[0].mxu0
      %389 = vmatprep.mubr.bf16.mxu0 0
      %390 = vmatmul.mubr.bf16.gmra.mrb[0].mxu0 %v242
      %v391 = vpop.f32.mrb[0].mxu0
      %v392 = vadd.f32 0.0, %v391
      %v393 = vpop.f32.mrb[0].mxu0
      %v394 = vpop.f32.mrb[0].mxu0
      %v395 = vadd.f32 0.0, %v394
      %v396 = vpop.f32.mrb[0].mxu0
      %397 = vmatprep.mubr.bf16.mxu0 0
      %398 = vmatmul.mubr.bf16.gmra.mrb[0].mxu0 %v243
      %v399 = vpop.f32.mrb[0].mxu0
      %v400 = vadd.f32 0.0, %v399
      %v401 = vpop.f32.mrb[0].mxu0
      %v402 = vpop.f32.mrb[0].mxu0
      %v403 = vadd.f32 0.0, %v402
      %v404 = vpop.f32.mrb[0].mxu0
      %405 = vmatprep.mubr.bf16.mxu0 0
      %406 = vmatmul.mubr.bf16.gmra.mrb[0].mxu0 %v244
      %v407 = vpop.f32.mrb[0].mxu0
      %v408 = vadd.f32 0.0, %v407
      %v409 = vpop.f32.mrb[0].mxu0
      %v410 = vpop.f32.mrb[0].mxu0
      %v411 = vadd.f32 0.0, %v410
      %v412 = vpop.f32.mrb[0].mxu0
      %413 = vmatprep.mubr.bf16.mxu0 0
      %414 = vmatmul.mubr.bf16.gmra.mrb[0].mxu0 %v245
      %v415 = vpop.f32.mrb[0].mxu0
      %v416 = vadd.f32 0.0, %v415
      %v417 = vpop.f32.mrb[0].mxu0
      %v418 = vpop.f32.mrb[0].mxu0
      %v419 = vadd.f32 0.0, %v418
      %v420 = vpop.f32.mrb[0].mxu0
      %421 = vmatprep.mubr.bf16.mxu0 0
      %422 = vmatmul.mubr.bf16.gmra.mrb[0].mxu0 %v246
      %v423 = vpop.f32.mrb[0].mxu0
      %v424 = vadd.f32 0.0, %v423
      %v425 = vpop.f32.mrb[0].mxu0
      %v426 = vpop.f32.mrb[0].mxu0
      %v427 = vadd.f32 0.0, %v426
      %v428 = vpop.f32.mrb[0].mxu0
      %429 = vmatprep.mubr.bf16.mxu0 0
      %430 = vmatmul.mubr.bf16.gmra.mrb[0].mxu0 %v247
      %v431 = vpop.f32.mrb[0].mxu0
      %v432 = vadd.f32 0.0, %v431
      %v433 = vpop.f32.mrb[0].mxu0
      %v434 = vpop.f32.mrb[0].mxu0
      %v435 = vadd.f32 0.0, %v434
      %v436 = vpop.f32.mrb[0].mxu0
      %437 = vmatprep.mubr.bf16.mxu0 0
      %438 = vmatmul.mubr.bf16.gmra.mrb[0].mxu0 %v248
      %v439 = vpop.f32.mrb[0].mxu0
      %v440 = vadd.f32 0.0, %v439
      %v441 = vpop.f32.mrb[0].mxu0
      %v442 = vpop.f32.mrb[0].mxu0
      %v443 = vadd.f32 0.0, %v442
      %v444 = vpop.f32.mrb[0].mxu0
      %445 = vmatprep.mubr.bf16.mxu0 0
      %446 = vmatmul.mubr.bf16.gmra.mrb[0].mxu0 %v249
      %v447 = vpop.f32.mrb[0].mxu0
      %v448 = vadd.f32 0.0, %v447
      %v449 = vpop.f32.mrb[0].mxu0
      %v450 = vpop.f32.mrb[0].mxu0
      %v451 = vadd.f32 0.0, %v450
      %v452 = vpop.f32.mrb[0].mxu0
      %453 = vmatprep.mubr.bf16.mxu0 0
      %454 = vmatmul.mubr.bf16.gmra.mrb[0].mxu0 %v250
      %v455 = vpop.f32.mrb[0].mxu0
      %v456 = vadd.f32 0.0, %v455
      %v457 = vpop.f32.mrb[0].mxu0
      %v458 = vpop.f32.mrb[0].mxu0
      %v459 = vadd.f32 0.0, %v458
      %v460 = vpop.f32.mrb[0].mxu0
      %461 = vmatprep.mubr.bf16.mxu0 0
      %462 = vmatmul.mubr.bf16.gmra.mrb[0].mxu0 %v251
      %v463 = vpop.f32.mrb[0].mxu0
      %v464 = vadd.f32 0.0, %v463
      %v465 = vpop.f32.mrb[0].mxu0
      %v466 = vpop.f32.mrb[0].mxu0
      %v467 = vadd.f32 0.0, %v466
      %v468 = vpop.f32.mrb[0].mxu0
      %469 = vmatprep.mubr.bf16.mxu0 0
      %470 = vmatmul.mubr.bf16.gmra.mrb[0].mxu0 %v252
      %v471 = vpop.f32.mrb[0].mxu0
      %v472 = vadd.f32 0.0, %v471
      %v473 = vpop.f32.mrb[0].mxu0
      %v474 = vpop.f32.mrb[0].mxu0
      %v475 = vadd.f32 0.0, %v474
      %v476 = vpop.f32.mrb[0].mxu0
      %477 = vdwg.mxu0
      %v478 = vld [vmem:[#allocation2] sm:$0xff]
      %v479 = vld [vmem:[#allocation2 + $0x8] sm:$0xff]
      %v480 = vld [vmem:[#allocation2 + $0x10] sm:$0xff]
      %v481 = vld [vmem:[#allocation2 + $0x18] sm:$0xff]
      %v482 = vld [vmem:[#allocation2 + $0x20] sm:$0xff]
      %v483 = vld [vmem:[#allocation2 + $0x28] sm:$0xff]
      %v484 = vld [vmem:[#allocation2 + $0x30] sm:$0xff]
      %v485 = vld [vmem:[#allocation2 + $0x38] sm:$0xff]
      %v486 = vld [vmem:[#allocation2 + $0x40] sm:$0xff]
      %v487 = vld [vmem:[#allocation2 + $0x48] sm:$0xff]
      %v488 = vld [vmem:[#allocation2 + $0x50] sm:$0xff]
      %v489 = vld [vmem:[#allocation2 + $0x58] sm:$0xff]
      %v490 = vld [vmem:[#allocation2 + $0x60] sm:$0xff]
      %v491 = vld [vmem:[#allocation2 + $0x68] sm:$0xff]
      %v492 = vld [vmem:[#allocation2 + $0x70] sm:$0xff]
      %v493 = vld [vmem:[#allocation2 + $0x78] sm:$0xff]
      %v494 = vld [vmem:[#allocation2 + $0x80] sm:$0xff]
      %v495 = vld [vmem:[#allocation2 + $0x88] sm:$0xff]
      %v496 = vld [vmem:[#allocation2 + $0x90] sm:$0xff]
      %v497 = vld [vmem:[#allocation2 + $0x98] sm:$0xff]
      %v498 = vld [vmem:[#allocation2 + $0xa0] sm:$0xff]
      %v499 = vld [vmem:[#allocation2 + $0xa8] sm:$0xff]
      %v500 = vld [vmem:[#allocation2 + $0xb0] sm:$0xff]
      %v501 = vld [vmem:[#allocation2 + $0xb8] sm:$0xff]
      %v502 = vld [vmem:[#allocation2 + $0xc0] sm:$0xff]
      %v503 = vld [vmem:[#allocation2 + $0xc8] sm:$0xff]
      %v504 = vld [vmem:[#allocation2 + $0xd0] sm:$0xff]
      %v505 = vld [vmem:[#allocation2 + $0xd8] sm:$0xff]
      %v506 = vld [vmem:[#allocation2 + $0xe0] sm:$0xff]
      %v507 = vld [vmem:[#allocation2 + $0xe8] sm:$0xff]
      %v508 = vld [vmem:[#allocation2 + $0xf0] sm:$0xff]
      %v509 = vld [vmem:[#allocation2 + $0xf8] sm:$0xff]
      %v510 = vld [vmem:[%s68] sm:$0xff]
      %v511 = vld [vmem:[%s68 + $0x8] sm:$0xff]
      %v512 = vld [vmem:[%s68 + $0x10] sm:$0xff]
      %v513 = vld [vmem:[%s68 + $0x18] sm:$0xff]
      %v514 = vld [vmem:[%s68 + $0x20] sm:$0xff]
      %v515 = vld [vmem:[%s68 + $0x28] sm:$0xff]
      %v516 = vld [vmem:[%s68 + $0x30] sm:$0xff]
      %v517 = vld [vmem:[%s68 + $0x38] sm:$0xff]
      %v518 = vld [vmem:[%s68 + $0x40] sm:$0xff]
      %v519 = vld [vmem:[%s68 + $0x48] sm:$0xff]
      %v520 = vld [vmem:[%s68 + $0x50] sm:$0xff]
      %v521 = vld [vmem:[%s68 + $0x58] sm:$0xff]
      %v522 = vld [vmem:[%s68 + $0x60] sm:$0xff]
      %v523 = vld [vmem:[%s68 + $0x68] sm:$0xff]
      %v524 = vld [vmem:[%s68 + $0x70] sm:$0xff]
      %v525 = vld [vmem:[%s68 + $0x78] sm:$0xff]
      %v526 = vld [vmem:[%s68 + $0x80] sm:$0xff]
      %v527 = vld [vmem:[%s68 + $0x88] sm:$0xff]
      %v528 = vld [vmem:[%s68 + $0x90] sm:$0xff]
      %v529 = vld [vmem:[%s68 + $0x98] sm:$0xff]
      %v530 = vld [vmem:[%s68 + $0xa0] sm:$0xff]
      %v531 = vld [vmem:[%s68 + $0xa8] sm:$0xff]
      %v532 = vld [vmem:[%s68 + $0xb0] sm:$0xff]
      %v533 = vld [vmem:[%s68 + $0xb8] sm:$0xff]
      %v534 = vld [vmem:[%s68 + $0xc0] sm:$0xff]
      %v535 = vld [vmem:[%s68 + $0xc8] sm:$0xff]
      %v536 = vld [vmem:[%s68 + $0xd0] sm:$0xff]
      %v537 = vld [vmem:[%s68 + $0xd8] sm:$0xff]
      %v538 = vld [vmem:[%s68 + $0xe0] sm:$0xff]
      %v539 = vld [vmem:[%s68 + $0xe8] sm:$0xff]
      %v540 = vld [vmem:[%s68 + $0xf0] sm:$0xff]
      %v541 = vld [vmem:[%s68 + $0xf8] sm:$0xff]
      %v542 = vpack.c.bf16 %v355, %v352
      %v543 = vpack.c.bf16 %v363, %v360
      %v544 = vpack.c.bf16 %v371, %v368
      %v545 = vpack.c.bf16 %v379, %v376
      %v546 = vpack.c.bf16 %v387, %v384
      %v547 = vpack.c.bf16 %v395, %v392
      %v548 = vpack.c.bf16 %v403, %v400
      %v549 = vpack.c.bf16 %v411, %v408
      %v550 = vpack.c.bf16 %v419, %v416
      %v551 = vpack.c.bf16 %v427, %v424
      %v552 = vpack.c.bf16 %v435, %v432
      %v553 = vpack.c.bf16 %v443, %v440
      %v554 = vpack.c.bf16 %v451, %v448
      %v555 = vpack.c.bf16 %v459, %v456
      %v556 = vpack.c.bf16 %v467, %v464
      %v557 = vpack.c.bf16 %v475, %v472
      %v590 = vunpack.c.l.b16 %v510
      %v591 = vunpack.c.h.b16 %v510
      %v592 = vunpack.c.l.b16 %v511
      %v593 = vunpack.c.h.b16 %v511
      %v594 = vunpack.c.l.b16 %v512
      %v595 = vunpack.c.h.b16 %v512
      %v596 = vunpack.c.l.b16 %v513
      %v597 = vunpack.c.h.b16 %v513
      %v598 = vunpack.c.l.b16 %v514
      %v599 = vunpack.c.h.b16 %v514
      %v600 = vunpack.c.l.b16 %v515
      %v601 = vunpack.c.h.b16 %v515
      %v602 = vunpack.c.l.b16 %v516
      %v603 = vunpack.c.h.b16 %v516
      %v604 = vunpack.c.l.b16 %v517
      %v605 = vunpack.c.h.b16 %v517
      %v606 = vunpack.c.l.b16 %v518
      %v607 = vunpack.c.h.b16 %v518
      %v608 = vunpack.c.l.b16 %v519
      %v609 = vunpack.c.h.b16 %v519
      %v610 = vunpack.c.l.b16 %v520
      %v611 = vunpack.c.h.b16 %v520
      %v612 = vunpack.c.l.b16 %v521
      %v613 = vunpack.c.h.b16 %v521
      %v614 = vunpack.c.l.b16 %v522
      %v615 = vunpack.c.h.b16 %v522
      %v616 = vunpack.c.l.b16 %v523
      %v617 = vunpack.c.h.b16 %v523
      %v618 = vunpack.c.l.b16 %v524
      %v619 = vunpack.c.h.b16 %v524
      %v620 = vunpack.c.l.b16 %v525
      %v621 = vunpack.c.h.b16 %v525
      %v622 = vunpack.c.l.b16 %v526
      %v623 = vunpack.c.h.b16 %v526
      %v624 = vunpack.c.l.b16 %v527
      %v625 = vunpack.c.h.b16 %v527
      %v626 = vunpack.c.l.b16 %v528
      %v627 = vunpack.c.h.b16 %v528
      %v628 = vunpack.c.l.b16 %v529
      %v629 = vunpack.c.h.b16 %v529
      %v630 = vunpack.c.l.b16 %v530
      %v631 = vunpack.c.h.b16 %v530
      %v632 = vunpack.c.l.b16 %v531
      %v633 = vunpack.c.h.b16 %v531
      %v634 = vunpack.c.l.b16 %v532
      %v635 = vunpack.c.h.b16 %v532
      %v636 = vunpack.c.l.b16 %v533
      %v637 = vunpack.c.h.b16 %v533
      %v638 = vunpack.c.l.b16 %v534
      %v639 = vunpack.c.h.b16 %v534
      %v640 = vunpack.c.l.b16 %v535
      %v641 = vunpack.c.h.b16 %v535
      %v642 = vunpack.c.l.b16 %v536
      %v643 = vunpack.c.h.b16 %v536
      %v644 = vunpack.c.l.b16 %v537
      %v645 = vunpack.c.h.b16 %v537
      %v646 = vunpack.c.l.b16 %v538
      %v647 = vunpack.c.h.b16 %v538
      %v648 = vunpack.c.l.b16 %v539
      %v649 = vunpack.c.h.b16 %v539
      %v650 = vunpack.c.l.b16 %v540
      %v651 = vunpack.c.h.b16 %v540
      %v652 = vunpack.c.l.b16 %v541
      %v653 = vunpack.c.h.b16 %v541
      %v654 = vpack.c.b16 %v592, %v590
      %v655 = vpack.c.b16 %v593, %v591
      %v656 = vpack.c.b16 %v596, %v594
      %v657 = vpack.c.b16 %v597, %v595
      %v658 = vpack.c.b16 %v600, %v598
      %v659 = vpack.c.b16 %v601, %v599
      %v660 = vpack.c.b16 %v604, %v602
      %v661 = vpack.c.b16 %v605, %v603
      %v662 = vpack.c.b16 %v608, %v606
      %v663 = vpack.c.b16 %v609, %v607
      %v664 = vpack.c.b16 %v612, %v610
      %v665 = vpack.c.b16 %v613, %v611
      %v666 = vpack.c.b16 %v616, %v614
      %v667 = vpack.c.b16 %v617, %v615
      %v668 = vpack.c.b16 %v620, %v618
      %v669 = vpack.c.b16 %v621, %v619
      %v670 = vpack.c.b16 %v624, %v622
      %v671 = vpack.c.b16 %v625, %v623
      %v672 = vpack.c.b16 %v628, %v626
      %v673 = vpack.c.b16 %v629, %v627
      %v674 = vpack.c.b16 %v632, %v630
      %v675 = vpack.c.b16 %v633, %v631
      %v676 = vpack.c.b16 %v636, %v634
      %v677 = vpack.c.b16 %v637, %v635
      %v678 = vpack.c.b16 %v640, %v638
      %v679 = vpack.c.b16 %v641, %v639
      %v680 = vpack.c.b16 %v644, %v642
      %v681 = vpack.c.b16 %v645, %v643
      %v682 = vpack.c.b16 %v648, %v646
      %v683 = vpack.c.b16 %v649, %v647
      %v684 = vpack.c.b16 %v652, %v650
      %v685 = vpack.c.b16 %v653, %v651
      %718 = vmatprep.subr.bf16.mxu0 0
      %719 = vmatpush1.bf16.msra.mxu0 %v542
      %720 = vmatprep.subr.bf16.mxu0 0
      %721 = vmatpush1.bf16.msra.mxu0 %v543
      %722 = vmatprep.subr.bf16.mxu0 0
      %723 = vmatpush1.bf16.msra.mxu0 %v544
      %724 = vmatprep.subr.bf16.mxu0 0
      %725 = vmatpush1.bf16.msra.mxu0 %v545
      %726 = vmatprep.subr.bf16.mxu0 0
      %727 = vmatpush1.bf16.msra.mxu0 %v546
      %728 = vmatprep.subr.bf16.mxu0 0
      %729 = vmatpush1.bf16.msra.mxu0 %v547
      %730 = vmatprep.subr.bf16.mxu0 0
      %731 = vmatpush1.bf16.msra.mxu0 %v548
      %732 = vmatprep.subr.bf16.mxu0 0
      %733 = vmatpush1.bf16.msra.mxu0 %v549
      %734 = vmatprep.subr.bf16.mxu0 0
      %735 = vmatpush1.bf16.msra.mxu0 %v550
      %736 = vmatprep.subr.bf16.mxu0 0
      %737 = vmatpush1.bf16.msra.mxu0 %v551
      %738 = vmatprep.subr.bf16.mxu0 0
      %739 = vmatpush1.bf16.msra.mxu0 %v552
      %740 = vmatprep.subr.bf16.mxu0 0
      %741 = vmatpush1.bf16.msra.mxu0 %v553
      %742 = vmatprep.subr.bf16.mxu0 0
      %743 = vmatpush1.bf16.msra.mxu0 %v554
      %744 = vmatprep.subr.bf16.mxu0 0
      %745 = vmatpush1.bf16.msra.mxu0 %v555
      %746 = vmatprep.subr.bf16.mxu0 0
      %747 = vmatpush1.bf16.msra.mxu0 %v556
      %748 = vmatprep.subr.bf16.mxu0 0
      %749 = vmatpush1.bf16.msra.mxu0 %v557
      %750 = vmatprep.mubr.bf16.mxu0 %v655
      %751 = vmatmul.mubr.bf16.gmra.mrb[0].mxu0 %v654
      %v752 = vpop.f32.mrb[0].mxu0
      %v753 = vadd.f32 0.0, %v752
      %v754 = vpop.f32.mrb[0].mxu0
      %v755 = vpop.f32.mrb[0].mxu0
      %v756 = vadd.f32 0.0, %v755
      %v757 = vpop.f32.mrb[0].mxu0
      %758 = vmatprep.mubr.bf16.mxu0 %v657
      %759 = vmatmul.mubr.bf16.gmra.mrb[0].mxu0 %v656
      %v760 = vpop.f32.mrb[0].mxu0
      %v761 = vadd.f32 0.0, %v760
      %v762 = vpop.f32.mrb[0].mxu0
      %v763 = vpop.f32.mrb[0].mxu0
      %v764 = vadd.f32 0.0, %v763
      %v765 = vpop.f32.mrb[0].mxu0
      %766 = vmatprep.mubr.bf16.mxu0 %v659
      %767 = vmatmul.mubr.bf16.gmra.mrb[0].mxu0 %v658
      %v768 = vpop.f32.mrb[0].mxu0
      %v769 = vadd.f32 0.0, %v768
      %v770 = vpop.f32.mrb[0].mxu0
      %v771 = vpop.f32.mrb[0].mxu0
      %v772 = vadd.f32 0.0, %v771
      %v773 = vpop.f32.mrb[0].mxu0
      %774 = vmatprep.mubr.bf16.mxu0 %v661
      %775 = vmatmul.mubr.bf16.gmra.mrb[0].mxu0 %v660
      %v776 = vpop.f32.mrb[0].mxu0
      %v777 = vadd.f32 0.0, %v776
      %v778 = vpop.f32.mrb[0].mxu0
      %v779 = vpop.f32.mrb[0].mxu0
      %v780 = vadd.f32 0.0, %v779
      %v781 = vpop.f32.mrb[0].mxu0
      %782 = vmatprep.mubr.bf16.mxu0 %v663
      %783 = vmatmul.mubr.bf16.gmra.mrb[0].mxu0 %v662
      %v784 = vpop.f32.mrb[0].mxu0
      %v785 = vadd.f32 0.0, %v784
      %v786 = vpop.f32.mrb[0].mxu0
      %v787 = vpop.f32.mrb[0].mxu0
      %v788 = vadd.f32 0.0, %v787
      %v789 = vpop.f32.mrb[0].mxu0
      %790 = vmatprep.mubr.bf16.mxu0 %v665
      %791 = vmatmul.mubr.bf16.gmra.mrb[0].mxu0 %v664
      %v792 = vpop.f32.mrb[0].mxu0
      %v793 = vadd.f32 0.0, %v792
      %v794 = vpop.f32.mrb[0].mxu0
      %v795 = vpop.f32.mrb[0].mxu0
      %v796 = vadd.f32 0.0, %v795
      %v797 = vpop.f32.mrb[0].mxu0
      %798 = vmatprep.mubr.bf16.mxu0 %v667
      %799 = vmatmul.mubr.bf16.gmra.mrb[0].mxu0 %v666
      %v800 = vpop.f32.mrb[0].mxu0
      %v801 = vadd.f32 0.0, %v800
      %v802 = vpop.f32.mrb[0].mxu0
      %v803 = vpop.f32.mrb[0].mxu0
      %v804 = vadd.f32 0.0, %v803
      %v805 = vpop.f32.mrb[0].mxu0
      %806 = vmatprep.mubr.bf16.mxu0 %v669
      %807 = vmatmul.mubr.bf16.gmra.mrb[0].mxu0 %v668
      %v808 = vpop.f32.mrb[0].mxu0
      %v809 = vadd.f32 0.0, %v808
      %v810 = vpop.f32.mrb[0].mxu0
      %v811 = vpop.f32.mrb[0].mxu0
      %v812 = vadd.f32 0.0, %v811
      %v813 = vpop.f32.mrb[0].mxu0
      %814 = vmatprep.mubr.bf16.mxu0 %v671
      %815 = vmatmul.mubr.bf16.gmra.mrb[0].mxu0 %v670
      %v816 = vpop.f32.mrb[0].mxu0
      %v817 = vadd.f32 0.0, %v816
      %v818 = vpop.f32.mrb[0].mxu0
      %v819 = vpop.f32.mrb[0].mxu0
      %v820 = vadd.f32 0.0, %v819
      %v821 = vpop.f32.mrb[0].mxu0
      %822 = vmatprep.mubr.bf16.mxu0 %v673
      %823 = vmatmul.mubr.bf16.gmra.mrb[0].mxu0 %v672
      %v824 = vpop.f32.mrb[0].mxu0
      %v825 = vadd.f32 0.0, %v824
      %v826 = vpop.f32.mrb[0].mxu0
      %v827 = vpop.f32.mrb[0].mxu0
      %v828 = vadd.f32 0.0, %v827
      %v829 = vpop.f32.mrb[0].mxu0
      %830 = vmatprep.mubr.bf16.mxu0 %v675
      %831 = vmatmul.mubr.bf16.gmra.mrb[0].mxu0 %v674
      %v832 = vpop.f32.mrb[0].mxu0
      %v833 = vadd.f32 0.0, %v832
      %v834 = vpop.f32.mrb[0].mxu0
      %v835 = vpop.f32.mrb[0].mxu0
      %v836 = vadd.f32 0.0, %v835
      %v837 = vpop.f32.mrb[0].mxu0
      %838 = vmatprep.mubr.bf16.mxu0 %v677
      %839 = vmatmul.mubr.bf16.gmra.mrb[0].mxu0 %v676
      %v840 = vpop.f32.mrb[0].mxu0
      %v841 = vadd.f32 0.0, %v840
      %v842 = vpop.f32.mrb[0].mxu0
      %v843 = vpop.f32.mrb[0].mxu0
      %v844 = vadd.f32 0.0, %v843
      %v845 = vpop.f32.mrb[0].mxu0
      %846 = vmatprep.mubr.bf16.mxu0 %v679
      %847 = vmatmul.mubr.bf16.gmra.mrb[0].mxu0 %v678
      %v848 = vpop.f32.mrb[0].mxu0
      %v849 = vadd.f32 0.0, %v848
      %v850 = vpop.f32.mrb[0].mxu0
      %v851 = vpop.f32.mrb[0].mxu0
      %v852 = vadd.f32 0.0, %v851
      %v853 = vpop.f32.mrb[0].mxu0
      %854 = vmatprep.mubr.bf16.mxu0 %v681
      %855 = vmatmul.mubr.bf16.gmra.mrb[0].mxu0 %v680
      %v856 = vpop.f32.mrb[0].mxu0
      %v857 = vadd.f32 0.0, %v856
      %v858 = vpop.f32.mrb[0].mxu0
      %v859 = vpop.f32.mrb[0].mxu0
      %v860 = vadd.f32 0.0, %v859
      %v861 = vpop.f32.mrb[0].mxu0
      %862 = vmatprep.mubr.bf16.mxu0 %v683
      %863 = vmatmul.mubr.bf16.gmra.mrb[0].mxu0 %v682
      %v864 = vpop.f32.mrb[0].mxu0
      %v865 = vadd.f32 0.0, %v864
      %v866 = vpop.f32.mrb[0].mxu0
      %v867 = vpop.f32.mrb[0].mxu0
      %v868 = vadd.f32 0.0, %v867
      %v869 = vpop.f32.mrb[0].mxu0
      %870 = vmatprep.mubr.bf16.mxu0 %v685
      %871 = vmatmul.mubr.bf16.gmra.mrb[0].mxu0 %v684
      %v872 = vpop.f32.mrb[0].mxu0
      %v873 = vadd.f32 0.0, %v872
      %v874 = vpop.f32.mrb[0].mxu0
      %v875 = vpop.f32.mrb[0].mxu0
      %v876 = vadd.f32 0.0, %v875
      %v877 = vpop.f32.mrb[0].mxu0
      %878 = vdwg.mxu0
      %v879 = vadd.f32 %v478, %v753
      %v880 = vadd.f32 %v479, %v756
      %v881 = vadd.f32 %v480, %v761
      %v882 = vadd.f32 %v481, %v764
      %v883 = vadd.f32 %v482, %v769
      %v884 = vadd.f32 %v483, %v772
      %v885 = vadd.f32 %v484, %v777
      %v886 = vadd.f32 %v485, %v780
      %v887 = vadd.f32 %v486, %v785
      %v888 = vadd.f32 %v487, %v788
      %v889 = vadd.f32 %v488, %v793
      %v890 = vadd.f32 %v489, %v796
      %v891 = vadd.f32 %v490, %v801
      %v892 = vadd.f32 %v491, %v804
      %v893 = vadd.f32 %v492, %v809
      %v894 = vadd.f32 %v493, %v812
      %v895 = vadd.f32 %v494, %v817
      %v896 = vadd.f32 %v495, %v820
      %v897 = vadd.f32 %v496, %v825
      %v898 = vadd.f32 %v497, %v828
      %v899 = vadd.f32 %v498, %v833
      %v900 = vadd.f32 %v499, %v836
      %v901 = vadd.f32 %v500, %v841
      %v902 = vadd.f32 %v501, %v844
      %v903 = vadd.f32 %v502, %v849
      %v904 = vadd.f32 %v503, %v852
      %v905 = vadd.f32 %v504, %v857
      %v906 = vadd.f32 %v505, %v860
      %v907 = vadd.f32 %v506, %v865
      %v908 = vadd.f32 %v507, %v868
      %v909 = vadd.f32 %v508, %v873
      %v910 = vadd.f32 %v509, %v876
      %911 = vst [vmem:[#allocation2] sm:$0xff] %v879
      %912 = vst [vmem:[#allocation2 + $0x8] sm:$0xff] %v880
      %913 = vst [vmem:[#allocation2 + $0x10] sm:$0xff] %v881
      %914 = vst [vmem:[#allocation2 + $0x18] sm:$0xff] %v882
      %915 = vst [vmem:[#allocation2 + $0x20] sm:$0xff] %v883
      %916 = vst [vmem:[#allocation2 + $0x28] sm:$0xff] %v884
      %917 = vst [vmem:[#allocation2 + $0x30] sm:$0xff] %v885
      %918 = vst [vmem:[#allocation2 + $0x38] sm:$0xff] %v886
      %919 = vst [vmem:[#allocation2 + $0x40] sm:$0xff] %v887
      %920 = vst [vmem:[#allocation2 + $0x48] sm:$0xff] %v888
      %921 = vst [vmem:[#allocation2 + $0x50] sm:$0xff] %v889
      %922 = vst [vmem:[#allocation2 + $0x58] sm:$0xff] %v890
      %923 = vst [vmem:[#allocation2 + $0x60] sm:$0xff] %v891
      %924 = vst [vmem:[#allocation2 + $0x68] sm:$0xff] %v892
      %925 = vst [vmem:[#allocation2 + $0x70] sm:$0xff] %v893
      %926 = vst [vmem:[#allocation2 + $0x78] sm:$0xff] %v894
      %927 = vst [vmem:[#allocation2 + $0x80] sm:$0xff] %v895
      %928 = vst [vmem:[#allocation2 + $0x88] sm:$0xff] %v896
      %929 = vst [vmem:[#allocation2 + $0x90] sm:$0xff] %v897
      %930 = vst [vmem:[#allocation2 + $0x98] sm:$0xff] %v898
      %931 = vst [vmem:[#allocation2 + $0xa0] sm:$0xff] %v899
      %932 = vst [vmem:[#allocation2 + $0xa8] sm:$0xff] %v900
      %933 = vst [vmem:[#allocation2 + $0xb0] sm:$0xff] %v901
      %934 = vst [vmem:[#allocation2 + $0xb8] sm:$0xff] %v902
      %935 = vst [vmem:[#allocation2 + $0xc0] sm:$0xff] %v903
      %936 = vst [vmem:[#allocation2 + $0xc8] sm:$0xff] %v904
      %937 = vst [vmem:[#allocation2 + $0xd0] sm:$0xff] %v905
      %938 = vst [vmem:[#allocation2 + $0xd8] sm:$0xff] %v906
      %939 = vst [vmem:[#allocation2 + $0xe0] sm:$0xff] %v907
      %940 = vst [vmem:[#allocation2 + $0xe8] sm:$0xff] %v908
      %941 = vst [vmem:[#allocation2 + $0xf0] sm:$0xff] %v909
      %942 = vst [vmem:[#allocation2 + $0xf8] sm:$0xff] %v910
    $region45: #{gcn_model_forward.9} parent=1 // pred_fallthru
      _
    // Predicated region
    $region46: #{gcn_model_forward.9} parent=1 // pred_check
      %p943 = pneg %p75
    $region47: #{gcn_model_forward.9} parent=1 // pred_check_branch
      %945 = sbr.rel (%p943) target = $region49
    $region48: #{gcn_model_forward.9} parent=1 // pred_region
      %v946 = vld [vmem:[#allocation2] sm:$0xff]
      %v947 = vld [vmem:[#allocation2 + $0x8] sm:$0xff]
      %v948 = vld [vmem:[#allocation2 + $0x10] sm:$0xff]
      %v949 = vld [vmem:[#allocation2 + $0x18] sm:$0xff]
      %v950 = vld [vmem:[#allocation2 + $0x20] sm:$0xff]
      %v951 = vld [vmem:[#allocation2 + $0x28] sm:$0xff]
      %v952 = vld [vmem:[#allocation2 + $0x30] sm:$0xff]
      %v953 = vld [vmem:[#allocation2 + $0x38] sm:$0xff]
      %v954 = vld [vmem:[#allocation2 + $0x40] sm:$0xff]
      %v955 = vld [vmem:[#allocation2 + $0x48] sm:$0xff]
      %v956 = vld [vmem:[#allocation2 + $0x50] sm:$0xff]
      %v957 = vld [vmem:[#allocation2 + $0x58] sm:$0xff]
      %v958 = vld [vmem:[#allocation2 + $0x60] sm:$0xff]
      %v959 = vld [vmem:[#allocation2 + $0x68] sm:$0xff]
      %v960 = vld [vmem:[#allocation2 + $0x70] sm:$0xff]
      %v961 = vld [vmem:[#allocation2 + $0x78] sm:$0xff]
      %v962 = vld [vmem:[#allocation2 + $0x80] sm:$0xff]
      %v963 = vld [vmem:[#allocation2 + $0x88] sm:$0xff]
      %v964 = vld [vmem:[#allocation2 + $0x90] sm:$0xff]
      %v965 = vld [vmem:[#allocation2 + $0x98] sm:$0xff]
      %v966 = vld [vmem:[#allocation2 + $0xa0] sm:$0xff]
      %v967 = vld [vmem:[#allocation2 + $0xa8] sm:$0xff]
      %v968 = vld [vmem:[#allocation2 + $0xb0] sm:$0xff]
      %v969 = vld [vmem:[#allocation2 + $0xb8] sm:$0xff]
      %v970 = vld [vmem:[#allocation2 + $0xc0] sm:$0xff]
      %v971 = vld [vmem:[#allocation2 + $0xc8] sm:$0xff]
      %v972 = vld [vmem:[#allocation2 + $0xd0] sm:$0xff]
      %v973 = vld [vmem:[#allocation2 + $0xd8] sm:$0xff]
      %v974 = vld [vmem:[#allocation2 + $0xe0] sm:$0xff]
      %v975 = vld [vmem:[#allocation2 + $0xe8] sm:$0xff]
      %v976 = vld [vmem:[#allocation2 + $0xf0] sm:$0xff]
      %v977 = vld [vmem:[#allocation2 + $0xf8] sm:$0xff]
      %v978 = vld [vmem:[%s7] sm:$0xff]
      %v979 = vld [vmem:[%s7 + $0x8] sm:$0xff]
      %v980 = vld [vmem:[%s7 + $0x10] sm:$0xff]
      %v981 = vld [vmem:[%s7 + $0x18] sm:$0xff]
      %v982 = vld [vmem:[%s7 + $0x20] sm:$0xff]
      %v983 = vld [vmem:[%s7 + $0x28] sm:$0xff]
      %v984 = vld [vmem:[%s7 + $0x30] sm:$0xff]
      %v985 = vld [vmem:[%s7 + $0x38] sm:$0xff]
      %v986 = vld [vmem:[%s7 + $0x40] sm:$0xff]
      %v987 = vld [vmem:[%s7 + $0x48] sm:$0xff]
      %v988 = vld [vmem:[%s7 + $0x50] sm:$0xff]
      %v989 = vld [vmem:[%s7 + $0x58] sm:$0xff]
      %v990 = vld [vmem:[%s7 + $0x60] sm:$0xff]
      %v991 = vld [vmem:[%s7 + $0x68] sm:$0xff]
      %v992 = vld [vmem:[%s7 + $0x70] sm:$0xff]
      %v993 = vld [vmem:[%s7 + $0x78] sm:$0xff]
      %v994 = vld [vmem:[%s7 + $0x80] sm:$0xff]
      %v995 = vld [vmem:[%s7 + $0x88] sm:$0xff]
      %v996 = vld [vmem:[%s7 + $0x90] sm:$0xff]
      %v997 = vld [vmem:[%s7 + $0x98] sm:$0xff]
      %v998 = vld [vmem:[%s7 + $0xa0] sm:$0xff]
      %v999 = vld [vmem:[%s7 + $0xa8] sm:$0xff]
      %v1000 = vld [vmem:[%s7 + $0xb0] sm:$0xff]
      %v1001 = vld [vmem:[%s7 + $0xb8] sm:$0xff]
      %v1002 = vld [vmem:[%s7 + $0xc0] sm:$0xff]
      %v1003 = vld [vmem:[%s7 + $0xc8] sm:$0xff]
      %v1004 = vld [vmem:[%s7 + $0xd0] sm:$0xff]
      %v1005 = vld [vmem:[%s7 + $0xd8] sm:$0xff]
      %v1006 = vld [vmem:[%s7 + $0xe0] sm:$0xff]
      %v1007 = vld [vmem:[%s7 + $0xe8] sm:$0xff]
      %v1008 = vld [vmem:[%s7 + $0xf0] sm:$0xff]
      %v1009 = vld [vmem:[%s7 + $0xf8] sm:$0xff]
      %v1010 = vadd.f32 %v946, %v978
      %v1011 = vadd.f32 %v947, %v979
      %v1012 = vadd.f32 %v948, %v980
      %v1013 = vadd.f32 %v949, %v981
      %v1014 = vadd.f32 %v950, %v982
      %v1015 = vadd.f32 %v951, %v983
      %v1016 = vadd.f32 %v952, %v984
      %v1017 = vadd.f32 %v953, %v985
      %v1018 = vadd.f32 %v954, %v986
      %v1019 = vadd.f32 %v955, %v987
      %v1020 = vadd.f32 %v956, %v988
      %v1021 = vadd.f32 %v957, %v989
      %v1022 = vadd.f32 %v958, %v990
      %v1023 = vadd.f32 %v959, %v991
      %v1024 = vadd.f32 %v960, %v992
      %v1025 = vadd.f32 %v961, %v993
      %v1026 = vadd.f32 %v962, %v994
      %v1027 = vadd.f32 %v963, %v995
      %v1028 = vadd.f32 %v964, %v996
      %v1029 = vadd.f32 %v965, %v997
      %v1030 = vadd.f32 %v966, %v998
      %v1031 = vadd.f32 %v967, %v999
      %v1032 = vadd.f32 %v968, %v1000
      %v1033 = vadd.f32 %v969, %v1001
      %v1034 = vadd.f32 %v970, %v1002
      %v1035 = vadd.f32 %v971, %v1003
      %v1036 = vadd.f32 %v972, %v1004
      %v1037 = vadd.f32 %v973, %v1005
      %v1038 = vadd.f32 %v974, %v1006
      %v1039 = vadd.f32 %v975, %v1007
      %v1040 = vadd.f32 %v976, %v1008
      %v1041 = vadd.f32 %v977, %v1009
      %v1042 = vld [vmem:[%s5] sm:$0x1]
      %v1044 = vlaneseq
      %v1045 = vshrl.u32 %v1044, 7
      %v1046 = vsub.s32 0, %v1045
      %v1047 = vrot.slane %v1042, %v1046
      %v1049 = vmul.f32 %v1010, %v1047
      %v1050 = vmul.f32 %v1011, %v1047
      %v1051 = vmul.f32 %v1012, %v1047
      %v1052 = vmul.f32 %v1013, %v1047
      %v1053 = vmul.f32 %v1014, %v1047
      %v1054 = vmul.f32 %v1015, %v1047
      %v1055 = vmul.f32 %v1016, %v1047
      %v1056 = vmul.f32 %v1017, %v1047
      %v1057 = vmul.f32 %v1018, %v1047
      %v1058 = vmul.f32 %v1019, %v1047
      %v1059 = vmul.f32 %v1020, %v1047
      %v1060 = vmul.f32 %v1021, %v1047
      %v1061 = vmul.f32 %v1022, %v1047
      %v1062 = vmul.f32 %v1023, %v1047
      %v1063 = vmul.f32 %v1024, %v1047
      %v1064 = vmul.f32 %v1025, %v1047
      %v1065 = vmul.f32 %v1026, %v1047
      %v1066 = vmul.f32 %v1027, %v1047
      %v1067 = vmul.f32 %v1028, %v1047
      %v1068 = vmul.f32 %v1029, %v1047
      %v1069 = vmul.f32 %v1030, %v1047
      %v1070 = vmul.f32 %v1031, %v1047
      %v1071 = vmul.f32 %v1032, %v1047
      %v1072 = vmul.f32 %v1033, %v1047
      %v1073 = vmul.f32 %v1034, %v1047
      %v1074 = vmul.f32 %v1035, %v1047
      %v1075 = vmul.f32 %v1036, %v1047
      %v1076 = vmul.f32 %v1037, %v1047
      %v1077 = vmul.f32 %v1038, %v1047
      %v1078 = vmul.f32 %v1039, %v1047
      %v1079 = vmul.f32 %v1040, %v1047
      %v1080 = vmul.f32 %v1041, %v1047
      %v1081 = vld [vmem:[%s6] sm:$0x1]
      %v1083 = vlaneseq
      %v1084 = vshrl.u32 %v1083, 7
      %v1085 = vsub.s32 0, %v1084
      %v1086 = vrot.slane %v1081, %v1085
      %v1088 = vadd.f32 %v1049, %v1086
      %v1089 = vadd.f32 %v1050, %v1086
      %v1090 = vadd.f32 %v1051, %v1086
      %v1091 = vadd.f32 %v1052, %v1086
      %v1092 = vadd.f32 %v1053, %v1086
      %v1093 = vadd.f32 %v1054, %v1086
      %v1094 = vadd.f32 %v1055, %v1086
      %v1095 = vadd.f32 %v1056, %v1086
      %v1096 = vadd.f32 %v1057, %v1086
      %v1097 = vadd.f32 %v1058, %v1086
      %v1098 = vadd.f32 %v1059, %v1086
      %v1099 = vadd.f32 %v1060, %v1086
      %v1100 = vadd.f32 %v1061, %v1086
      %v1101 = vadd.f32 %v1062, %v1086
      %v1102 = vadd.f32 %v1063, %v1086
      %v1103 = vadd.f32 %v1064, %v1086
      %v1104 = vadd.f32 %v1065, %v1086
      %v1105 = vadd.f32 %v1066, %v1086
      %v1106 = vadd.f32 %v1067, %v1086
      %v1107 = vadd.f32 %v1068, %v1086
      %v1108 = vadd.f32 %v1069, %v1086
      %v1109 = vadd.f32 %v1070, %v1086
      %v1110 = vadd.f32 %v1071, %v1086
      %v1111 = vadd.f32 %v1072, %v1086
      %v1112 = vadd.f32 %v1073, %v1086
      %v1113 = vadd.f32 %v1074, %v1086
      %v1114 = vadd.f32 %v1075, %v1086
      %v1115 = vadd.f32 %v1076, %v1086
      %v1116 = vadd.f32 %v1077, %v1086
      %v1117 = vadd.f32 %v1078, %v1086
      %v1118 = vadd.f32 %v1079, %v1086
      %v1119 = vadd.f32 %v1080, %v1086
      %v1120 = vld [vmem:[%s10] sm:$0x1]
      %1121 = vadd.xlane.f32.xlu0 %v1088
      %v1122 = vpop.xlane.xlu0 %1121
      %1123 = vadd.xlane.f32.xlu0 %v1089
      %v1124 = vpop.xlane.xlu0 %1123
      %1125 = vadd.xlane.f32.xlu0 %v1090
      %v1126 = vpop.xlane.xlu0 %1125
      %1127 = vadd.xlane.f32.xlu0 %v1091
      %v1128 = vpop.xlane.xlu0 %1127
      %1129 = vadd.xlane.f32.xlu0 %v1092
      %v1130 = vpop.xlane.xlu0 %1129
      %1131 = vadd.xlane.f32.xlu0 %v1093
      %v1132 = vpop.xlane.xlu0 %1131
      %1133 = vadd.xlane.f32.xlu0 %v1094
      %v1134 = vpop.xlane.xlu0 %1133
      %1135 = vadd.xlane.f32.xlu0 %v1095
      %v1136 = vpop.xlane.xlu0 %1135
      %1137 = vadd.xlane.f32.xlu0 %v1096
      %v1138 = vpop.xlane.xlu0 %1137
      %1139 = vadd.xlane.f32.xlu0 %v1097
      %v1140 = vpop.xlane.xlu0 %1139
      %1141 = vadd.xlane.f32.xlu0 %v1098
      %v1142 = vpop.xlane.xlu0 %1141
      %1143 = vadd.xlane.f32.xlu0 %v1099
      %v1144 = vpop.xlane.xlu0 %1143
      %1145 = vadd.xlane.f32.xlu0 %v1100
      %v1146 = vpop.xlane.xlu0 %1145
      %1147 = vadd.xlane.f32.xlu0 %v1101
      %v1148 = vpop.xlane.xlu0 %1147
      %1149 = vadd.xlane.f32.xlu0 %v1102
      %v1150 = vpop.xlane.xlu0 %1149
      %1151 = vadd.xlane.f32.xlu0 %v1103
      %v1152 = vpop.xlane.xlu0 %1151
      %1153 = vadd.xlane.f32.xlu0 %v1104
      %v1154 = vpop.xlane.xlu0 %1153
      %1155 = vadd.xlane.f32.xlu0 %v1105
      %v1156 = vpop.xlane.xlu0 %1155
      %1157 = vadd.xlane.f32.xlu0 %v1106
      %v1158 = vpop.xlane.xlu0 %1157
      %1159 = vadd.xlane.f32.xlu0 %v1107
      %v1160 = vpop.xlane.xlu0 %1159
      %1161 = vadd.xlane.f32.xlu0 %v1108
      %v1162 = vpop.xlane.xlu0 %1161
      %1163 = vadd.xlane.f32.xlu0 %v1109
      %v1164 = vpop.xlane.xlu0 %1163
      %1165 = vadd.xlane.f32.xlu0 %v1110
      %v1166 = vpop.xlane.xlu0 %1165
      %1167 = vadd.xlane.f32.xlu0 %v1111
      %v1168 = vpop.xlane.xlu0 %1167
      %1169 = vadd.xlane.f32.xlu0 %v1112
      %v1170 = vpop.xlane.xlu0 %1169
      %1171 = vadd.xlane.f32.xlu0 %v1113
      %v1172 = vpop.xlane.xlu0 %1171
      %1173 = vadd.xlane.f32.xlu0 %v1114
      %v1174 = vpop.xlane.xlu0 %1173
      %1175 = vadd.xlane.f32.xlu0 %v1115
      %v1176 = vpop.xlane.xlu0 %1175
      %1177 = vadd.xlane.f32.xlu0 %v1116
      %v1178 = vpop.xlane.xlu0 %1177
      %1179 = vadd.xlane.f32.xlu0 %v1117
      %v1180 = vpop.xlane.xlu0 %1179
      %1181 = vadd.xlane.f32.xlu0 %v1118
      %v1182 = vpop.xlane.xlu0 %1181
      %1183 = vadd.xlane.f32.xlu0 %v1119
      %v1184 = vpop.xlane.xlu0 %1183
      %v1185 = vmul.f32 %v1122, 0.125
      %v1186 = vmul.f32 %v1124, 0.125
      %v1187 = vmul.f32 %v1126, 0.125
      %v1188 = vmul.f32 %v1128, 0.125
      %v1189 = vmul.f32 %v1130, 0.125
      %v1190 = vmul.f32 %v1132, 0.125
      %v1191 = vmul.f32 %v1134, 0.125
      %v1192 = vmul.f32 %v1136, 0.125
      %v1193 = vmul.f32 %v1138, 0.125
      %v1194 = vmul.f32 %v1140, 0.125
      %v1195 = vmul.f32 %v1142, 0.125
      %v1196 = vmul.f32 %v1144, 0.125
      %v1197 = vmul.f32 %v1146, 0.125
      %v1198 = vmul.f32 %v1148, 0.125
      %v1199 = vmul.f32 %v1150, 0.125
      %v1200 = vmul.f32 %v1152, 0.125
      %v1201 = vmul.f32 %v1154, 0.125
      %v1202 = vmul.f32 %v1156, 0.125
      %v1203 = vmul.f32 %v1158, 0.125
      %v1204 = vmul.f32 %v1160, 0.125
      %v1205 = vmul.f32 %v1162, 0.125
      %v1206 = vmul.f32 %v1164, 0.125
      %v1207 = vmul.f32 %v1166, 0.125
      %v1208 = vmul.f32 %v1168, 0.125
      %v1209 = vmul.f32 %v1170, 0.125
      %v1210 = vmul.f32 %v1172, 0.125
      %v1211 = vmul.f32 %v1174, 0.125
      %v1212 = vmul.f32 %v1176, 0.125
      %v1213 = vmul.f32 %v1178, 0.125
      %v1214 = vmul.f32 %v1180, 0.125
      %v1215 = vmul.f32 %v1182, 0.125
      %v1216 = vmul.f32 %v1184, 0.125
      %v1217 = vsub.f32 %v1088, %v1185
      %v1218 = vsub.f32 %v1089, %v1186
      %v1219 = vsub.f32 %v1090, %v1187
      %v1220 = vsub.f32 %v1091, %v1188
      %v1221 = vsub.f32 %v1092, %v1189
      %v1222 = vsub.f32 %v1093, %v1190
      %v1223 = vsub.f32 %v1094, %v1191
      %v1224 = vsub.f32 %v1095, %v1192
      %v1225 = vsub.f32 %v1096, %v1193
      %v1226 = vsub.f32 %v1097, %v1194
      %v1227 = vsub.f32 %v1098, %v1195
      %v1228 = vsub.f32 %v1099, %v1196
      %v1229 = vsub.f32 %v1100, %v1197
      %v1230 = vsub.f32 %v1101, %v1198
      %v1231 = vsub.f32 %v1102, %v1199
      %v1232 = vsub.f32 %v1103, %v1200
      %v1233 = vsub.f32 %v1104, %v1201
      %v1234 = vsub.f32 %v1105, %v1202
      %v1235 = vsub.f32 %v1106, %v1203
      %v1236 = vsub.f32 %v1107, %v1204
      %v1237 = vsub.f32 %v1108, %v1205
      %v1238 = vsub.f32 %v1109, %v1206
      %v1239 = vsub.f32 %v1110, %v1207
      %v1240 = vsub.f32 %v1111, %v1208
      %v1241 = vsub.f32 %v1112, %v1209
      %v1242 = vsub.f32 %v1113, %v1210
      %v1243 = vsub.f32 %v1114, %v1211
      %v1244 = vsub.f32 %v1115, %v1212
      %v1245 = vsub.f32 %v1116, %v1213
      %v1246 = vsub.f32 %v1117, %v1214
      %v1247 = vsub.f32 %v1118, %v1215
      %v1248 = vsub.f32 %v1119, %v1216
      %v1250 = vlaneseq
      %v1251 = vshrl.u32 %v1250, 7
      %v1252 = vsub.s32 0, %v1251
      %v1253 = vrot.slane %v1120, %v1252
      %v1255 = vmul.f32 %v1217, %v1253
      %v1256 = vmul.f32 %v1218, %v1253
      %v1257 = vmul.f32 %v1219, %v1253
      %v1258 = vmul.f32 %v1220, %v1253
      %v1259 = vmul.f32 %v1221, %v1253
      %v1260 = vmul.f32 %v1222, %v1253
      %v1261 = vmul.f32 %v1223, %v1253
      %v1262 = vmul.f32 %v1224, %v1253
      %v1263 = vmul.f32 %v1225, %v1253
      %v1264 = vmul.f32 %v1226, %v1253
      %v1265 = vmul.f32 %v1227, %v1253
      %v1266 = vmul.f32 %v1228, %v1253
      %v1267 = vmul.f32 %v1229, %v1253
      %v1268 = vmul.f32 %v1230, %v1253
      %v1269 = vmul.f32 %v1231, %v1253
      %v1270 = vmul.f32 %v1232, %v1253
      %v1271 = vmul.f32 %v1233, %v1253
      %v1272 = vmul.f32 %v1234, %v1253
      %v1273 = vmul.f32 %v1235, %v1253
      %v1274 = vmul.f32 %v1236, %v1253
      %v1275 = vmul.f32 %v1237, %v1253
      %v1276 = vmul.f32 %v1238, %v1253
      %v1277 = vmul.f32 %v1239, %v1253
      %v1278 = vmul.f32 %v1240, %v1253
      %v1279 = vmul.f32 %v1241, %v1253
      %v1280 = vmul.f32 %v1242, %v1253
      %v1281 = vmul.f32 %v1243, %v1253
      %v1282 = vmul.f32 %v1244, %v1253
      %v1283 = vmul.f32 %v1245, %v1253
      %v1284 = vmul.f32 %v1246, %v1253
      %v1285 = vmul.f32 %v1247, %v1253
      %v1286 = vmul.f32 %v1248, %v1253
      %v1287 = vmul.f32 %v1255, %v1255
      %v1288 = vmul.f32 %v1256, %v1256
      %v1289 = vmul.f32 %v1257, %v1257
      %v1290 = vmul.f32 %v1258, %v1258
      %v1291 = vmul.f32 %v1259, %v1259
      %v1292 = vmul.f32 %v1260, %v1260
      %v1293 = vmul.f32 %v1261, %v1261
      %v1294 = vmul.f32 %v1262, %v1262
      %v1295 = vmul.f32 %v1263, %v1263
      %v1296 = vmul.f32 %v1264, %v1264
      %v1297 = vmul.f32 %v1265, %v1265
      %v1298 = vmul.f32 %v1266, %v1266
      %v1299 = vmul.f32 %v1267, %v1267
      %v1300 = vmul.f32 %v1268, %v1268
      %v1301 = vmul.f32 %v1269, %v1269
      %v1302 = vmul.f32 %v1270, %v1270
      %v1303 = vmul.f32 %v1271, %v1271
      %v1304 = vmul.f32 %v1272, %v1272
      %v1305 = vmul.f32 %v1273, %v1273
      %v1306 = vmul.f32 %v1274, %v1274
      %v1307 = vmul.f32 %v1275, %v1275
      %v1308 = vmul.f32 %v1276, %v1276
      %v1309 = vmul.f32 %v1277, %v1277
      %v1310 = vmul.f32 %v1278, %v1278
      %v1311 = vmul.f32 %v1279, %v1279
      %v1312 = vmul.f32 %v1280, %v1280
      %v1313 = vmul.f32 %v1281, %v1281
      %v1314 = vmul.f32 %v1282, %v1282
      %v1315 = vmul.f32 %v1283, %v1283
      %v1316 = vmul.f32 %v1284, %v1284
      %v1317 = vmul.f32 %v1285, %v1285
      %v1318 = vmul.f32 %v1286, %v1286
      %1319 = vadd.xlane.f32.xlu0 %v1287
      %v1320 = vpop.xlane.xlu0 %1319
      %1321 = vadd.xlane.f32.xlu0 %v1288
      %v1322 = vpop.xlane.xlu0 %1321
      %1323 = vadd.xlane.f32.xlu0 %v1289
      %v1324 = vpop.xlane.xlu0 %1323
      %1325 = vadd.xlane.f32.xlu0 %v1290
      %v1326 = vpop.xlane.xlu0 %1325
      %1327 = vadd.xlane.f32.xlu0 %v1291
      %v1328 = vpop.xlane.xlu0 %1327
      %1329 = vadd.xlane.f32.xlu0 %v1292
      %v1330 = vpop.xlane.xlu0 %1329
      %1331 = vadd.xlane.f32.xlu0 %v1293
      %v1332 = vpop.xlane.xlu0 %1331
      %1333 = vadd.xlane.f32.xlu0 %v1294
      %v1334 = vpop.xlane.xlu0 %1333
      %1335 = vadd.xlane.f32.xlu0 %v1295
      %v1336 = vpop.xlane.xlu0 %1335
      %1337 = vadd.xlane.f32.xlu0 %v1296
      %v1338 = vpop.xlane.xlu0 %1337
      %1339 = vadd.xlane.f32.xlu0 %v1297
      %v1340 = vpop.xlane.xlu0 %1339
      %1341 = vadd.xlane.f32.xlu0 %v1298
      %v1342 = vpop.xlane.xlu0 %1341
      %1343 = vadd.xlane.f32.xlu0 %v1299
      %v1344 = vpop.xlane.xlu0 %1343
      %1345 = vadd.xlane.f32.xlu0 %v1300
      %v1346 = vpop.xlane.xlu0 %1345
      %1347 = vadd.xlane.f32.xlu0 %v1301
      %v1348 = vpop.xlane.xlu0 %1347
      %1349 = vadd.xlane.f32.xlu0 %v1302
      %v1350 = vpop.xlane.xlu0 %1349
      %1351 = vadd.xlane.f32.xlu0 %v1303
      %v1352 = vpop.xlane.xlu0 %1351
      %1353 = vadd.xlane.f32.xlu0 %v1304
      %v1354 = vpop.xlane.xlu0 %1353
      %1355 = vadd.xlane.f32.xlu0 %v1305
      %v1356 = vpop.xlane.xlu0 %1355
      %1357 = vadd.xlane.f32.xlu0 %v1306
      %v1358 = vpop.xlane.xlu0 %1357
      %1359 = vadd.xlane.f32.xlu0 %v1307
      %v1360 = vpop.xlane.xlu0 %1359
      %1361 = vadd.xlane.f32.xlu0 %v1308
      %v1362 = vpop.xlane.xlu0 %1361
      %1363 = vadd.xlane.f32.xlu0 %v1309
      %v1364 = vpop.xlane.xlu0 %1363
      %1365 = vadd.xlane.f32.xlu0 %v1310
      %v1366 = vpop.xlane.xlu0 %1365
      %1367 = vadd.xlane.f32.xlu0 %v1311
      %v1368 = vpop.xlane.xlu0 %1367
      %1369 = vadd.xlane.f32.xlu0 %v1312
      %v1370 = vpop.xlane.xlu0 %1369
      %1371 = vadd.xlane.f32.xlu0 %v1313
      %v1372 = vpop.xlane.xlu0 %1371
      %1373 = vadd.xlane.f32.xlu0 %v1314
      %v1374 = vpop.xlane.xlu0 %1373
      %1375 = vadd.xlane.f32.xlu0 %v1315
      %v1376 = vpop.xlane.xlu0 %1375
      %1377 = vadd.xlane.f32.xlu0 %v1316
      %v1378 = vpop.xlane.xlu0 %1377
      %1379 = vadd.xlane.f32.xlu0 %v1317
      %v1380 = vpop.xlane.xlu0 %1379
      %1381 = vadd.xlane.f32.xlu0 %v1318
      %v1382 = vpop.xlane.xlu0 %1381
      %v1383 = vmul.f32 %v1320, 0.125
      %v1384 = vmul.f32 %v1322, 0.125
      %v1385 = vmul.f32 %v1324, 0.125
      %v1386 = vmul.f32 %v1326, 0.125
      %v1387 = vmul.f32 %v1328, 0.125
      %v1388 = vmul.f32 %v1330, 0.125
      %v1389 = vmul.f32 %v1332, 0.125
      %v1390 = vmul.f32 %v1334, 0.125
      %v1391 = vmul.f32 %v1336, 0.125
      %v1392 = vmul.f32 %v1338, 0.125
      %v1393 = vmul.f32 %v1340, 0.125
      %v1394 = vmul.f32 %v1342, 0.125
      %v1395 = vmul.f32 %v1344, 0.125
      %v1396 = vmul.f32 %v1346, 0.125
      %v1397 = vmul.f32 %v1348, 0.125
      %v1398 = vmul.f32 %v1350, 0.125
      %v1399 = vmul.f32 %v1352, 0.125
      %v1400 = vmul.f32 %v1354, 0.125
      %v1401 = vmul.f32 %v1356, 0.125
      %v1402 = vmul.f32 %v1358, 0.125
      %v1403 = vmul.f32 %v1360, 0.125
      %v1404 = vmul.f32 %v1362, 0.125
      %v1405 = vmul.f32 %v1364, 0.125
      %v1406 = vmul.f32 %v1366, 0.125
      %v1407 = vmul.f32 %v1368, 0.125
      %v1408 = vmul.f32 %v1370, 0.125
      %v1409 = vmul.f32 %v1372, 0.125
      %v1410 = vmul.f32 %v1374, 0.125
      %v1411 = vmul.f32 %v1376, 0.125
      %v1412 = vmul.f32 %v1378, 0.125
      %v1413 = vmul.f32 %v1380, 0.125
      %v1414 = vmul.f32 %v1382, 0.125
      %v1415 = vadd.f32 %v1383, 1e-05
      %v1416 = vadd.f32 %v1384, 1e-05
      %v1417 = vadd.f32 %v1385, 1e-05
      %v1418 = vadd.f32 %v1386, 1e-05
      %v1419 = vadd.f32 %v1387, 1e-05
      %v1420 = vadd.f32 %v1388, 1e-05
      %v1421 = vadd.f32 %v1389, 1e-05
      %v1422 = vadd.f32 %v1390, 1e-05
      %v1423 = vadd.f32 %v1391, 1e-05
      %v1424 = vadd.f32 %v1392, 1e-05
      %v1425 = vadd.f32 %v1393, 1e-05
      %v1426 = vadd.f32 %v1394, 1e-05
      %v1427 = vadd.f32 %v1395, 1e-05
      %v1428 = vadd.f32 %v1396, 1e-05
      %v1429 = vadd.f32 %v1397, 1e-05
      %v1430 = vadd.f32 %v1398, 1e-05
      %v1431 = vadd.f32 %v1399, 1e-05
      %v1432 = vadd.f32 %v1400, 1e-05
      %v1433 = vadd.f32 %v1401, 1e-05
      %v1434 = vadd.f32 %v1402, 1e-05
      %v1435 = vadd.f32 %v1403, 1e-05
      %v1436 = vadd.f32 %v1404, 1e-05
      %v1437 = vadd.f32 %v1405, 1e-05
      %v1438 = vadd.f32 %v1406, 1e-05
      %v1439 = vadd.f32 %v1407, 1e-05
      %v1440 = vadd.f32 %v1408, 1e-05
      %v1441 = vadd.f32 %v1409, 1e-05
      %v1442 = vadd.f32 %v1410, 1e-05
      %v1443 = vadd.f32 %v1411, 1e-05
      %v1444 = vadd.f32 %v1412, 1e-05
      %v1445 = vadd.f32 %v1413, 1e-05
      %v1446 = vadd.f32 %v1414, 1e-05
      %v1447 = vrsqrt.pop %v1415
      %v1448 = vrsqrt.pop %v1416
      %v1449 = vrsqrt.pop %v1417
      %v1450 = vrsqrt.pop %v1418
      %v1451 = vrsqrt.pop %v1419
      %v1452 = vrsqrt.pop %v1420
      %v1453 = vrsqrt.pop %v1421
      %v1454 = vrsqrt.pop %v1422
      %v1455 = vrsqrt.pop %v1423
      %v1456 = vrsqrt.pop %v1424
      %v1457 = vrsqrt.pop %v1425
      %v1458 = vrsqrt.pop %v1426
      %v1459 = vrsqrt.pop %v1427
      %v1460 = vrsqrt.pop %v1428
      %v1461 = vrsqrt.pop %v1429
      %v1462 = vrsqrt.pop %v1430
      %v1463 = vrsqrt.pop %v1431
      %v1464 = vrsqrt.pop %v1432
      %v1465 = vrsqrt.pop %v1433
      %v1466 = vrsqrt.pop %v1434
      %v1467 = vrsqrt.pop %v1435
      %v1468 = vrsqrt.pop %v1436
      %v1469 = vrsqrt.pop %v1437
      %v1470 = vrsqrt.pop %v1438
      %v1471 = vrsqrt.pop %v1439
      %v1472 = vrsqrt.pop %v1440
      %v1473 = vrsqrt.pop %v1441
      %v1474 = vrsqrt.pop %v1442
      %v1475 = vrsqrt.pop %v1443
      %v1476 = vrsqrt.pop %v1444
      %v1477 = vrsqrt.pop %v1445
      %v1478 = vrsqrt.pop %v1446
      %v1479 = vmul.f32 %v1255, %v1447
      %v1480 = vmul.f32 %v1256, %v1448
      %v1481 = vmul.f32 %v1257, %v1449
      %v1482 = vmul.f32 %v1258, %v1450
      %v1483 = vmul.f32 %v1259, %v1451
      %v1484 = vmul.f32 %v1260, %v1452
      %v1485 = vmul.f32 %v1261, %v1453
      %v1486 = vmul.f32 %v1262, %v1454
      %v1487 = vmul.f32 %v1263, %v1455
      %v1488 = vmul.f32 %v1264, %v1456
      %v1489 = vmul.f32 %v1265, %v1457
      %v1490 = vmul.f32 %v1266, %v1458
      %v1491 = vmul.f32 %v1267, %v1459
      %v1492 = vmul.f32 %v1268, %v1460
      %v1493 = vmul.f32 %v1269, %v1461
      %v1494 = vmul.f32 %v1270, %v1462
      %v1495 = vmul.f32 %v1271, %v1463
      %v1496 = vmul.f32 %v1272, %v1464
      %v1497 = vmul.f32 %v1273, %v1465
      %v1498 = vmul.f32 %v1274, %v1466
      %v1499 = vmul.f32 %v1275, %v1467
      %v1500 = vmul.f32 %v1276, %v1468
      %v1501 = vmul.f32 %v1277, %v1469
      %v1502 = vmul.f32 %v1278, %v1470
      %v1503 = vmul.f32 %v1279, %v1471
      %v1504 = vmul.f32 %v1280, %v1472
      %v1505 = vmul.f32 %v1281, %v1473
      %v1506 = vmul.f32 %v1282, %v1474
      %v1507 = vmul.f32 %v1283, %v1475
      %v1508 = vmul.f32 %v1284, %v1476
      %v1509 = vmul.f32 %v1285, %v1477
      %v1510 = vmul.f32 %v1286, %v1478
      %v1511 = vld [vmem:[%s8] sm:$0x1]
      %v1513 = vlaneseq
      %v1514 = vshrl.u32 %v1513, 7
      %v1515 = vsub.s32 0, %v1514
      %v1516 = vrot.slane %v1511, %v1515
      %v1518 = vmul.f32 %v1479, %v1516
      %v1519 = vmul.f32 %v1480, %v1516
      %v1520 = vmul.f32 %v1481, %v1516
      %v1521 = vmul.f32 %v1482, %v1516
      %v1522 = vmul.f32 %v1483, %v1516
      %v1523 = vmul.f32 %v1484, %v1516
      %v1524 = vmul.f32 %v1485, %v1516
      %v1525 = vmul.f32 %v1486, %v1516
      %v1526 = vmul.f32 %v1487, %v1516
      %v1527 = vmul.f32 %v1488, %v1516
      %v1528 = vmul.f32 %v1489, %v1516
      %v1529 = vmul.f32 %v1490, %v1516
      %v1530 = vmul.f32 %v1491, %v1516
      %v1531 = vmul.f32 %v1492, %v1516
      %v1532 = vmul.f32 %v1493, %v1516
      %v1533 = vmul.f32 %v1494, %v1516
      %v1534 = vmul.f32 %v1495, %v1516
      %v1535 = vmul.f32 %v1496, %v1516
      %v1536 = vmul.f32 %v1497, %v1516
      %v1537 = vmul.f32 %v1498, %v1516
      %v1538 = vmul.f32 %v1499, %v1516
      %v1539 = vmul.f32 %v1500, %v1516
      %v1540 = vmul.f32 %v1501, %v1516
      %v1541 = vmul.f32 %v1502, %v1516
      %v1542 = vmul.f32 %v1503, %v1516
      %v1543 = vmul.f32 %v1504, %v1516
      %v1544 = vmul.f32 %v1505, %v1516
      %v1545 = vmul.f32 %v1506, %v1516
      %v1546 = vmul.f32 %v1507, %v1516
      %v1547 = vmul.f32 %v1508, %v1516
      %v1548 = vmul.f32 %v1509, %v1516
      %v1549 = vmul.f32 %v1510, %v1516
      %v1550 = vld [vmem:[%s9] sm:$0x1]
      %v1552 = vlaneseq
      %v1553 = vshrl.u32 %v1552, 7
      %v1554 = vsub.s32 0, %v1553
      %v1555 = vrot.slane %v1550, %v1554
      %v1557 = vadd.f32 %v1518, %v1555
      %v1558 = vadd.f32 %v1519, %v1555
      %v1559 = vadd.f32 %v1520, %v1555
      %v1560 = vadd.f32 %v1521, %v1555
      %v1561 = vadd.f32 %v1522, %v1555
      %v1562 = vadd.f32 %v1523, %v1555
      %v1563 = vadd.f32 %v1524, %v1555
      %v1564 = vadd.f32 %v1525, %v1555
      %v1565 = vadd.f32 %v1526, %v1555
      %v1566 = vadd.f32 %v1527, %v1555
      %v1567 = vadd.f32 %v1528, %v1555
      %v1568 = vadd.f32 %v1529, %v1555
      %v1569 = vadd.f32 %v1530, %v1555
      %v1570 = vadd.f32 %v1531, %v1555
      %v1571 = vadd.f32 %v1532, %v1555
      %v1572 = vadd.f32 %v1533, %v1555
      %v1573 = vadd.f32 %v1534, %v1555
      %v1574 = vadd.f32 %v1535, %v1555
      %v1575 = vadd.f32 %v1536, %v1555
      %v1576 = vadd.f32 %v1537, %v1555
      %v1577 = vadd.f32 %v1538, %v1555
      %v1578 = vadd.f32 %v1539, %v1555
      %v1579 = vadd.f32 %v1540, %v1555
      %v1580 = vadd.f32 %v1541, %v1555
      %v1581 = vadd.f32 %v1542, %v1555
      %v1582 = vadd.f32 %v1543, %v1555
      %v1583 = vadd.f32 %v1544, %v1555
      %v1584 = vadd.f32 %v1545, %v1555
      %v1585 = vadd.f32 %v1546, %v1555
      %v1586 = vadd.f32 %v1547, %v1555
      %v1587 = vadd.f32 %v1548, %v1555
      %v1588 = vadd.f32 %v1549, %v1555
      %1589 = vst [vmem:[#allocation6] sm:$0xff] %v1557
      %1590 = vst [vmem:[#allocation6 + $0x8] sm:$0xff] %v1558
      %1591 = vst [vmem:[#allocation6 + $0x10] sm:$0xff] %v1559
      %1592 = vst [vmem:[#allocation6 + $0x18] sm:$0xff] %v1560
      %1593 = vst [vmem:[#allocation6 + $0x20] sm:$0xff] %v1561
      %1594 = vst [vmem:[#allocation6 + $0x28] sm:$0xff] %v1562
      %1595 = vst [vmem:[#allocation6 + $0x30] sm:$0xff] %v1563
      %1596 = vst [vmem:[#allocation6 + $0x38] sm:$0xff] %v1564
      %1597 = vst [vmem:[#allocation6 + $0x40] sm:$0xff] %v1565
      %1598 = vst [vmem:[#allocation6 + $0x48] sm:$0xff] %v1566
      %1599 = vst [vmem:[#allocation6 + $0x50] sm:$0xff] %v1567
      %1600 = vst [vmem:[#allocation6 + $0x58] sm:$0xff] %v1568
      %1601 = vst [vmem:[#allocation6 + $0x60] sm:$0xff] %v1569
      %1602 = vst [vmem:[#allocation6 + $0x68] sm:$0xff] %v1570
      %1603 = vst [vmem:[#allocation6 + $0x70] sm:$0xff] %v1571
      %1604 = vst [vmem:[#allocation6 + $0x78] sm:$0xff] %v1572
      %1605 = vst [vmem:[#allocation6 + $0x80] sm:$0xff] %v1573
      %1606 = vst [vmem:[#allocation6 + $0x88] sm:$0xff] %v1574
      %1607 = vst [vmem:[#allocation6 + $0x90] sm:$0xff] %v1575
      %1608 = vst [vmem:[#allocation6 + $0x98] sm:$0xff] %v1576
      %1609 = vst [vmem:[#allocation6 + $0xa0] sm:$0xff] %v1577
      %1610 = vst [vmem:[#allocation6 + $0xa8] sm:$0xff] %v1578
      %1611 = vst [vmem:[#allocation6 + $0xb0] sm:$0xff] %v1579
      %1612 = vst [vmem:[#allocation6 + $0xb8] sm:$0xff] %v1580
      %1613 = vst [vmem:[#allocation6 + $0xc0] sm:$0xff] %v1581
      %1614 = vst [vmem:[#allocation6 + $0xc8] sm:$0xff] %v1582
      %1615 = vst [vmem:[#allocation6 + $0xd0] sm:$0xff] %v1583
      %1616 = vst [vmem:[#allocation6 + $0xd8] sm:$0xff] %v1584
      %1617 = vst [vmem:[#allocation6 + $0xe0] sm:$0xff] %v1585
      %1618 = vst [vmem:[#allocation6 + $0xe8] sm:$0xff] %v1586
      %1619 = vst [vmem:[#allocation6 + $0xf0] sm:$0xff] %v1587
      %1620 = vst [vmem:[#allocation6 + $0xf8] sm:$0xff] %v1588
    $region49: #{gcn_model_forward.9} parent=1 // pred_fallthru
      _
    // Predicated region
    $region50: #{gcn_model_forward.9} parent=1 // pred_check
      _
    $region51: #{gcn_model_forward.9} parent=1 // pred_check_branch
      %1622 = sbr.rel (0) target = $region53
    $region52: #{gcn_model_forward.9} parent=1 // pred_region
      %s1624 = ssub.s32 4096, 4096
      %1625 = vsyncadd [#allocation7], %s1624
      %s1626 = sshll.u32 [#allocation6], 4
      %s1627 = int_to_ptr.vmem [resolvable:$true] %s1626
      %1632 = dma.vmem_to_hbm [thread:$0]  %s1627, 4096, %s11, [#allocation7], 128, 128, 8
    $region53: #{gcn_model_forward.9} parent=1 // pred_fallthru
      _
    // Predicated region
    $region54: #{gcn_model_forward.9} parent=1 // pred_check
      _
    $region55: #{gcn_model_forward.9} parent=1 // pred_check_branch
      %1634 = sbr.rel (0) target = $region57
    $region56: #{gcn_model_forward.9} parent=1 // pred_region
      %1635 = dma.done [#allocation7], 4096
    $region57: #{gcn_model_forward.9} parent=1 // pred_fallthru
      _
    %1636 = vsyncpa [#allocation7], 1

// kernel: gcn_model_forward.6
$region0: #{gcn_model_forward.6}
  #allocation0 [shape = 'u32[]', space=smem, size = 0x4, offset = 0x4, fixed_abs, tag = 'smem constant byte address 0x4 - core index']
  #allocation1 [shape = 'u32[144,128]{1,0:T(1,128)}', space=vmem, size = 0x12000, scoped, tag = 'internal scratch']
  #allocation2 [shape = 'f32[256,128]{1,0:T(8,128)}', space=vmem, size = 0x20000, scoped, tag = 'scratch operand']
  #allocation3 [shape = 's32[1]{0}', space=sflag, size = 0x4, scoped, tag = 'scoped memory for gcn_model_forward.6']
  #allocation4 [shape = 's32[1,1]{1,0:T(1,128)S(6)}', space=smem, size = 0x200, scoped, tag = 'prefetched SMEM operand 0']
  #allocation5 [shape = 's32[1]{0:T(128)S(6)}', space=smem, size = 0x200, scoped, tag = 'prefetched SMEM operand 1']
  %s0 = inlined_call_operand.<no memory space> [shape: s32[1,1], index: 0, kind: input, shape index: {}]
  %s1 = inlined_call_operand.<no memory space> [shape: s32[1], index: 1, kind: input, shape index: {}]
  %s2 = inlined_call_operand.hbm [shape: bf16[256,256], index: 2, kind: input, shape index: {}]
  %s3 = inlined_call_operand.hbm [shape: bf16[256,128], index: 3, kind: input, shape index: {}]
  %s4 = inlined_call_operand.hbm [shape: bf16[128,128], index: 4, kind: input, shape index: {}]
  %s5 = inlined_call_operand.vmem [shape: f32[1,128], index: 5, kind: input, shape index: {}]
  %s6 = inlined_call_operand.vmem [shape: f32[1,128], index: 6, kind: input, shape index: {}]
  %s7 = inlined_call_operand.vmem [shape: bf16[256,128], index: 7, kind: output, shape index: {}]
  %s8 = sld [smem:[#allocation0]]
  $region54: #{gcn_model_forward.6} parent=0
    _
  %s10 = ssub.s32 1, %s8
  %s11 = scalar_select 0, %s10, %s8
  %12 = sst [smem:[#allocation4]] %s0
  %13 = sst [smem:[#allocation5]] %s1
  $region1: #{gcn_model_forward.6} parent=0
    #allocation6 [shape = 'u8[131072]{0}', space=vmem, size = 0x20000, scoped, tag = 'input window, operand 2, single buffered']
    #allocation7 [shape = 's32[1]{0}', space=sflag, size = 0x4, scoped, tag = 'scoped memory for gcn_model_forward.6']
    #allocation8 [shape = 'u8[65536]{0}', space=vmem, size = 0x10000, scoped, tag = 'input window, operand 3, single buffered']
    #allocation9 [shape = 's32[1]{0}', space=sflag, size = 0x4, scoped, tag = 'scoped memory for gcn_model_forward.6']
    #allocation10 [shape = 'u8[32768]{0}', space=vmem, size = 0x8000, scoped, tag = 'input window, operand 4, single buffered']
    %14 = vsyncpa [#allocation7], 0
    %15 = vsyncpa [#allocation9], 0
    // Predicated region
    $region2: #{gcn_model_forward.6} parent=1 // pred_check
      _
    $region3: #{gcn_model_forward.6} parent=1 // pred_check_branch
      %17 = sbr.rel (0) target = $region5
    $region4: #{gcn_model_forward.6} parent=1 // pred_region
      %s18 = sadd.s32 0, 0
      %s19 = smul.u32 %s18, 128
      %s20 = sadd.s32 %s19, 0
      %s21 = sld [smem:[#allocation4 + %s20]]
      %s22 = smul.u32 2, %s21
      %s24 = ssub.s32 4096, 4096
      %25 = vsyncadd [#allocation7], %s24
      %s26 = smul.addr %s22, 64
      %s27 = scalar_lea.hbm %s2, %s26
      %s28 = sshll.u32 [#allocation6], 4
      %s29 = int_to_ptr.vmem [resolvable:$true] %s28
      %34 = dma.hbm_to_vmem [thread:$0]  %s27, 4096, %s29, [#allocation7], 128, 128, 8
    $region5: #{gcn_model_forward.6} parent=1 // pred_fallthru
      _
    // Predicated region
    $region6: #{gcn_model_forward.6} parent=1 // pred_check
      _
    $region7: #{gcn_model_forward.6} parent=1 // pred_check_branch
      %36 = sbr.rel (0) target = $region9
    $region8: #{gcn_model_forward.6} parent=1 // pred_region
      %s38 = ssub.s32 2048, 2048
      %39 = vsyncadd [#allocation9], %s38
      %s40 = sshll.u32 [#allocation8], 4
      %s41 = int_to_ptr.vmem [resolvable:$true] %s40
      %46 = dma.hbm_to_vmem [thread:$0]  %s3, 2048, %s41, [#allocation9], 64, 64, 4
    $region9: #{gcn_model_forward.6} parent=1 // pred_fallthru
      _
    // Predicated region
    $region10: #{gcn_model_forward.6} parent=1 // pred_check
      _
    $region11: #{gcn_model_forward.6} parent=1 // pred_check_branch
      %48 = sbr.rel (0) target = $region13
    $region12: #{gcn_model_forward.6} parent=1 // pred_region
      %s50 = ssub.s32 1024, 1024
      %51 = vsyncadd [#allocation9], %s50
      %s52 = sshll.u32 [#allocation10], 4
      %s53 = int_to_ptr.vmem [resolvable:$true] %s52
      %58 = dma.hbm_to_vmem [thread:$0]  %s4, 1024, %s53, [#allocation9], 64, 64, 4
    $region13: #{gcn_model_forward.6} parent=1 // pred_fallthru
      _
    // Predicated region
    $region14: #{gcn_model_forward.6} parent=1 // pred_check
      _
    $region15: #{gcn_model_forward.6} parent=1 // pred_check_branch
      %60 = sbr.rel (0) target = $region17
    $region16: #{gcn_model_forward.6} parent=1 // pred_region
      _
    $region17: #{gcn_model_forward.6} parent=1 // pred_fallthru
      _
    // Predicated region
    $region18: #{gcn_model_forward.6} parent=1 // pred_check
      _
    $region19: #{gcn_model_forward.6} parent=1 // pred_check_branch
      %62 = sbr.rel (0) target = $region21
    $region20: #{gcn_model_forward.6} parent=1 // pred_region
      _
    $region21: #{gcn_model_forward.6} parent=1 // pred_fallthru
      _
    // Predicated region
    $region22: #{gcn_model_forward.6} parent=1 // pred_check
      _
    $region23: #{gcn_model_forward.6} parent=1 // pred_check_branch
      %64 = sbr.rel (0) target = $region25
    $region24: #{gcn_model_forward.6} parent=1 // pred_region
      %65 = dma.done [#allocation7], 4096
    $region25: #{gcn_model_forward.6} parent=1 // pred_fallthru
      _
    // Predicated region
    $region26: #{gcn_model_forward.6} parent=1 // pred_check
      _
    $region27: #{gcn_model_forward.6} parent=1 // pred_check_branch
      %67 = sbr.rel (0) target = $region29
    $region28: #{gcn_model_forward.6} parent=1 // pred_region
      %68 = dma.done [#allocation9], 2048
    $region29: #{gcn_model_forward.6} parent=1 // pred_fallthru
      _
    // Predicated region
    $region30: #{gcn_model_forward.6} parent=1 // pred_check
      _
    $region31: #{gcn_model_forward.6} parent=1 // pred_check_branch
      %70 = sbr.rel (0) target = $region33
    $region32: #{gcn_model_forward.6} parent=1 // pred_region
      %71 = dma.done [#allocation9], 1024
    $region33: #{gcn_model_forward.6} parent=1 // pred_fallthru
      _
    %s72 = sadd.s32 0, 0
    %s73 = smul.u32 %s72, 128
    %s74 = sadd.s32 %s73, 0
    %s75 = sld [smem:[#allocation4 + %s74]]
    %s76 = smul.u32 2, %s75
    %p78 = scmp.eq.s32.totalorder 0, 0
    // Predicated region
    $region34: #{gcn_model_forward.6} parent=1 // pred_check
      %p79 = pneg %p78
    $region35: #{gcn_model_forward.6} parent=1 // pred_check_branch
      %81 = sbr.rel (%p79) target = $region37
    $region36: #{gcn_model_forward.6} parent=1 // pred_region
      %82 = vst [vmem:[#allocation2] sm:$0xff] 0.0
      %83 = vst [vmem:[#allocation2 + $0x8] sm:$0xff] 0.0
      %84 = vst [vmem:[#allocation2 + $0x10] sm:$0xff] 0.0
      %85 = vst [vmem:[#allocation2 + $0x18] sm:$0xff] 0.0
      %86 = vst [vmem:[#allocation2 + $0x20] sm:$0xff] 0.0
      %87 = vst [vmem:[#allocation2 + $0x28] sm:$0xff] 0.0
      %88 = vst [vmem:[#allocation2 + $0x30] sm:$0xff] 0.0
      %89 = vst [vmem:[#allocation2 + $0x38] sm:$0xff] 0.0
      %90 = vst [vmem:[#allocation2 + $0x40] sm:$0xff] 0.0
      %91 = vst [vmem:[#allocation2 + $0x48] sm:$0xff] 0.0
      %92 = vst [vmem:[#allocation2 + $0x50] sm:$0xff] 0.0
      %93 = vst [vmem:[#allocation2 + $0x58] sm:$0xff] 0.0
      %94 = vst [vmem:[#allocation2 + $0x60] sm:$0xff] 0.0
      %95 = vst [vmem:[#allocation2 + $0x68] sm:$0xff] 0.0
      %96 = vst [vmem:[#allocation2 + $0x70] sm:$0xff] 0.0
      %97 = vst [vmem:[#allocation2 + $0x78] sm:$0xff] 0.0
      %98 = vst [vmem:[#allocation2 + $0x80] sm:$0xff] 0.0
      %99 = vst [vmem:[#allocation2 + $0x88] sm:$0xff] 0.0
      %100 = vst [vmem:[#allocation2 + $0x90] sm:$0xff] 0.0
      %101 = vst [vmem:[#allocation2 + $0x98] sm:$0xff] 0.0
      %102 = vst [vmem:[#allocation2 + $0xa0] sm:$0xff] 0.0
      %103 = vst [vmem:[#allocation2 + $0xa8] sm:$0xff] 0.0
      %104 = vst [vmem:[#allocation2 + $0xb0] sm:$0xff] 0.0
      %105 = vst [vmem:[#allocation2 + $0xb8] sm:$0xff] 0.0
      %106 = vst [vmem:[#allocation2 + $0xc0] sm:$0xff] 0.0
      %107 = vst [vmem:[#allocation2 + $0xc8] sm:$0xff] 0.0
      %108 = vst [vmem:[#allocation2 + $0xd0] sm:$0xff] 0.0
      %109 = vst [vmem:[#allocation2 + $0xd8] sm:$0xff] 0.0
      %110 = vst [vmem:[#allocation2 + $0xe0] sm:$0xff] 0.0
      %111 = vst [vmem:[#allocation2 + $0xe8] sm:$0xff] 0.0
      %112 = vst [vmem:[#allocation2 + $0xf0] sm:$0xff] 0.0
      %113 = vst [vmem:[#allocation2 + $0xf8] sm:$0xff] 0.0
    $region37: #{gcn_model_forward.6} parent=1 // pred_fallthru
      _
    %s114 = sld [smem:[#allocation5]]
    %p115 = scmp.lt.s32.totalorder 0, %s114
    // Predicated region
    $region38: #{gcn_model_forward.6} parent=1 // pred_check
      %p116 = pneg %p115
    $region39: #{gcn_model_forward.6} parent=1 // pred_check_branch
      %118 = sbr.rel (%p116) target = $region41
    $region40: #{gcn_model_forward.6} parent=1 // pred_region
      %s119 = sadd.s32 0, 0
      %s120 = smul.u32 %s119, 128
      %s121 = sadd.s32 %s120, 0
      %s122 = sld [smem:[#allocation4 + %s121]]
      %s123 = smul.u32 %s122, 256
      %s124 = sshra.s32 %s123, 3
      %s125 = sand.u32 %s123, 7
      %s126 = smul.addr %s124, 4
      %s127 = scalar_lea.vmem [#allocation8], %s126
      %v128 = vld [vmem:[%s127] sm:$0xf]
      %v129 = vld [vmem:[%s127 + $0x4] sm:$0xf]
      %v130 = vld [vmem:[%s127 + $0x8] sm:$0xf]
      %v131 = vld [vmem:[%s127 + $0xc] sm:$0xf]
      %v132 = vld [vmem:[%s127 + $0x10] sm:$0xf]
      %v133 = vld [vmem:[%s127 + $0x14] sm:$0xf]
      %v134 = vld [vmem:[%s127 + $0x18] sm:$0xf]
      %v135 = vld [vmem:[%s127 + $0x1c] sm:$0xf]
      %v136 = vld [vmem:[%s127 + $0x20] sm:$0xf]
      %v137 = vld [vmem:[%s127 + $0x24] sm:$0xf]
      %v138 = vld [vmem:[%s127 + $0x28] sm:$0xf]
      %v139 = vld [vmem:[%s127 + $0x2c] sm:$0xf]
      %v140 = vld [vmem:[%s127 + $0x30] sm:$0xf]
      %v141 = vld [vmem:[%s127 + $0x34] sm:$0xf]
      %v142 = vld [vmem:[%s127 + $0x38] sm:$0xf]
      %v143 = vld [vmem:[%s127 + $0x3c] sm:$0xf]
      %v144 = vld [vmem:[%s127 + $0x40] sm:$0xf]
      %v145 = vld [vmem:[%s127 + $0x44] sm:$0xf]
      %v146 = vld [vmem:[%s127 + $0x48] sm:$0xf]
      %v147 = vld [vmem:[%s127 + $0x4c] sm:$0xf]
      %v148 = vld [vmem:[%s127 + $0x50] sm:$0xf]
      %v149 = vld [vmem:[%s127 + $0x54] sm:$0xf]
      %v150 = vld [vmem:[%s127 + $0x58] sm:$0xf]
      %v151 = vld [vmem:[%s127 + $0x5c] sm:$0xf]
      %v152 = vld [vmem:[%s127 + $0x60] sm:$0xf]
      %v153 = vld [vmem:[%s127 + $0x64] sm:$0xf]
      %v154 = vld [vmem:[%s127 + $0x68] sm:$0xf]
      %v155 = vld [vmem:[%s127 + $0x6c] sm:$0xf]
      %v156 = vld [vmem:[%s127 + $0x70] sm:$0xf]
      %v157 = vld [vmem:[%s127 + $0x74] sm:$0xf]
      %v158 = vld [vmem:[%s127 + $0x78] sm:$0xf]
      %v159 = vld [vmem:[%s127 + $0x7c] sm:$0xf]
      %v160 = vld [vmem:[#allocation10] sm:$0xf]
      %v161 = vld [vmem:[#allocation10 + $0x4] sm:$0xf]
      %v162 = vld [vmem:[#allocation10 + $0x8] sm:$0xf]
      %v163 = vld [vmem:[#allocation10 + $0xc] sm:$0xf]
      %v164 = vld [vmem:[#allocation10 + $0x10] sm:$0xf]
      %v165 = vld [vmem:[#allocation10 + $0x14] sm:$0xf]
      %v166 = vld [vmem:[#allocation10 + $0x18] sm:$0xf]
      %v167 = vld [vmem:[#allocation10 + $0x1c] sm:$0xf]
      %v168 = vld [vmem:[#allocation10 + $0x20] sm:$0xf]
      %v169 = vld [vmem:[#allocation10 + $0x24] sm:$0xf]
      %v170 = vld [vmem:[#allocation10 + $0x28] sm:$0xf]
      %v171 = vld [vmem:[#allocation10 + $0x2c] sm:$0xf]
      %v172 = vld [vmem:[#allocation10 + $0x30] sm:$0xf]
      %v173 = vld [vmem:[#allocation10 + $0x34] sm:$0xf]
      %v174 = vld [vmem:[#allocation10 + $0x38] sm:$0xf]
      %v175 = vld [vmem:[#allocation10 + $0x3c] sm:$0xf]
      %v208 = vunpack.c.l.b16 %v128
      %v209 = vunpack.c.l.b16 %v129
      %v210 = vunpack.c.l.b16 %v130
      %v211 = vunpack.c.l.b16 %v131
      %v212 = vunpack.c.l.b16 %v132
      %v213 = vunpack.c.l.b16 %v133
      %v214 = vunpack.c.l.b16 %v134
      %v215 = vunpack.c.l.b16 %v135
      %v216 = vunpack.c.l.b16 %v136
      %v217 = vunpack.c.l.b16 %v137
      %v218 = vunpack.c.l.b16 %v138
      %v219 = vunpack.c.l.b16 %v139
      %v220 = vunpack.c.l.b16 %v140
      %v221 = vunpack.c.l.b16 %v141
      %v222 = vunpack.c.l.b16 %v142
      %v223 = vunpack.c.l.b16 %v143
      %v224 = vunpack.c.l.b16 %v144
      %v225 = vunpack.c.l.b16 %v145
      %v226 = vunpack.c.l.b16 %v146
      %v227 = vunpack.c.l.b16 %v147
      %v228 = vunpack.c.l.b16 %v148
      %v229 = vunpack.c.l.b16 %v149
      %v230 = vunpack.c.l.b16 %v150
      %v231 = vunpack.c.l.b16 %v151
      %v232 = vunpack.c.l.b16 %v152
      %v233 = vunpack.c.l.b16 %v153
      %v234 = vunpack.c.l.b16 %v154
      %v235 = vunpack.c.l.b16 %v155
      %v236 = vunpack.c.l.b16 %v156
      %v237 = vunpack.c.l.b16 %v157
      %v238 = vunpack.c.l.b16 %v158
      %v239 = vunpack.c.l.b16 %v159
      %v240 = vpack.c.b16 %v209, %v208
      %v241 = vpack.c.b16 %v211, %v210
      %v242 = vpack.c.b16 %v213, %v212
      %v243 = vpack.c.b16 %v215, %v214
      %v244 = vpack.c.b16 %v217, %v216
      %v245 = vpack.c.b16 %v219, %v218
      %v246 = vpack.c.b16 %v221, %v220
      %v247 = vpack.c.b16 %v223, %v222
      %v248 = vpack.c.b16 %v225, %v224
      %v249 = vpack.c.b16 %v227, %v226
      %v250 = vpack.c.b16 %v229, %v228
      %v251 = vpack.c.b16 %v231, %v230
      %v252 = vpack.c.b16 %v233, %v232
      %v253 = vpack.c.b16 %v235, %v234
      %v254 = vpack.c.b16 %v237, %v236
      %v255 = vpack.c.b16 %v239, %v238
      %v288 = vunpack.c.l.b16 %v160
      %v289 = vunpack.c.l.b16 %v161
      %v290 = vunpack.c.l.b16 %v162
      %v291 = vunpack.c.l.b16 %v163
      %v292 = vunpack.c.l.b16 %v164
      %v293 = vunpack.c.l.b16 %v165
      %v294 = vunpack.c.l.b16 %v166
      %v295 = vunpack.c.l.b16 %v167
      %v296 = vunpack.c.l.b16 %v168
      %v297 = vunpack.c.l.b16 %v169
      %v298 = vunpack.c.l.b16 %v170
      %v299 = vunpack.c.l.b16 %v171
      %v300 = vunpack.c.l.b16 %v172
      %v301 = vunpack.c.l.b16 %v173
      %v302 = vunpack.c.l.b16 %v174
      %v303 = vunpack.c.l.b16 %v175
      %v304 = vpack.c.b16 %v289, %v288
      %v305 = vpack.c.b16 %v291, %v290
      %v306 = vpack.c.b16 %v293, %v292
      %v307 = vpack.c.b16 %v295, %v294
      %v308 = vpack.c.b16 %v297, %v296
      %v309 = vpack.c.b16 %v299, %v298
      %v310 = vpack.c.b16 %v301, %v300
      %v311 = vpack.c.b16 %v303, %v302
      %320 = vmatprep.subr.bf16.mxu0 0
      %321 = vmatpush1.bf16.msra.mxu0 %v304
      %322 = vmatprep.subr.bf16.mxu0 0
      %323 = vmatpush1.bf16.msra.mxu0 %v305
      %324 = vmatprep.subr.bf16.mxu0 0
      %325 = vmatpush1.bf16.msra.mxu0 %v306
      %326 = vmatprep.subr.bf16.mxu0 0
      %327 = vmatpush1.bf16.msra.mxu0 %v307
      %328 = vmatprep.subr.bf16.mxu0 0
      %329 = vmatpush1.bf16.msra.mxu0 %v308
      %330 = vmatprep.subr.bf16.mxu0 0
      %331 = vmatpush1.bf16.msra.mxu0 %v309
      %332 = vmatprep.subr.bf16.mxu0 0
      %333 = vmatpush1.bf16.msra.mxu0 %v310
      %334 = vmatprep.subr.bf16.mxu0 0
      %335 = vmatpush1.bf16.msra.mxu0 %v311
      %336 = vmatprep.subr.bf16.mxu0 0
      %337 = vmatpush1.bf16.msra.mxu0 0
      %338 = vmatprep.subr.bf16.mxu0 0
      %339 = vmatpush1.bf16.msra.mxu0 0
      %340 = vmatprep.subr.bf16.mxu0 0
      %341 = vmatpush1.bf16.msra.mxu0 0
      %342 = vmatprep.subr.bf16.mxu0 0
      %343 = vmatpush1.bf16.msra.mxu0 0
      %344 = vmatprep.subr.bf16.mxu0 0
      %345 = vmatpush1.bf16.msra.mxu0 0
      %346 = vmatprep.subr.bf16.mxu0 0
      %347 = vmatpush1.bf16.msra.mxu0 0
      %348 = vmatprep.subr.bf16.mxu0 0
      %349 = vmatpush1.bf16.msra.mxu0 0
      %350 = vmatprep.subr.bf16.mxu0 0
      %351 = vmatpush1.bf16.msra.mxu0 0
      %352 = vmatprep.mubr.bf16.mxu0 0
      %353 = vmatmul.mubr.bf16.gmra.mrb[0].mxu0 %v240
      %v354 = vpop.f32.mrb[0].mxu0
      %v355 = vadd.f32 0.0, %v354
      %v356 = vpop.f32.mrb[0].mxu0
      %v357 = vpop.f32.mrb[0].mxu0
      %v358 = vadd.f32 0.0, %v357
      %v359 = vpop.f32.mrb[0].mxu0
      %360 = vmatprep.mubr.bf16.mxu0 0
      %361 = vmatmul.mubr.bf16.gmra.mrb[0].mxu0 %v241
      %v362 = vpop.f32.mrb[0].mxu0
      %v363 = vadd.f32 0.0, %v362
      %v364 = vpop.f32.mrb[0].mxu0
      %v365 = vpop.f32.mrb[0].mxu0
      %v366 = vadd.f32 0.0, %v365
      %v367 = vpop.f32.mrb[0].mxu0
      %368 = vmatprep.mubr.bf16.mxu0 0
      %369 = vmatmul.mubr.bf16.gmra.mrb[0].mxu0 %v242
      %v370 = vpop.f32.mrb[0].mxu0
      %v371 = vadd.f32 0.0, %v370
      %v372 = vpop.f32.mrb[0].mxu0
      %v373 = vpop.f32.mrb[0].mxu0
      %v374 = vadd.f32 0.0, %v373
      %v375 = vpop.f32.mrb[0].mxu0
      %376 = vmatprep.mubr.bf16.mxu0 0
      %377 = vmatmul.mubr.bf16.gmra.mrb[0].mxu0 %v243
      %v378 = vpop.f32.mrb[0].mxu0
      %v379 = vadd.f32 0.0, %v378
      %v380 = vpop.f32.mrb[0].mxu0
      %v381 = vpop.f32.mrb[0].mxu0
      %v382 = vadd.f32 0.0, %v381
      %v383 = vpop.f32.mrb[0].mxu0
      %384 = vmatprep.mubr.bf16.mxu0 0
      %385 = vmatmul.mubr.bf16.gmra.mrb[0].mxu0 %v244
      %v386 = vpop.f32.mrb[0].mxu0
      %v387 = vadd.f32 0.0, %v386
      %v388 = vpop.f32.mrb[0].mxu0
      %v389 = vpop.f32.mrb[0].mxu0
      %v390 = vadd.f32 0.0, %v389
      %v391 = vpop.f32.mrb[0].mxu0
      %392 = vmatprep.mubr.bf16.mxu0 0
      %393 = vmatmul.mubr.bf16.gmra.mrb[0].mxu0 %v245
      %v394 = vpop.f32.mrb[0].mxu0
      %v395 = vadd.f32 0.0, %v394
      %v396 = vpop.f32.mrb[0].mxu0
      %v397 = vpop.f32.mrb[0].mxu0
      %v398 = vadd.f32 0.0, %v397
      %v399 = vpop.f32.mrb[0].mxu0
      %400 = vmatprep.mubr.bf16.mxu0 0
      %401 = vmatmul.mubr.bf16.gmra.mrb[0].mxu0 %v246
      %v402 = vpop.f32.mrb[0].mxu0
      %v403 = vadd.f32 0.0, %v402
      %v404 = vpop.f32.mrb[0].mxu0
      %v405 = vpop.f32.mrb[0].mxu0
      %v406 = vadd.f32 0.0, %v405
      %v407 = vpop.f32.mrb[0].mxu0
      %408 = vmatprep.mubr.bf16.mxu0 0
      %409 = vmatmul.mubr.bf16.gmra.mrb[0].mxu0 %v247
      %v410 = vpop.f32.mrb[0].mxu0
      %v411 = vadd.f32 0.0, %v410
      %v412 = vpop.f32.mrb[0].mxu0
      %v413 = vpop.f32.mrb[0].mxu0
      %v414 = vadd.f32 0.0, %v413
      %v415 = vpop.f32.mrb[0].mxu0
      %416 = vmatprep.mubr.bf16.mxu0 0
      %417 = vmatmul.mubr.bf16.gmra.mrb[0].mxu0 %v248
      %v418 = vpop.f32.mrb[0].mxu0
      %v419 = vadd.f32 0.0, %v418
      %v420 = vpop.f32.mrb[0].mxu0
      %v421 = vpop.f32.mrb[0].mxu0
      %v422 = vadd.f32 0.0, %v421
      %v423 = vpop.f32.mrb[0].mxu0
      %424 = vmatprep.mubr.bf16.mxu0 0
      %425 = vmatmul.mubr.bf16.gmra.mrb[0].mxu0 %v249
      %v426 = vpop.f32.mrb[0].mxu0
      %v427 = vadd.f32 0.0, %v426
      %v428 = vpop.f32.mrb[0].mxu0
      %v429 = vpop.f32.mrb[0].mxu0
      %v430 = vadd.f32 0.0, %v429
      %v431 = vpop.f32.mrb[0].mxu0
      %432 = vmatprep.mubr.bf16.mxu0 0
      %433 = vmatmul.mubr.bf16.gmra.mrb[0].mxu0 %v250
      %v434 = vpop.f32.mrb[0].mxu0
      %v435 = vadd.f32 0.0, %v434
      %v436 = vpop.f32.mrb[0].mxu0
      %v437 = vpop.f32.mrb[0].mxu0
      %v438 = vadd.f32 0.0, %v437
      %v439 = vpop.f32.mrb[0].mxu0
      %440 = vmatprep.mubr.bf16.mxu0 0
      %441 = vmatmul.mubr.bf16.gmra.mrb[0].mxu0 %v251
      %v442 = vpop.f32.mrb[0].mxu0
      %v443 = vadd.f32 0.0, %v442
      %v444 = vpop.f32.mrb[0].mxu0
      %v445 = vpop.f32.mrb[0].mxu0
      %v446 = vadd.f32 0.0, %v445
      %v447 = vpop.f32.mrb[0].mxu0
      %448 = vmatprep.mubr.bf16.mxu0 0
      %449 = vmatmul.mubr.bf16.gmra.mrb[0].mxu0 %v252
      %v450 = vpop.f32.mrb[0].mxu0
      %v451 = vadd.f32 0.0, %v450
      %v452 = vpop.f32.mrb[0].mxu0
      %v453 = vpop.f32.mrb[0].mxu0
      %v454 = vadd.f32 0.0, %v453
      %v455 = vpop.f32.mrb[0].mxu0
      %456 = vmatprep.mubr.bf16.mxu0 0
      %457 = vmatmul.mubr.bf16.gmra.mrb[0].mxu0 %v253
      %v458 = vpop.f32.mrb[0].mxu0
      %v459 = vadd.f32 0.0, %v458
      %v460 = vpop.f32.mrb[0].mxu0
      %v461 = vpop.f32.mrb[0].mxu0
      %v462 = vadd.f32 0.0, %v461
      %v463 = vpop.f32.mrb[0].mxu0
      %464 = vmatprep.mubr.bf16.mxu0 0
      %465 = vmatmul.mubr.bf16.gmra.mrb[0].mxu0 %v254
      %v466 = vpop.f32.mrb[0].mxu0
      %v467 = vadd.f32 0.0, %v466
      %v468 = vpop.f32.mrb[0].mxu0
      %v469 = vpop.f32.mrb[0].mxu0
      %v470 = vadd.f32 0.0, %v469
      %v471 = vpop.f32.mrb[0].mxu0
      %472 = vmatprep.mubr.bf16.mxu0 0
      %473 = vmatmul.mubr.bf16.gmra.mrb[0].mxu0 %v255
      %v474 = vpop.f32.mrb[0].mxu0
      %v475 = vadd.f32 0.0, %v474
      %v476 = vpop.f32.mrb[0].mxu0
      %v477 = vpop.f32.mrb[0].mxu0
      %v478 = vadd.f32 0.0, %v477
      %v479 = vpop.f32.mrb[0].mxu0
      %480 = vdwg.mxu0
      %v481 = vld [vmem:[#allocation2] sm:$0xff]
      %v482 = vld [vmem:[#allocation2 + $0x8] sm:$0xff]
      %v483 = vld [vmem:[#allocation2 + $0x10] sm:$0xff]
      %v484 = vld [vmem:[#allocation2 + $0x18] sm:$0xff]
      %v485 = vld [vmem:[#allocation2 + $0x20] sm:$0xff]
      %v486 = vld [vmem:[#allocation2 + $0x28] sm:$0xff]
      %v487 = vld [vmem:[#allocation2 + $0x30] sm:$0xff]
      %v488 = vld [vmem:[#allocation2 + $0x38] sm:$0xff]
      %v489 = vld [vmem:[#allocation2 + $0x40] sm:$0xff]
      %v490 = vld [vmem:[#allocation2 + $0x48] sm:$0xff]
      %v491 = vld [vmem:[#allocation2 + $0x50] sm:$0xff]
      %v492 = vld [vmem:[#allocation2 + $0x58] sm:$0xff]
      %v493 = vld [vmem:[#allocation2 + $0x60] sm:$0xff]
      %v494 = vld [vmem:[#allocation2 + $0x68] sm:$0xff]
      %v495 = vld [vmem:[#allocation2 + $0x70] sm:$0xff]
      %v496 = vld [vmem:[#allocation2 + $0x78] sm:$0xff]
      %v497 = vld [vmem:[#allocation2 + $0x80] sm:$0xff]
      %v498 = vld [vmem:[#allocation2 + $0x88] sm:$0xff]
      %v499 = vld [vmem:[#allocation2 + $0x90] sm:$0xff]
      %v500 = vld [vmem:[#allocation2 + $0x98] sm:$0xff]
      %v501 = vld [vmem:[#allocation2 + $0xa0] sm:$0xff]
      %v502 = vld [vmem:[#allocation2 + $0xa8] sm:$0xff]
      %v503 = vld [vmem:[#allocation2 + $0xb0] sm:$0xff]
      %v504 = vld [vmem:[#allocation2 + $0xb8] sm:$0xff]
      %v505 = vld [vmem:[#allocation2 + $0xc0] sm:$0xff]
      %v506 = vld [vmem:[#allocation2 + $0xc8] sm:$0xff]
      %v507 = vld [vmem:[#allocation2 + $0xd0] sm:$0xff]
      %v508 = vld [vmem:[#allocation2 + $0xd8] sm:$0xff]
      %v509 = vld [vmem:[#allocation2 + $0xe0] sm:$0xff]
      %v510 = vld [vmem:[#allocation2 + $0xe8] sm:$0xff]
      %v511 = vld [vmem:[#allocation2 + $0xf0] sm:$0xff]
      %v512 = vld [vmem:[#allocation2 + $0xf8] sm:$0xff]
      %v513 = vld [vmem:[#allocation6] sm:$0xff]
      %v514 = vld [vmem:[#allocation6 + $0x8] sm:$0xff]
      %v515 = vld [vmem:[#allocation6 + $0x10] sm:$0xff]
      %v516 = vld [vmem:[#allocation6 + $0x18] sm:$0xff]
      %v517 = vld [vmem:[#allocation6 + $0x20] sm:$0xff]
      %v518 = vld [vmem:[#allocation6 + $0x28] sm:$0xff]
      %v519 = vld [vmem:[#allocation6 + $0x30] sm:$0xff]
      %v520 = vld [vmem:[#allocation6 + $0x38] sm:$0xff]
      %v521 = vld [vmem:[#allocation6 + $0x40] sm:$0xff]
      %v522 = vld [vmem:[#allocation6 + $0x48] sm:$0xff]
      %v523 = vld [vmem:[#allocation6 + $0x50] sm:$0xff]
      %v524 = vld [vmem:[#allocation6 + $0x58] sm:$0xff]
      %v525 = vld [vmem:[#allocation6 + $0x60] sm:$0xff]
      %v526 = vld [vmem:[#allocation6 + $0x68] sm:$0xff]
      %v527 = vld [vmem:[#allocation6 + $0x70] sm:$0xff]
      %v528 = vld [vmem:[#allocation6 + $0x78] sm:$0xff]
      %v529 = vld [vmem:[#allocation6 + $0x80] sm:$0xff]
      %v530 = vld [vmem:[#allocation6 + $0x88] sm:$0xff]
      %v531 = vld [vmem:[#allocation6 + $0x90] sm:$0xff]
      %v532 = vld [vmem:[#allocation6 + $0x98] sm:$0xff]
      %v533 = vld [vmem:[#allocation6 + $0xa0] sm:$0xff]
      %v534 = vld [vmem:[#allocation6 + $0xa8] sm:$0xff]
      %v535 = vld [vmem:[#allocation6 + $0xb0] sm:$0xff]
      %v536 = vld [vmem:[#allocation6 + $0xb8] sm:$0xff]
      %v537 = vld [vmem:[#allocation6 + $0xc0] sm:$0xff]
      %v538 = vld [vmem:[#allocation6 + $0xc8] sm:$0xff]
      %v539 = vld [vmem:[#allocation6 + $0xd0] sm:$0xff]
      %v540 = vld [vmem:[#allocation6 + $0xd8] sm:$0xff]
      %v541 = vld [vmem:[#allocation6 + $0xe0] sm:$0xff]
      %v542 = vld [vmem:[#allocation6 + $0xe8] sm:$0xff]
      %v543 = vld [vmem:[#allocation6 + $0xf0] sm:$0xff]
      %v544 = vld [vmem:[#allocation6 + $0xf8] sm:$0xff]
      %v545 = vpack.c.bf16 %v358, %v355
      %v546 = vpack.c.bf16 %v366, %v363
      %v547 = vpack.c.bf16 %v374, %v371
      %v548 = vpack.c.bf16 %v382, %v379
      %v549 = vpack.c.bf16 %v390, %v387
      %v550 = vpack.c.bf16 %v398, %v395
      %v551 = vpack.c.bf16 %v406, %v403
      %v552 = vpack.c.bf16 %v414, %v411
      %v553 = vpack.c.bf16 %v422, %v419
      %v554 = vpack.c.bf16 %v430, %v427
      %v555 = vpack.c.bf16 %v438, %v435
      %v556 = vpack.c.bf16 %v446, %v443
      %v557 = vpack.c.bf16 %v454, %v451
      %v558 = vpack.c.bf16 %v462, %v459
      %v559 = vpack.c.bf16 %v470, %v467
      %v560 = vpack.c.bf16 %v478, %v475
      %v593 = vunpack.c.l.b16 %v513
      %v594 = vunpack.c.h.b16 %v513
      %v595 = vunpack.c.l.b16 %v514
      %v596 = vunpack.c.h.b16 %v514
      %v597 = vunpack.c.l.b16 %v515
      %v598 = vunpack.c.h.b16 %v515
      %v599 = vunpack.c.l.b16 %v516
      %v600 = vunpack.c.h.b16 %v516
      %v601 = vunpack.c.l.b16 %v517
      %v602 = vunpack.c.h.b16 %v517
      %v603 = vunpack.c.l.b16 %v518
      %v604 = vunpack.c.h.b16 %v518
      %v605 = vunpack.c.l.b16 %v519
      %v606 = vunpack.c.h.b16 %v519
      %v607 = vunpack.c.l.b16 %v520
      %v608 = vunpack.c.h.b16 %v520
      %v609 = vunpack.c.l.b16 %v521
      %v610 = vunpack.c.h.b16 %v521
      %v611 = vunpack.c.l.b16 %v522
      %v612 = vunpack.c.h.b16 %v522
      %v613 = vunpack.c.l.b16 %v523
      %v614 = vunpack.c.h.b16 %v523
      %v615 = vunpack.c.l.b16 %v524
      %v616 = vunpack.c.h.b16 %v524
      %v617 = vunpack.c.l.b16 %v525
      %v618 = vunpack.c.h.b16 %v525
      %v619 = vunpack.c.l.b16 %v526
      %v620 = vunpack.c.h.b16 %v526
      %v621 = vunpack.c.l.b16 %v527
      %v622 = vunpack.c.h.b16 %v527
      %v623 = vunpack.c.l.b16 %v528
      %v624 = vunpack.c.h.b16 %v528
      %v625 = vunpack.c.l.b16 %v529
      %v626 = vunpack.c.h.b16 %v529
      %v627 = vunpack.c.l.b16 %v530
      %v628 = vunpack.c.h.b16 %v530
      %v629 = vunpack.c.l.b16 %v531
      %v630 = vunpack.c.h.b16 %v531
      %v631 = vunpack.c.l.b16 %v532
      %v632 = vunpack.c.h.b16 %v532
      %v633 = vunpack.c.l.b16 %v533
      %v634 = vunpack.c.h.b16 %v533
      %v635 = vunpack.c.l.b16 %v534
      %v636 = vunpack.c.h.b16 %v534
      %v637 = vunpack.c.l.b16 %v535
      %v638 = vunpack.c.h.b16 %v535
      %v639 = vunpack.c.l.b16 %v536
      %v640 = vunpack.c.h.b16 %v536
      %v641 = vunpack.c.l.b16 %v537
      %v642 = vunpack.c.h.b16 %v537
      %v643 = vunpack.c.l.b16 %v538
      %v644 = vunpack.c.h.b16 %v538
      %v645 = vunpack.c.l.b16 %v539
      %v646 = vunpack.c.h.b16 %v539
      %v647 = vunpack.c.l.b16 %v540
      %v648 = vunpack.c.h.b16 %v540
      %v649 = vunpack.c.l.b16 %v541
      %v650 = vunpack.c.h.b16 %v541
      %v651 = vunpack.c.l.b16 %v542
      %v652 = vunpack.c.h.b16 %v542
      %v653 = vunpack.c.l.b16 %v543
      %v654 = vunpack.c.h.b16 %v543
      %v655 = vunpack.c.l.b16 %v544
      %v656 = vunpack.c.h.b16 %v544
      %v657 = vpack.c.b16 %v595, %v593
      %v658 = vpack.c.b16 %v596, %v594
      %v659 = vpack.c.b16 %v599, %v597
      %v660 = vpack.c.b16 %v600, %v598
      %v661 = vpack.c.b16 %v603, %v601
      %v662 = vpack.c.b16 %v604, %v602
      %v663 = vpack.c.b16 %v607, %v605
      %v664 = vpack.c.b16 %v608, %v606
      %v665 = vpack.c.b16 %v611, %v609
      %v666 = vpack.c.b16 %v612, %v610
      %v667 = vpack.c.b16 %v615, %v613
      %v668 = vpack.c.b16 %v616, %v614
      %v669 = vpack.c.b16 %v619, %v617
      %v670 = vpack.c.b16 %v620, %v618
      %v671 = vpack.c.b16 %v623, %v621
      %v672 = vpack.c.b16 %v624, %v622
      %v673 = vpack.c.b16 %v627, %v625
      %v674 = vpack.c.b16 %v628, %v626
      %v675 = vpack.c.b16 %v631, %v629
      %v676 = vpack.c.b16 %v632, %v630
      %v677 = vpack.c.b16 %v635, %v633
      %v678 = vpack.c.b16 %v636, %v634
      %v679 = vpack.c.b16 %v639, %v637
      %v680 = vpack.c.b16 %v640, %v638
      %v681 = vpack.c.b16 %v643, %v641
      %v682 = vpack.c.b16 %v644, %v642
      %v683 = vpack.c.b16 %v647, %v645
      %v684 = vpack.c.b16 %v648, %v646
      %v685 = vpack.c.b16 %v651, %v649
      %v686 = vpack.c.b16 %v652, %v650
      %v687 = vpack.c.b16 %v655, %v653
      %v688 = vpack.c.b16 %v656, %v654
      %721 = vmatprep.subr.bf16.mxu0 0
      %722 = vmatpush1.bf16.msra.mxu0 %v545
      %723 = vmatprep.subr.bf16.mxu0 0
      %724 = vmatpush1.bf16.msra.mxu0 %v546
      %725 = vmatprep.subr.bf16.mxu0 0
      %726 = vmatpush1.bf16.msra.mxu0 %v547
      %727 = vmatprep.subr.bf16.mxu0 0
      %728 = vmatpush1.bf16.msra.mxu0 %v548
      %729 = vmatprep.subr.bf16.mxu0 0
      %730 = vmatpush1.bf16.msra.mxu0 %v549
      %731 = vmatprep.subr.bf16.mxu0 0
      %732 = vmatpush1.bf16.msra.mxu0 %v550
      %733 = vmatprep.subr.bf16.mxu0 0
      %734 = vmatpush1.bf16.msra.mxu0 %v551
      %735 = vmatprep.subr.bf16.mxu0 0
      %736 = vmatpush1.bf16.msra.mxu0 %v552
      %737 = vmatprep.subr.bf16.mxu0 0
      %738 = vmatpush1.bf16.msra.mxu0 %v553
      %739 = vmatprep.subr.bf16.mxu0 0
      %740 = vmatpush1.bf16.msra.mxu0 %v554
      %741 = vmatprep.subr.bf16.mxu0 0
      %742 = vmatpush1.bf16.msra.mxu0 %v555
      %743 = vmatprep.subr.bf16.mxu0 0
      %744 = vmatpush1.bf16.msra.mxu0 %v556
      %745 = vmatprep.subr.bf16.mxu0 0
      %746 = vmatpush1.bf16.msra.mxu0 %v557
      %747 = vmatprep.subr.bf16.mxu0 0
      %748 = vmatpush1.bf16.msra.mxu0 %v558
      %749 = vmatprep.subr.bf16.mxu0 0
      %750 = vmatpush1.bf16.msra.mxu0 %v559
      %751 = vmatprep.subr.bf16.mxu0 0
      %752 = vmatpush1.bf16.msra.mxu0 %v560
      %753 = vmatprep.mubr.bf16.mxu0 %v658
      %754 = vmatmul.mubr.bf16.gmra.mrb[0].mxu0 %v657
      %v755 = vpop.f32.mrb[0].mxu0
      %v756 = vadd.f32 0.0, %v755
      %v757 = vpop.f32.mrb[0].mxu0
      %v758 = vpop.f32.mrb[0].mxu0
      %v759 = vadd.f32 0.0, %v758
      %v760 = vpop.f32.mrb[0].mxu0
      %761 = vmatprep.mubr.bf16.mxu0 %v660
      %762 = vmatmul.mubr.bf16.gmra.mrb[0].mxu0 %v659
      %v763 = vpop.f32.mrb[0].mxu0
      %v764 = vadd.f32 0.0, %v763
      %v765 = vpop.f32.mrb[0].mxu0
      %v766 = vpop.f32.mrb[0].mxu0
      %v767 = vadd.f32 0.0, %v766
      %v768 = vpop.f32.mrb[0].mxu0
      %769 = vmatprep.mubr.bf16.mxu0 %v662
      %770 = vmatmul.mubr.bf16.gmra.mrb[0].mxu0 %v661
      %v771 = vpop.f32.mrb[0].mxu0
      %v772 = vadd.f32 0.0, %v771
      %v773 = vpop.f32.mrb[0].mxu0
      %v774 = vpop.f32.mrb[0].mxu0
      %v775 = vadd.f32 0.0, %v774
      %v776 = vpop.f32.mrb[0].mxu0
      %777 = vmatprep.mubr.bf16.mxu0 %v664
      %778 = vmatmul.mubr.bf16.gmra.mrb[0].mxu0 %v663
      %v779 = vpop.f32.mrb[0].mxu0
      %v780 = vadd.f32 0.0, %v779
      %v781 = vpop.f32.mrb[0].mxu0
      %v782 = vpop.f32.mrb[0].mxu0
      %v783 = vadd.f32 0.0, %v782
      %v784 = vpop.f32.mrb[0].mxu0
      %785 = vmatprep.mubr.bf16.mxu0 %v666
      %786 = vmatmul.mubr.bf16.gmra.mrb[0].mxu0 %v665
      %v787 = vpop.f32.mrb[0].mxu0
      %v788 = vadd.f32 0.0, %v787
      %v789 = vpop.f32.mrb[0].mxu0
      %v790 = vpop.f32.mrb[0].mxu0
      %v791 = vadd.f32 0.0, %v790
      %v792 = vpop.f32.mrb[0].mxu0
      %793 = vmatprep.mubr.bf16.mxu0 %v668
      %794 = vmatmul.mubr.bf16.gmra.mrb[0].mxu0 %v667
      %v795 = vpop.f32.mrb[0].mxu0
      %v796 = vadd.f32 0.0, %v795
      %v797 = vpop.f32.mrb[0].mxu0
      %v798 = vpop.f32.mrb[0].mxu0
      %v799 = vadd.f32 0.0, %v798
      %v800 = vpop.f32.mrb[0].mxu0
      %801 = vmatprep.mubr.bf16.mxu0 %v670
      %802 = vmatmul.mubr.bf16.gmra.mrb[0].mxu0 %v669
      %v803 = vpop.f32.mrb[0].mxu0
      %v804 = vadd.f32 0.0, %v803
      %v805 = vpop.f32.mrb[0].mxu0
      %v806 = vpop.f32.mrb[0].mxu0
      %v807 = vadd.f32 0.0, %v806
      %v808 = vpop.f32.mrb[0].mxu0
      %809 = vmatprep.mubr.bf16.mxu0 %v672
      %810 = vmatmul.mubr.bf16.gmra.mrb[0].mxu0 %v671
      %v811 = vpop.f32.mrb[0].mxu0
      %v812 = vadd.f32 0.0, %v811
      %v813 = vpop.f32.mrb[0].mxu0
      %v814 = vpop.f32.mrb[0].mxu0
      %v815 = vadd.f32 0.0, %v814
      %v816 = vpop.f32.mrb[0].mxu0
      %817 = vmatprep.mubr.bf16.mxu0 %v674
      %818 = vmatmul.mubr.bf16.gmra.mrb[0].mxu0 %v673
      %v819 = vpop.f32.mrb[0].mxu0
      %v820 = vadd.f32 0.0, %v819
      %v821 = vpop.f32.mrb[0].mxu0
      %v822 = vpop.f32.mrb[0].mxu0
      %v823 = vadd.f32 0.0, %v822
      %v824 = vpop.f32.mrb[0].mxu0
      %825 = vmatprep.mubr.bf16.mxu0 %v676
      %826 = vmatmul.mubr.bf16.gmra.mrb[0].mxu0 %v675
      %v827 = vpop.f32.mrb[0].mxu0
      %v828 = vadd.f32 0.0, %v827
      %v829 = vpop.f32.mrb[0].mxu0
      %v830 = vpop.f32.mrb[0].mxu0
      %v831 = vadd.f32 0.0, %v830
      %v832 = vpop.f32.mrb[0].mxu0
      %833 = vmatprep.mubr.bf16.mxu0 %v678
      %834 = vmatmul.mubr.bf16.gmra.mrb[0].mxu0 %v677
      %v835 = vpop.f32.mrb[0].mxu0
      %v836 = vadd.f32 0.0, %v835
      %v837 = vpop.f32.mrb[0].mxu0
      %v838 = vpop.f32.mrb[0].mxu0
      %v839 = vadd.f32 0.0, %v838
      %v840 = vpop.f32.mrb[0].mxu0
      %841 = vmatprep.mubr.bf16.mxu0 %v680
      %842 = vmatmul.mubr.bf16.gmra.mrb[0].mxu0 %v679
      %v843 = vpop.f32.mrb[0].mxu0
      %v844 = vadd.f32 0.0, %v843
      %v845 = vpop.f32.mrb[0].mxu0
      %v846 = vpop.f32.mrb[0].mxu0
      %v847 = vadd.f32 0.0, %v846
      %v848 = vpop.f32.mrb[0].mxu0
      %849 = vmatprep.mubr.bf16.mxu0 %v682
      %850 = vmatmul.mubr.bf16.gmra.mrb[0].mxu0 %v681
      %v851 = vpop.f32.mrb[0].mxu0
      %v852 = vadd.f32 0.0, %v851
      %v853 = vpop.f32.mrb[0].mxu0
      %v854 = vpop.f32.mrb[0].mxu0
      %v855 = vadd.f32 0.0, %v854
      %v856 = vpop.f32.mrb[0].mxu0
      %857 = vmatprep.mubr.bf16.mxu0 %v684
      %858 = vmatmul.mubr.bf16.gmra.mrb[0].mxu0 %v683
      %v859 = vpop.f32.mrb[0].mxu0
      %v860 = vadd.f32 0.0, %v859
      %v861 = vpop.f32.mrb[0].mxu0
      %v862 = vpop.f32.mrb[0].mxu0
      %v863 = vadd.f32 0.0, %v862
      %v864 = vpop.f32.mrb[0].mxu0
      %865 = vmatprep.mubr.bf16.mxu0 %v686
      %866 = vmatmul.mubr.bf16.gmra.mrb[0].mxu0 %v685
      %v867 = vpop.f32.mrb[0].mxu0
      %v868 = vadd.f32 0.0, %v867
      %v869 = vpop.f32.mrb[0].mxu0
      %v870 = vpop.f32.mrb[0].mxu0
      %v871 = vadd.f32 0.0, %v870
      %v872 = vpop.f32.mrb[0].mxu0
      %873 = vmatprep.mubr.bf16.mxu0 %v688
      %874 = vmatmul.mubr.bf16.gmra.mrb[0].mxu0 %v687
      %v875 = vpop.f32.mrb[0].mxu0
      %v876 = vadd.f32 0.0, %v875
      %v877 = vpop.f32.mrb[0].mxu0
      %v878 = vpop.f32.mrb[0].mxu0
      %v879 = vadd.f32 0.0, %v878
      %v880 = vpop.f32.mrb[0].mxu0
      %881 = vdwg.mxu0
      %v882 = vadd.f32 %v481, %v756
      %v883 = vadd.f32 %v482, %v759
      %v884 = vadd.f32 %v483, %v764
      %v885 = vadd.f32 %v484, %v767
      %v886 = vadd.f32 %v485, %v772
      %v887 = vadd.f32 %v486, %v775
      %v888 = vadd.f32 %v487, %v780
      %v889 = vadd.f32 %v488, %v783
      %v890 = vadd.f32 %v489, %v788
      %v891 = vadd.f32 %v490, %v791
      %v892 = vadd.f32 %v491, %v796
      %v893 = vadd.f32 %v492, %v799
      %v894 = vadd.f32 %v493, %v804
      %v895 = vadd.f32 %v494, %v807
      %v896 = vadd.f32 %v495, %v812
      %v897 = vadd.f32 %v496, %v815
      %v898 = vadd.f32 %v497, %v820
      %v899 = vadd.f32 %v498, %v823
      %v900 = vadd.f32 %v499, %v828
      %v901 = vadd.f32 %v500, %v831
      %v902 = vadd.f32 %v501, %v836
      %v903 = vadd.f32 %v502, %v839
      %v904 = vadd.f32 %v503, %v844
      %v905 = vadd.f32 %v504, %v847
      %v906 = vadd.f32 %v505, %v852
      %v907 = vadd.f32 %v506, %v855
      %v908 = vadd.f32 %v507, %v860
      %v909 = vadd.f32 %v508, %v863
      %v910 = vadd.f32 %v509, %v868
      %v911 = vadd.f32 %v510, %v871
      %v912 = vadd.f32 %v511, %v876
      %v913 = vadd.f32 %v512, %v879
      %914 = vst [vmem:[#allocation2] sm:$0xff] %v882
      %915 = vst [vmem:[#allocation2 + $0x8] sm:$0xff] %v883
      %916 = vst [vmem:[#allocation2 + $0x10] sm:$0xff] %v884
      %917 = vst [vmem:[#allocation2 + $0x18] sm:$0xff] %v885
      %918 = vst [vmem:[#allocation2 + $0x20] sm:$0xff] %v886
      %919 = vst [vmem:[#allocation2 + $0x28] sm:$0xff] %v887
      %920 = vst [vmem:[#allocation2 + $0x30] sm:$0xff] %v888
      %921 = vst [vmem:[#allocation2 + $0x38] sm:$0xff] %v889
      %922 = vst [vmem:[#allocation2 + $0x40] sm:$0xff] %v890
      %923 = vst [vmem:[#allocation2 + $0x48] sm:$0xff] %v891
      %924 = vst [vmem:[#allocation2 + $0x50] sm:$0xff] %v892
      %925 = vst [vmem:[#allocation2 + $0x58] sm:$0xff] %v893
      %926 = vst [vmem:[#allocation2 + $0x60] sm:$0xff] %v894
      %927 = vst [vmem:[#allocation2 + $0x68] sm:$0xff] %v895
      %928 = vst [vmem:[#allocation2 + $0x70] sm:$0xff] %v896
      %929 = vst [vmem:[#allocation2 + $0x78] sm:$0xff] %v897
      %930 = vst [vmem:[#allocation2 + $0x80] sm:$0xff] %v898
      %931 = vst [vmem:[#allocation2 + $0x88] sm:$0xff] %v899
      %932 = vst [vmem:[#allocation2 + $0x90] sm:$0xff] %v900
      %933 = vst [vmem:[#allocation2 + $0x98] sm:$0xff] %v901
      %934 = vst [vmem:[#allocation2 + $0xa0] sm:$0xff] %v902
      %935 = vst [vmem:[#allocation2 + $0xa8] sm:$0xff] %v903
      %936 = vst [vmem:[#allocation2 + $0xb0] sm:$0xff] %v904
      %937 = vst [vmem:[#allocation2 + $0xb8] sm:$0xff] %v905
      %938 = vst [vmem:[#allocation2 + $0xc0] sm:$0xff] %v906
      %939 = vst [vmem:[#allocation2 + $0xc8] sm:$0xff] %v907
      %940 = vst [vmem:[#allocation2 + $0xd0] sm:$0xff] %v908
      %941 = vst [vmem:[#allocation2 + $0xd8] sm:$0xff] %v909
      %942 = vst [vmem:[#allocation2 + $0xe0] sm:$0xff] %v910
      %943 = vst [vmem:[#allocation2 + $0xe8] sm:$0xff] %v911
      %944 = vst [vmem:[#allocation2 + $0xf0] sm:$0xff] %v912
      %945 = vst [vmem:[#allocation2 + $0xf8] sm:$0xff] %v913
    $region41: #{gcn_model_forward.6} parent=1 // pred_fallthru
      _
    // Predicated region
    $region42: #{gcn_model_forward.6} parent=1 // pred_check
      %p946 = pneg %p78
    $region43: #{gcn_model_forward.6} parent=1 // pred_check_branch
      %948 = sbr.rel (%p946) target = $region45
    $region44: #{gcn_model_forward.6} parent=1 // pred_region
      %v949 = vld [vmem:[#allocation2] sm:$0xff]
      %v950 = vld [vmem:[#allocation2 + $0x8] sm:$0xff]
      %v951 = vld [vmem:[#allocation2 + $0x10] sm:$0xff]
      %v952 = vld [vmem:[#allocation2 + $0x18] sm:$0xff]
      %v953 = vld [vmem:[#allocation2 + $0x20] sm:$0xff]
      %v954 = vld [vmem:[#allocation2 + $0x28] sm:$0xff]
      %v955 = vld [vmem:[#allocation2 + $0x30] sm:$0xff]
      %v956 = vld [vmem:[#allocation2 + $0x38] sm:$0xff]
      %v957 = vld [vmem:[#allocation2 + $0x40] sm:$0xff]
      %v958 = vld [vmem:[#allocation2 + $0x48] sm:$0xff]
      %v959 = vld [vmem:[#allocation2 + $0x50] sm:$0xff]
      %v960 = vld [vmem:[#allocation2 + $0x58] sm:$0xff]
      %v961 = vld [vmem:[#allocation2 + $0x60] sm:$0xff]
      %v962 = vld [vmem:[#allocation2 + $0x68] sm:$0xff]
      %v963 = vld [vmem:[#allocation2 + $0x70] sm:$0xff]
      %v964 = vld [vmem:[#allocation2 + $0x78] sm:$0xff]
      %v965 = vld [vmem:[#allocation2 + $0x80] sm:$0xff]
      %v966 = vld [vmem:[#allocation2 + $0x88] sm:$0xff]
      %v967 = vld [vmem:[#allocation2 + $0x90] sm:$0xff]
      %v968 = vld [vmem:[#allocation2 + $0x98] sm:$0xff]
      %v969 = vld [vmem:[#allocation2 + $0xa0] sm:$0xff]
      %v970 = vld [vmem:[#allocation2 + $0xa8] sm:$0xff]
      %v971 = vld [vmem:[#allocation2 + $0xb0] sm:$0xff]
      %v972 = vld [vmem:[#allocation2 + $0xb8] sm:$0xff]
      %v973 = vld [vmem:[#allocation2 + $0xc0] sm:$0xff]
      %v974 = vld [vmem:[#allocation2 + $0xc8] sm:$0xff]
      %v975 = vld [vmem:[#allocation2 + $0xd0] sm:$0xff]
      %v976 = vld [vmem:[#allocation2 + $0xd8] sm:$0xff]
      %v977 = vld [vmem:[#allocation2 + $0xe0] sm:$0xff]
      %v978 = vld [vmem:[#allocation2 + $0xe8] sm:$0xff]
      %v979 = vld [vmem:[#allocation2 + $0xf0] sm:$0xff]
      %v980 = vld [vmem:[#allocation2 + $0xf8] sm:$0xff]
      %v981 = vld [vmem:[%s5] sm:$0x1]
      %v983 = vlaneseq
      %v984 = vshrl.u32 %v983, 7
      %v985 = vsub.s32 0, %v984
      %v986 = vrot.slane %v981, %v985
      %v988 = vmul.f32 %v949, %v986
      %v989 = vmul.f32 %v950, %v986
      %v990 = vmul.f32 %v951, %v986
      %v991 = vmul.f32 %v952, %v986
      %v992 = vmul.f32 %v953, %v986
      %v993 = vmul.f32 %v954, %v986
      %v994 = vmul.f32 %v955, %v986
      %v995 = vmul.f32 %v956, %v986
      %v996 = vmul.f32 %v957, %v986
      %v997 = vmul.f32 %v958, %v986
      %v998 = vmul.f32 %v959, %v986
      %v999 = vmul.f32 %v960, %v986
      %v1000 = vmul.f32 %v961, %v986
      %v1001 = vmul.f32 %v962, %v986
      %v1002 = vmul.f32 %v963, %v986
      %v1003 = vmul.f32 %v964, %v986
      %v1004 = vmul.f32 %v965, %v986
      %v1005 = vmul.f32 %v966, %v986
      %v1006 = vmul.f32 %v967, %v986
      %v1007 = vmul.f32 %v968, %v986
      %v1008 = vmul.f32 %v969, %v986
      %v1009 = vmul.f32 %v970, %v986
      %v1010 = vmul.f32 %v971, %v986
      %v1011 = vmul.f32 %v972, %v986
      %v1012 = vmul.f32 %v973, %v986
      %v1013 = vmul.f32 %v974, %v986
      %v1014 = vmul.f32 %v975, %v986
      %v1015 = vmul.f32 %v976, %v986
      %v1016 = vmul.f32 %v977, %v986
      %v1017 = vmul.f32 %v978, %v986
      %v1018 = vmul.f32 %v979, %v986
      %v1019 = vmul.f32 %v980, %v986
      %v1020 = vld [vmem:[%s6] sm:$0x1]
      %v1022 = vlaneseq
      %v1023 = vshrl.u32 %v1022, 7
      %v1024 = vsub.s32 0, %v1023
      %v1025 = vrot.slane %v1020, %v1024
      %v1027 = vadd.f32 %v988, %v1025
      %v1028 = vadd.f32 %v989, %v1025
      %v1029 = vadd.f32 %v990, %v1025
      %v1030 = vadd.f32 %v991, %v1025
      %v1031 = vadd.f32 %v992, %v1025
      %v1032 = vadd.f32 %v993, %v1025
      %v1033 = vadd.f32 %v994, %v1025
      %v1034 = vadd.f32 %v995, %v1025
      %v1035 = vadd.f32 %v996, %v1025
      %v1036 = vadd.f32 %v997, %v1025
      %v1037 = vadd.f32 %v998, %v1025
      %v1038 = vadd.f32 %v999, %v1025
      %v1039 = vadd.f32 %v1000, %v1025
      %v1040 = vadd.f32 %v1001, %v1025
      %v1041 = vadd.f32 %v1002, %v1025
      %v1042 = vadd.f32 %v1003, %v1025
      %v1043 = vadd.f32 %v1004, %v1025
      %v1044 = vadd.f32 %v1005, %v1025
      %v1045 = vadd.f32 %v1006, %v1025
      %v1046 = vadd.f32 %v1007, %v1025
      %v1047 = vadd.f32 %v1008, %v1025
      %v1048 = vadd.f32 %v1009, %v1025
      %v1049 = vadd.f32 %v1010, %v1025
      %v1050 = vadd.f32 %v1011, %v1025
      %v1051 = vadd.f32 %v1012, %v1025
      %v1052 = vadd.f32 %v1013, %v1025
      %v1053 = vadd.f32 %v1014, %v1025
      %v1054 = vadd.f32 %v1015, %v1025
      %v1055 = vadd.f32 %v1016, %v1025
      %v1056 = vadd.f32 %v1017, %v1025
      %v1057 = vadd.f32 %v1018, %v1025
      %v1058 = vadd.f32 %v1019, %v1025
      %vm1059 = vcmp.ge.f32.partialorder %v1027, 0.0
      %vm1060 = vcmp.ge.f32.partialorder %v1028, 0.0
      %vm1061 = vcmp.ge.f32.partialorder %v1029, 0.0
      %vm1062 = vcmp.ge.f32.partialorder %v1030, 0.0
      %vm1063 = vcmp.ge.f32.partialorder %v1031, 0.0
      %vm1064 = vcmp.ge.f32.partialorder %v1032, 0.0
      %vm1065 = vcmp.ge.f32.partialorder %v1033, 0.0
      %vm1066 = vcmp.ge.f32.partialorder %v1034, 0.0
      %vm1067 = vcmp.ge.f32.partialorder %v1035, 0.0
      %vm1068 = vcmp.ge.f32.partialorder %v1036, 0.0
      %vm1069 = vcmp.ge.f32.partialorder %v1037, 0.0
      %vm1070 = vcmp.ge.f32.partialorder %v1038, 0.0
      %vm1071 = vcmp.ge.f32.partialorder %v1039, 0.0
      %vm1072 = vcmp.ge.f32.partialorder %v1040, 0.0
      %vm1073 = vcmp.ge.f32.partialorder %v1041, 0.0
      %vm1074 = vcmp.ge.f32.partialorder %v1042, 0.0
      %vm1075 = vcmp.ge.f32.partialorder %v1043, 0.0
      %vm1076 = vcmp.ge.f32.partialorder %v1044, 0.0
      %vm1077 = vcmp.ge.f32.partialorder %v1045, 0.0
      %vm1078 = vcmp.ge.f32.partialorder %v1046, 0.0
      %vm1079 = vcmp.ge.f32.partialorder %v1047, 0.0
      %vm1080 = vcmp.ge.f32.partialorder %v1048, 0.0
      %vm1081 = vcmp.ge.f32.partialorder %v1049, 0.0
      %vm1082 = vcmp.ge.f32.partialorder %v1050, 0.0
      %vm1083 = vcmp.ge.f32.partialorder %v1051, 0.0
      %vm1084 = vcmp.ge.f32.partialorder %v1052, 0.0
      %vm1085 = vcmp.ge.f32.partialorder %v1053, 0.0
      %vm1086 = vcmp.ge.f32.partialorder %v1054, 0.0
      %vm1087 = vcmp.ge.f32.partialorder %v1055, 0.0
      %vm1088 = vcmp.ge.f32.partialorder %v1056, 0.0
      %vm1089 = vcmp.ge.f32.partialorder %v1057, 0.0
      %vm1090 = vcmp.ge.f32.partialorder %v1058, 0.0
      %v1091 = vmul.f32 %v1027, 0.01
      %v1092 = vmul.f32 %v1028, 0.01
      %v1093 = vmul.f32 %v1029, 0.01
      %v1094 = vmul.f32 %v1030, 0.01
      %v1095 = vmul.f32 %v1031, 0.01
      %v1096 = vmul.f32 %v1032, 0.01
      %v1097 = vmul.f32 %v1033, 0.01
      %v1098 = vmul.f32 %v1034, 0.01
      %v1099 = vmul.f32 %v1035, 0.01
      %v1100 = vmul.f32 %v1036, 0.01
      %v1101 = vmul.f32 %v1037, 0.01
      %v1102 = vmul.f32 %v1038, 0.01
      %v1103 = vmul.f32 %v1039, 0.01
      %v1104 = vmul.f32 %v1040, 0.01
      %v1105 = vmul.f32 %v1041, 0.01
      %v1106 = vmul.f32 %v1042, 0.01
      %v1107 = vmul.f32 %v1043, 0.01
      %v1108 = vmul.f32 %v1044, 0.01
      %v1109 = vmul.f32 %v1045, 0.01
      %v1110 = vmul.f32 %v1046, 0.01
      %v1111 = vmul.f32 %v1047, 0.01
      %v1112 = vmul.f32 %v1048, 0.01
      %v1113 = vmul.f32 %v1049, 0.01
      %v1114 = vmul.f32 %v1050, 0.01
      %v1115 = vmul.f32 %v1051, 0.01
      %v1116 = vmul.f32 %v1052, 0.01
      %v1117 = vmul.f32 %v1053, 0.01
      %v1118 = vmul.f32 %v1054, 0.01
      %v1119 = vmul.f32 %v1055, 0.01
      %v1120 = vmul.f32 %v1056, 0.01
      %v1121 = vmul.f32 %v1057, 0.01
      %v1122 = vmul.f32 %v1058, 0.01
      %v1123 = vsel %vm1059, %v1027, %v1091
      %v1124 = vsel %vm1060, %v1028, %v1092
      %v1125 = vsel %vm1061, %v1029, %v1093
      %v1126 = vsel %vm1062, %v1030, %v1094
      %v1127 = vsel %vm1063, %v1031, %v1095
      %v1128 = vsel %vm1064, %v1032, %v1096
      %v1129 = vsel %vm1065, %v1033, %v1097
      %v1130 = vsel %vm1066, %v1034, %v1098
      %v1131 = vsel %vm1067, %v1035, %v1099
      %v1132 = vsel %vm1068, %v1036, %v1100
      %v1133 = vsel %vm1069, %v1037, %v1101
      %v1134 = vsel %vm1070, %v1038, %v1102
      %v1135 = vsel %vm1071, %v1039, %v1103
      %v1136 = vsel %vm1072, %v1040, %v1104
      %v1137 = vsel %vm1073, %v1041, %v1105
      %v1138 = vsel %vm1074, %v1042, %v1106
      %v1139 = vsel %vm1075, %v1043, %v1107
      %v1140 = vsel %vm1076, %v1044, %v1108
      %v1141 = vsel %vm1077, %v1045, %v1109
      %v1142 = vsel %vm1078, %v1046, %v1110
      %v1143 = vsel %vm1079, %v1047, %v1111
      %v1144 = vsel %vm1080, %v1048, %v1112
      %v1145 = vsel %vm1081, %v1049, %v1113
      %v1146 = vsel %vm1082, %v1050, %v1114
      %v1147 = vsel %vm1083, %v1051, %v1115
      %v1148 = vsel %vm1084, %v1052, %v1116
      %v1149 = vsel %vm1085, %v1053, %v1117
      %v1150 = vsel %vm1086, %v1054, %v1118
      %v1151 = vsel %vm1087, %v1055, %v1119
      %v1152 = vsel %vm1088, %v1056, %v1120
      %v1153 = vsel %vm1089, %v1057, %v1121
      %v1154 = vsel %vm1090, %v1058, %v1122
      %v1155 = vpack.c.bf16 %v1124, %v1123
      %v1156 = vpack.c.bf16 %v1126, %v1125
      %v1157 = vpack.c.bf16 %v1128, %v1127
      %v1158 = vpack.c.bf16 %v1130, %v1129
      %v1159 = vpack.c.bf16 %v1132, %v1131
      %v1160 = vpack.c.bf16 %v1134, %v1133
      %v1161 = vpack.c.bf16 %v1136, %v1135
      %v1162 = vpack.c.bf16 %v1138, %v1137
      %v1163 = vpack.c.bf16 %v1140, %v1139
      %v1164 = vpack.c.bf16 %v1142, %v1141
      %v1165 = vpack.c.bf16 %v1144, %v1143
      %v1166 = vpack.c.bf16 %v1146, %v1145
      %v1167 = vpack.c.bf16 %v1148, %v1147
      %v1168 = vpack.c.bf16 %v1150, %v1149
      %v1169 = vpack.c.bf16 %v1152, %v1151
      %v1170 = vpack.c.bf16 %v1154, %v1153
      %v1187 = vunpack.c.l.b16 %v1155
      %v1188 = vunpack.c.h.b16 %v1155
      %v1189 = vunpack.c.l.b16 %v1156
      %v1190 = vunpack.c.h.b16 %v1156
      %v1191 = vunpack.c.l.b16 %v1157
      %v1192 = vunpack.c.h.b16 %v1157
      %v1193 = vunpack.c.l.b16 %v1158
      %v1194 = vunpack.c.h.b16 %v1158
      %v1195 = vunpack.c.l.b16 %v1159
      %v1196 = vunpack.c.h.b16 %v1159
      %v1197 = vunpack.c.l.b16 %v1160
      %v1198 = vunpack.c.h.b16 %v1160
      %v1199 = vunpack.c.l.b16 %v1161
      %v1200 = vunpack.c.h.b16 %v1161
      %v1201 = vunpack.c.l.b16 %v1162
      %v1202 = vunpack.c.h.b16 %v1162
      %v1203 = vunpack.c.l.b16 %v1163
      %v1204 = vunpack.c.h.b16 %v1163
      %v1205 = vunpack.c.l.b16 %v1164
      %v1206 = vunpack.c.h.b16 %v1164
      %v1207 = vunpack.c.l.b16 %v1165
      %v1208 = vunpack.c.h.b16 %v1165
      %v1209 = vunpack.c.l.b16 %v1166
      %v1210 = vunpack.c.h.b16 %v1166
      %v1211 = vunpack.c.l.b16 %v1167
      %v1212 = vunpack.c.h.b16 %v1167
      %v1213 = vunpack.c.l.b16 %v1168
      %v1214 = vunpack.c.h.b16 %v1168
      %v1215 = vunpack.c.l.b16 %v1169
      %v1216 = vunpack.c.h.b16 %v1169
      %v1217 = vunpack.c.l.b16 %v1170
      %v1218 = vunpack.c.h.b16 %v1170
      %v1219 = vpack.c.b16 %v1187, %v1187
      %v1220 = vpack.c.b16 %v1188, %v1188
      %v1221 = vpack.c.b16 %v1189, %v1189
      %v1222 = vpack.c.b16 %v1190, %v1190
      %v1223 = vpack.c.b16 %v1191, %v1191
      %v1224 = vpack.c.b16 %v1192, %v1192
      %v1225 = vpack.c.b16 %v1193, %v1193
      %v1226 = vpack.c.b16 %v1194, %v1194
      %v1227 = vpack.c.b16 %v1195, %v1195
      %v1228 = vpack.c.b16 %v1196, %v1196
      %v1229 = vpack.c.b16 %v1197, %v1197
      %v1230 = vpack.c.b16 %v1198, %v1198
      %v1231 = vpack.c.b16 %v1199, %v1199
      %v1232 = vpack.c.b16 %v1200, %v1200
      %v1233 = vpack.c.b16 %v1201, %v1201
      %v1234 = vpack.c.b16 %v1202, %v1202
      %v1235 = vpack.c.b16 %v1203, %v1203
      %v1236 = vpack.c.b16 %v1204, %v1204
      %v1237 = vpack.c.b16 %v1205, %v1205
      %v1238 = vpack.c.b16 %v1206, %v1206
      %v1239 = vpack.c.b16 %v1207, %v1207
      %v1240 = vpack.c.b16 %v1208, %v1208
      %v1241 = vpack.c.b16 %v1209, %v1209
      %v1242 = vpack.c.b16 %v1210, %v1210
      %v1243 = vpack.c.b16 %v1211, %v1211
      %v1244 = vpack.c.b16 %v1212, %v1212
      %v1245 = vpack.c.b16 %v1213, %v1213
      %v1246 = vpack.c.b16 %v1214, %v1214
      %v1247 = vpack.c.b16 %v1215, %v1215
      %v1248 = vpack.c.b16 %v1216, %v1216
      %v1249 = vpack.c.b16 %v1217, %v1217
      %v1250 = vpack.c.b16 %v1218, %v1218
      %1283 = vst [vmem:[%s7] sm:$0xf] %v1219
      %1284 = vst [vmem:[%s7 + $0x4] sm:$0xf] %v1220
      %1285 = vst [vmem:[%s7 + $0x8] sm:$0xf] %v1221
      %1286 = vst [vmem:[%s7 + $0xc] sm:$0xf] %v1222
      %1287 = vst [vmem:[%s7 + $0x10] sm:$0xf] %v1223
      %1288 = vst [vmem:[%s7 + $0x14] sm:$0xf] %v1224
      %1289 = vst [vmem:[%s7 + $0x18] sm:$0xf] %v1225
      %1290 = vst [vmem:[%s7 + $0x1c] sm:$0xf] %v1226
      %1291 = vst [vmem:[%s7 + $0x20] sm:$0xf] %v1227
      %1292 = vst [vmem:[%s7 + $0x24] sm:$0xf] %v1228
      %1293 = vst [vmem:[%s7 + $0x28] sm:$0xf] %v1229
      %1294 = vst [vmem:[%s7 + $0x2c] sm:$0xf] %v1230
      %1295 = vst [vmem:[%s7 + $0x30] sm:$0xf] %v1231
      %1296 = vst [vmem:[%s7 + $0x34] sm:$0xf] %v1232
      %1297 = vst [vmem:[%s7 + $0x38] sm:$0xf] %v1233
      %1298 = vst [vmem:[%s7 + $0x3c] sm:$0xf] %v1234
      %1299 = vst [vmem:[%s7 + $0x40] sm:$0xf] %v1235
      %1300 = vst [vmem:[%s7 + $0x44] sm:$0xf] %v1236
      %1301 = vst [vmem:[%s7 + $0x48] sm:$0xf] %v1237
      %1302 = vst [vmem:[%s7 + $0x4c] sm:$0xf] %v1238
      %1303 = vst [vmem:[%s7 + $0x50] sm:$0xf] %v1239
      %1304 = vst [vmem:[%s7 + $0x54] sm:$0xf] %v1240
      %1305 = vst [vmem:[%s7 + $0x58] sm:$0xf] %v1241
      %1306 = vst [vmem:[%s7 + $0x5c] sm:$0xf] %v1242
      %1307 = vst [vmem:[%s7 + $0x60] sm:$0xf] %v1243
      %1308 = vst [vmem:[%s7 + $0x64] sm:$0xf] %v1244
      %1309 = vst [vmem:[%s7 + $0x68] sm:$0xf] %v1245
      %1310 = vst [vmem:[%s7 + $0x6c] sm:$0xf] %v1246
      %1311 = vst [vmem:[%s7 + $0x70] sm:$0xf] %v1247
      %1312 = vst [vmem:[%s7 + $0x74] sm:$0xf] %v1248
      %1313 = vst [vmem:[%s7 + $0x78] sm:$0xf] %v1249
      %1314 = vst [vmem:[%s7 + $0x7c] sm:$0xf] %v1250
    $region45: #{gcn_model_forward.6} parent=1 // pred_fallthru
      _
    // Predicated region
    $region46: #{gcn_model_forward.6} parent=1 // pred_check
      _
    $region47: #{gcn_model_forward.6} parent=1 // pred_check_branch
      %1316 = sbr.rel (0) target = $region49
    $region48: #{gcn_model_forward.6} parent=1 // pred_region
      _
    $region49: #{gcn_model_forward.6} parent=1 // pred_fallthru
      _
    // Predicated region
    $region50: #{gcn_model_forward.6} parent=1 // pred_check
      _
    $region51: #{gcn_model_forward.6} parent=1 // pred_check_branch
      %1318 = sbr.rel (0) target = $region53
    $region52: #{gcn_model_forward.6} parent=1 // pred_region
      _
    $region53: #{gcn_model_forward.6} parent=1 // pred_fallthru
      _
    %1319 = vsyncpa [#allocation7], 1
    %1320 = vsyncpa [#allocation9], 1

// kernel: gcn_model_forward.7
$region0: #{gcn_model_forward.7}
  #allocation0 [shape = 'u32[]', space=smem, size = 0x4, offset = 0x4, fixed_abs, tag = 'smem constant byte address 0x4 - core index']
  #allocation1 [shape = 'u32[144,128]{1,0:T(1,128)}', space=vmem, size = 0x12000, scoped, tag = 'internal scratch']
  #allocation2 [shape = 'f32[256,128]{1,0:T(8,128)}', space=vmem, size = 0x20000, scoped, tag = 'scratch operand']
  #allocation3 [shape = 's32[1]{0}', space=sflag, size = 0x4, scoped, tag = 'scoped memory for gcn_model_forward.7']
  #allocation4 [shape = 's32[1,1]{1,0:T(1,128)S(6)}', space=smem, size = 0x200, scoped, tag = 'prefetched SMEM operand 0']
  #allocation5 [shape = 's32[1]{0:T(128)S(6)}', space=smem, size = 0x200, scoped, tag = 'prefetched SMEM operand 1']
  %s0 = inlined_call_operand.<no memory space> [shape: s32[1,1], index: 0, kind: input, shape index: {}]
  %s1 = inlined_call_operand.<no memory space> [shape: s32[1], index: 1, kind: input, shape index: {}]
  %s2 = inlined_call_operand.vmem [shape: bf16[256,256], index: 2, kind: input, shape index: {}]
  %s3 = inlined_call_operand.vmem [shape: bf16[256,128], index: 3, kind: input, shape index: {}]
  %s4 = inlined_call_operand.vmem [shape: bf16[128,128], index: 4, kind: input, shape index: {}]
  %s5 = inlined_call_operand.vmem [shape: f32[1,128], index: 5, kind: input, shape index: {}]
  %s6 = inlined_call_operand.vmem [shape: f32[1,128], index: 6, kind: input, shape index: {}]
  %s7 = inlined_call_operand.vmem [shape: bf16[256,128], index: 7, kind: output, shape index: {}]
  %s8 = sld [smem:[#allocation0]]
  $region42: #{gcn_model_forward.7} parent=0
    _
  %s10 = ssub.s32 1, %s8
  %s11 = scalar_select 0, %s10, %s8
  %12 = sst [smem:[#allocation4]] %s0
  %13 = sst [smem:[#allocation5]] %s1
  // Predicated region
  $region2: #{gcn_model_forward.7} parent=0 // pred_check
    _
  $region3: #{gcn_model_forward.7} parent=0 // pred_check_branch
    %15 = sbr.rel (0) target = $region5
  $region4: #{gcn_model_forward.7} parent=0 // pred_region
    %s16 = sadd.s32 0, 0
    %s17 = smul.u32 %s16, 128
    %s18 = sadd.s32 %s17, 0
    %s19 = sld [smem:[#allocation4 + %s18]]
    %s20 = smul.u32 2, %s19
    %p21 = scmp.lt.s32.totalorder %s20, 1
    %s22 = scalar_select %p21, %s20, 1
    %s23 = smul.addr %s22, 4
    %s24 = scalar_lea.vmem %s2, %s23
    %s25 = sadd.s32 0, 0
    %s26 = smul.u32 %s25, 128
    %s27 = sadd.s32 %s26, 0
    %s28 = sld [smem:[#allocation4 + %s27]]
    %s29 = smul.u32 2, %s28
  $region5: #{gcn_model_forward.7} parent=0 // pred_fallthru
    _
  // Predicated region
  $region6: #{gcn_model_forward.7} parent=0 // pred_check
    _
  $region7: #{gcn_model_forward.7} parent=0 // pred_check_branch
    %31 = sbr.rel (0) target = $region9
  $region8: #{gcn_model_forward.7} parent=0 // pred_region
    _
  $region9: #{gcn_model_forward.7} parent=0 // pred_fallthru
    _
  // Predicated region
  $region10: #{gcn_model_forward.7} parent=0 // pred_check
    _
  $region11: #{gcn_model_forward.7} parent=0 // pred_check_branch
    %33 = sbr.rel (0) target = $region13
  $region12: #{gcn_model_forward.7} parent=0 // pred_region
    _
  $region13: #{gcn_model_forward.7} parent=0 // pred_fallthru
    _
  // Predicated region
  $region14: #{gcn_model_forward.7} parent=0 // pred_check
    _
  $region15: #{gcn_model_forward.7} parent=0 // pred_check_branch
    %35 = sbr.rel (0) target = $region17
  $region16: #{gcn_model_forward.7} parent=0 // pred_region
    _
  $region17: #{gcn_model_forward.7} parent=0 // pred_fallthru
    _
  // Predicated region
  $region18: #{gcn_model_forward.7} parent=0 // pred_check
    _
  $region19: #{gcn_model_forward.7} parent=0 // pred_check_branch
    %37 = sbr.rel (0) target = $region21
  $region20: #{gcn_model_forward.7} parent=0 // pred_region
    _
  $region21: #{gcn_model_forward.7} parent=0 // pred_fallthru
    _
  %s38 = sadd.s32 0, 0
  %s39 = smul.u32 %s38, 128
  %s40 = sadd.s32 %s39, 0
  %s41 = sld [smem:[#allocation4 + %s40]]
  %s42 = smul.u32 2, %s41
  %p43 = scmp.lt.s32.totalorder %s42, 1
  %s44 = scalar_select %p43, %s42, 1
  %s45 = smul.addr %s44, 4
  %s46 = scalar_lea.vmem %s2, %s45
  %s47 = sadd.s32 0, 0
  %s48 = smul.u32 %s47, 128
  %s49 = sadd.s32 %s48, 0
  %s50 = sld [smem:[#allocation4 + %s49]]
  %s51 = smul.u32 2, %s50
  %p52 = scmp.lt.s32.totalorder %s51, 1
  %s53 = scalar_select %p52, %s51, 1
  %s54 = smul.addr %s53, 4
  %s55 = scalar_lea.vmem %s2, %s54
  %s56 = sadd.s32 0, 0
  %s57 = smul.u32 %s56, 128
  %s58 = sadd.s32 %s57, 0
  %s59 = sld [smem:[#allocation4 + %s58]]
  %s60 = smul.u32 2, %s59
  %p62 = scmp.eq.s32.totalorder 0, 0
  // Predicated region
  $region22: #{gcn_model_forward.7} parent=0 // pred_check
    %p63 = pneg %p62
  $region23: #{gcn_model_forward.7} parent=0 // pred_check_branch
    %65 = sbr.rel (%p63) target = $region25
  $region24: #{gcn_model_forward.7} parent=0 // pred_region
    %66 = vst [vmem:[#allocation2] sm:$0xff] 0.0
    %67 = vst [vmem:[#allocation2 + $0x8] sm:$0xff] 0.0
    %68 = vst [vmem:[#allocation2 + $0x10] sm:$0xff] 0.0
    %69 = vst [vmem:[#allocation2 + $0x18] sm:$0xff] 0.0
    %70 = vst [vmem:[#allocation2 + $0x20] sm:$0xff] 0.0
    %71 = vst [vmem:[#allocation2 + $0x28] sm:$0xff] 0.0
    %72 = vst [vmem:[#allocation2 + $0x30] sm:$0xff] 0.0
    %73 = vst [vmem:[#allocation2 + $0x38] sm:$0xff] 0.0
    %74 = vst [vmem:[#allocation2 + $0x40] sm:$0xff] 0.0
    %75 = vst [vmem:[#allocation2 + $0x48] sm:$0xff] 0.0
    %76 = vst [vmem:[#allocation2 + $0x50] sm:$0xff] 0.0
    %77 = vst [vmem:[#allocation2 + $0x58] sm:$0xff] 0.0
    %78 = vst [vmem:[#allocation2 + $0x60] sm:$0xff] 0.0
    %79 = vst [vmem:[#allocation2 + $0x68] sm:$0xff] 0.0
    %80 = vst [vmem:[#allocation2 + $0x70] sm:$0xff] 0.0
    %81 = vst [vmem:[#allocation2 + $0x78] sm:$0xff] 0.0
    %82 = vst [vmem:[#allocation2 + $0x80] sm:$0xff] 0.0
    %83 = vst [vmem:[#allocation2 + $0x88] sm:$0xff] 0.0
    %84 = vst [vmem:[#allocation2 + $0x90] sm:$0xff] 0.0
    %85 = vst [vmem:[#allocation2 + $0x98] sm:$0xff] 0.0
    %86 = vst [vmem:[#allocation2 + $0xa0] sm:$0xff] 0.0
    %87 = vst [vmem:[#allocation2 + $0xa8] sm:$0xff] 0.0
    %88 = vst [vmem:[#allocation2 + $0xb0] sm:$0xff] 0.0
    %89 = vst [vmem:[#allocation2 + $0xb8] sm:$0xff] 0.0
    %90 = vst [vmem:[#allocation2 + $0xc0] sm:$0xff] 0.0
    %91 = vst [vmem:[#allocation2 + $0xc8] sm:$0xff] 0.0
    %92 = vst [vmem:[#allocation2 + $0xd0] sm:$0xff] 0.0
    %93 = vst [vmem:[#allocation2 + $0xd8] sm:$0xff] 0.0
    %94 = vst [vmem:[#allocation2 + $0xe0] sm:$0xff] 0.0
    %95 = vst [vmem:[#allocation2 + $0xe8] sm:$0xff] 0.0
    %96 = vst [vmem:[#allocation2 + $0xf0] sm:$0xff] 0.0
    %97 = vst [vmem:[#allocation2 + $0xf8] sm:$0xff] 0.0
  $region25: #{gcn_model_forward.7} parent=0 // pred_fallthru
    _
  %s98 = sld [smem:[#allocation5]]
  %p99 = scmp.lt.s32.totalorder 0, %s98
  // Predicated region
  $region26: #{gcn_model_forward.7} parent=0 // pred_check
    %p100 = pneg %p99
  $region27: #{gcn_model_forward.7} parent=0 // pred_check_branch
    %102 = sbr.rel (%p100) target = $region29
  $region28: #{gcn_model_forward.7} parent=0 // pred_region
    %s103 = sadd.s32 0, 0
    %s104 = smul.u32 %s103, 128
    %s105 = sadd.s32 %s104, 0
    %s106 = sld [smem:[#allocation4 + %s105]]
    %s107 = smul.u32 %s106, 256
    %s108 = sshra.s32 %s107, 3
    %s109 = sand.u32 %s107, 7
    %s110 = smul.addr %s108, 4
    %s111 = scalar_lea.vmem %s3, %s110
    %v112 = vld [vmem:[%s111] sm:$0xf]
    %v113 = vld [vmem:[%s111 + $0x4] sm:$0xf]
    %v114 = vld [vmem:[%s111 + $0x8] sm:$0xf]
    %v115 = vld [vmem:[%s111 + $0xc] sm:$0xf]
    %v116 = vld [vmem:[%s111 + $0x10] sm:$0xf]
    %v117 = vld [vmem:[%s111 + $0x14] sm:$0xf]
    %v118 = vld [vmem:[%s111 + $0x18] sm:$0xf]
    %v119 = vld [vmem:[%s111 + $0x1c] sm:$0xf]
    %v120 = vld [vmem:[%s111 + $0x20] sm:$0xf]
    %v121 = vld [vmem:[%s111 + $0x24] sm:$0xf]
    %v122 = vld [vmem:[%s111 + $0x28] sm:$0xf]
    %v123 = vld [vmem:[%s111 + $0x2c] sm:$0xf]
    %v124 = vld [vmem:[%s111 + $0x30] sm:$0xf]
    %v125 = vld [vmem:[%s111 + $0x34] sm:$0xf]
    %v126 = vld [vmem:[%s111 + $0x38] sm:$0xf]
    %v127 = vld [vmem:[%s111 + $0x3c] sm:$0xf]
    %v128 = vld [vmem:[%s111 + $0x40] sm:$0xf]
    %v129 = vld [vmem:[%s111 + $0x44] sm:$0xf]
    %v130 = vld [vmem:[%s111 + $0x48] sm:$0xf]
    %v131 = vld [vmem:[%s111 + $0x4c] sm:$0xf]
    %v132 = vld [vmem:[%s111 + $0x50] sm:$0xf]
    %v133 = vld [vmem:[%s111 + $0x54] sm:$0xf]
    %v134 = vld [vmem:[%s111 + $0x58] sm:$0xf]
    %v135 = vld [vmem:[%s111 + $0x5c] sm:$0xf]
    %v136 = vld [vmem:[%s111 + $0x60] sm:$0xf]
    %v137 = vld [vmem:[%s111 + $0x64] sm:$0xf]
    %v138 = vld [vmem:[%s111 + $0x68] sm:$0xf]
    %v139 = vld [vmem:[%s111 + $0x6c] sm:$0xf]
    %v140 = vld [vmem:[%s111 + $0x70] sm:$0xf]
    %v141 = vld [vmem:[%s111 + $0x74] sm:$0xf]
    %v142 = vld [vmem:[%s111 + $0x78] sm:$0xf]
    %v143 = vld [vmem:[%s111 + $0x7c] sm:$0xf]
    %v144 = vld [vmem:[%s4] sm:$0xf]
    %v145 = vld [vmem:[%s4 + $0x4] sm:$0xf]
    %v146 = vld [vmem:[%s4 + $0x8] sm:$0xf]
    %v147 = vld [vmem:[%s4 + $0xc] sm:$0xf]
    %v148 = vld [vmem:[%s4 + $0x10] sm:$0xf]
    %v149 = vld [vmem:[%s4 + $0x14] sm:$0xf]
    %v150 = vld [vmem:[%s4 + $0x18] sm:$0xf]
    %v151 = vld [vmem:[%s4 + $0x1c] sm:$0xf]
    %v152 = vld [vmem:[%s4 + $0x20] sm:$0xf]
    %v153 = vld [vmem:[%s4 + $0x24] sm:$0xf]
    %v154 = vld [vmem:[%s4 + $0x28] sm:$0xf]
    %v155 = vld [vmem:[%s4 + $0x2c] sm:$0xf]
    %v156 = vld [vmem:[%s4 + $0x30] sm:$0xf]
    %v157 = vld [vmem:[%s4 + $0x34] sm:$0xf]
    %v158 = vld [vmem:[%s4 + $0x38] sm:$0xf]
    %v159 = vld [vmem:[%s4 + $0x3c] sm:$0xf]
    %v192 = vunpack.c.l.b16 %v112
    %v193 = vunpack.c.l.b16 %v113
    %v194 = vunpack.c.l.b16 %v114
    %v195 = vunpack.c.l.b16 %v115
    %v196 = vunpack.c.l.b16 %v116
    %v197 = vunpack.c.l.b16 %v117
    %v198 = vunpack.c.l.b16 %v118
    %v199 = vunpack.c.l.b16 %v119
    %v200 = vunpack.c.l.b16 %v120
    %v201 = vunpack.c.l.b16 %v121
    %v202 = vunpack.c.l.b16 %v122
    %v203 = vunpack.c.l.b16 %v123
    %v204 = vunpack.c.l.b16 %v124
    %v205 = vunpack.c.l.b16 %v125
    %v206 = vunpack.c.l.b16 %v126
    %v207 = vunpack.c.l.b16 %v127
    %v208 = vunpack.c.l.b16 %v128
    %v209 = vunpack.c.l.b16 %v129
    %v210 = vunpack.c.l.b16 %v130
    %v211 = vunpack.c.l.b16 %v131
    %v212 = vunpack.c.l.b16 %v132
    %v213 = vunpack.c.l.b16 %v133
    %v214 = vunpack.c.l.b16 %v134
    %v215 = vunpack.c.l.b16 %v135
    %v216 = vunpack.c.l.b16 %v136
    %v217 = vunpack.c.l.b16 %v137
    %v218 = vunpack.c.l.b16 %v138
    %v219 = vunpack.c.l.b16 %v139
    %v220 = vunpack.c.l.b16 %v140
    %v221 = vunpack.c.l.b16 %v141
    %v222 = vunpack.c.l.b16 %v142
    %v223 = vunpack.c.l.b16 %v143
    %v224 = vpack.c.b16 %v193, %v192
    %v225 = vpack.c.b16 %v195, %v194
    %v226 = vpack.c.b16 %v197, %v196
    %v227 = vpack.c.b16 %v199, %v198
    %v228 = vpack.c.b16 %v201, %v200
    %v229 = vpack.c.b16 %v203, %v202
    %v230 = vpack.c.b16 %v205, %v204
    %v231 = vpack.c.b16 %v207, %v206
    %v232 = vpack.c.b16 %v209, %v208
    %v233 = vpack.c.b16 %v211, %v210
    %v234 = vpack.c.b16 %v213, %v212
    %v235 = vpack.c.b16 %v215, %v214
    %v236 = vpack.c.b16 %v217, %v216
    %v237 = vpack.c.b16 %v219, %v218
    %v238 = vpack.c.b16 %v221, %v220
    %v239 = vpack.c.b16 %v223, %v222
    %v272 = vunpack.c.l.b16 %v144
    %v273 = vunpack.c.l.b16 %v145
    %v274 = vunpack.c.l.b16 %v146
    %v275 = vunpack.c.l.b16 %v147
    %v276 = vunpack.c.l.b16 %v148
    %v277 = vunpack.c.l.b16 %v149
    %v278 = vunpack.c.l.b16 %v150
    %v279 = vunpack.c.l.b16 %v151
    %v280 = vunpack.c.l.b16 %v152
    %v281 = vunpack.c.l.b16 %v153
    %v282 = vunpack.c.l.b16 %v154
    %v283 = vunpack.c.l.b16 %v155
    %v284 = vunpack.c.l.b16 %v156
    %v285 = vunpack.c.l.b16 %v157
    %v286 = vunpack.c.l.b16 %v158
    %v287 = vunpack.c.l.b16 %v159
    %v288 = vpack.c.b16 %v273, %v272
    %v289 = vpack.c.b16 %v275, %v274
    %v290 = vpack.c.b16 %v277, %v276
    %v291 = vpack.c.b16 %v279, %v278
    %v292 = vpack.c.b16 %v281, %v280
    %v293 = vpack.c.b16 %v283, %v282
    %v294 = vpack.c.b16 %v285, %v284
    %v295 = vpack.c.b16 %v287, %v286
    %304 = vmatprep.subr.bf16.mxu0 0
    %305 = vmatpush1.bf16.msra.mxu0 %v288
    %306 = vmatprep.subr.bf16.mxu0 0
    %307 = vmatpush1.bf16.msra.mxu0 %v289
    %308 = vmatprep.subr.bf16.mxu0 0
    %309 = vmatpush1.bf16.msra.mxu0 %v290
    %310 = vmatprep.subr.bf16.mxu0 0
    %311 = vmatpush1.bf16.msra.mxu0 %v291
    %312 = vmatprep.subr.bf16.mxu0 0
    %313 = vmatpush1.bf16.msra.mxu0 %v292
    %314 = vmatprep.subr.bf16.mxu0 0
    %315 = vmatpush1.bf16.msra.mxu0 %v293
    %316 = vmatprep.subr.bf16.mxu0 0
    %317 = vmatpush1.bf16.msra.mxu0 %v294
    %318 = vmatprep.subr.bf16.mxu0 0
    %319 = vmatpush1.bf16.msra.mxu0 %v295
    %320 = vmatprep.subr.bf16.mxu0 0
    %321 = vmatpush1.bf16.msra.mxu0 0
    %322 = vmatprep.subr.bf16.mxu0 0
    %323 = vmatpush1.bf16.msra.mxu0 0
    %324 = vmatprep.subr.bf16.mxu0 0
    %325 = vmatpush1.bf16.msra.mxu0 0
    %326 = vmatprep.subr.bf16.mxu0 0
    %327 = vmatpush1.bf16.msra.mxu0 0
    %328 = vmatprep.subr.bf16.mxu0 0
    %329 = vmatpush1.bf16.msra.mxu0 0
    %330 = vmatprep.subr.bf16.mxu0 0
    %331 = vmatpush1.bf16.msra.mxu0 0
    %332 = vmatprep.subr.bf16.mxu0 0
    %333 = vmatpush1.bf16.msra.mxu0 0
    %334 = vmatprep.subr.bf16.mxu0 0
    %335 = vmatpush1.bf16.msra.mxu0 0
    %336 = vmatprep.mubr.bf16.mxu0 0
    %337 = vmatmul.mubr.bf16.gmra.mrb[0].mxu0 %v224
    %v338 = vpop.f32.mrb[0].mxu0
    %v339 = vadd.f32 0.0, %v338
    %v340 = vpop.f32.mrb[0].mxu0
    %v341 = vpop.f32.mrb[0].mxu0
    %v342 = vadd.f32 0.0, %v341
    %v343 = vpop.f32.mrb[0].mxu0
    %344 = vmatprep.mubr.bf16.mxu0 0
    %345 = vmatmul.mubr.bf16.gmra.mrb[0].mxu0 %v225
    %v346 = vpop.f32.mrb[0].mxu0
    %v347 = vadd.f32 0.0, %v346
    %v348 = vpop.f32.mrb[0].mxu0
    %v349 = vpop.f32.mrb[0].mxu0
    %v350 = vadd.f32 0.0, %v349
    %v351 = vpop.f32.mrb[0].mxu0
    %352 = vmatprep.mubr.bf16.mxu0 0
    %353 = vmatmul.mubr.bf16.gmra.mrb[0].mxu0 %v226
    %v354 = vpop.f32.mrb[0].mxu0
    %v355 = vadd.f32 0.0, %v354
    %v356 = vpop.f32.mrb[0].mxu0
    %v357 = vpop.f32.mrb[0].mxu0
    %v358 = vadd.f32 0.0, %v357
    %v359 = vpop.f32.mrb[0].mxu0
    %360 = vmatprep.mubr.bf16.mxu0 0
    %361 = vmatmul.mubr.bf16.gmra.mrb[0].mxu0 %v227
    %v362 = vpop.f32.mrb[0].mxu0
    %v363 = vadd.f32 0.0, %v362
    %v364 = vpop.f32.mrb[0].mxu0
    %v365 = vpop.f32.mrb[0].mxu0
    %v366 = vadd.f32 0.0, %v365
    %v367 = vpop.f32.mrb[0].mxu0
    %368 = vmatprep.mubr.bf16.mxu0 0
    %369 = vmatmul.mubr.bf16.gmra.mrb[0].mxu0 %v228
    %v370 = vpop.f32.mrb[0].mxu0
    %v371 = vadd.f32 0.0, %v370
    %v372 = vpop.f32.mrb[0].mxu0
    %v373 = vpop.f32.mrb[0].mxu0
    %v374 = vadd.f32 0.0, %v373
    %v375 = vpop.f32.mrb[0].mxu0
    %376 = vmatprep.mubr.bf16.mxu0 0
    %377 = vmatmul.mubr.bf16.gmra.mrb[0].mxu0 %v229
    %v378 = vpop.f32.mrb[0].mxu0
    %v379 = vadd.f32 0.0, %v378
    %v380 = vpop.f32.mrb[0].mxu0
    %v381 = vpop.f32.mrb[0].mxu0
    %v382 = vadd.f32 0.0, %v381
    %v383 = vpop.f32.mrb[0].mxu0
    %384 = vmatprep.mubr.bf16.mxu0 0
    %385 = vmatmul.mubr.bf16.gmra.mrb[0].mxu0 %v230
    %v386 = vpop.f32.mrb[0].mxu0
    %v387 = vadd.f32 0.0, %v386
    %v388 = vpop.f32.mrb[0].mxu0
    %v389 = vpop.f32.mrb[0].mxu0
    %v390 = vadd.f32 0.0, %v389
    %v391 = vpop.f32.mrb[0].mxu0
    %392 = vmatprep.mubr.bf16.mxu0 0
    %393 = vmatmul.mubr.bf16.gmra.mrb[0].mxu0 %v231
    %v394 = vpop.f32.mrb[0].mxu0
    %v395 = vadd.f32 0.0, %v394
    %v396 = vpop.f32.mrb[0].mxu0
    %v397 = vpop.f32.mrb[0].mxu0
    %v398 = vadd.f32 0.0, %v397
    %v399 = vpop.f32.mrb[0].mxu0
    %400 = vmatprep.mubr.bf16.mxu0 0
    %401 = vmatmul.mubr.bf16.gmra.mrb[0].mxu0 %v232
    %v402 = vpop.f32.mrb[0].mxu0
    %v403 = vadd.f32 0.0, %v402
    %v404 = vpop.f32.mrb[0].mxu0
    %v405 = vpop.f32.mrb[0].mxu0
    %v406 = vadd.f32 0.0, %v405
    %v407 = vpop.f32.mrb[0].mxu0
    %408 = vmatprep.mubr.bf16.mxu0 0
    %409 = vmatmul.mubr.bf16.gmra.mrb[0].mxu0 %v233
    %v410 = vpop.f32.mrb[0].mxu0
    %v411 = vadd.f32 0.0, %v410
    %v412 = vpop.f32.mrb[0].mxu0
    %v413 = vpop.f32.mrb[0].mxu0
    %v414 = vadd.f32 0.0, %v413
    %v415 = vpop.f32.mrb[0].mxu0
    %416 = vmatprep.mubr.bf16.mxu0 0
    %417 = vmatmul.mubr.bf16.gmra.mrb[0].mxu0 %v234
    %v418 = vpop.f32.mrb[0].mxu0
    %v419 = vadd.f32 0.0, %v418
    %v420 = vpop.f32.mrb[0].mxu0
    %v421 = vpop.f32.mrb[0].mxu0
    %v422 = vadd.f32 0.0, %v421
    %v423 = vpop.f32.mrb[0].mxu0
    %424 = vmatprep.mubr.bf16.mxu0 0
    %425 = vmatmul.mubr.bf16.gmra.mrb[0].mxu0 %v235
    %v426 = vpop.f32.mrb[0].mxu0
    %v427 = vadd.f32 0.0, %v426
    %v428 = vpop.f32.mrb[0].mxu0
    %v429 = vpop.f32.mrb[0].mxu0
    %v430 = vadd.f32 0.0, %v429
    %v431 = vpop.f32.mrb[0].mxu0
    %432 = vmatprep.mubr.bf16.mxu0 0
    %433 = vmatmul.mubr.bf16.gmra.mrb[0].mxu0 %v236
    %v434 = vpop.f32.mrb[0].mxu0
    %v435 = vadd.f32 0.0, %v434
    %v436 = vpop.f32.mrb[0].mxu0
    %v437 = vpop.f32.mrb[0].mxu0
    %v438 = vadd.f32 0.0, %v437
    %v439 = vpop.f32.mrb[0].mxu0
    %440 = vmatprep.mubr.bf16.mxu0 0
    %441 = vmatmul.mubr.bf16.gmra.mrb[0].mxu0 %v237
    %v442 = vpop.f32.mrb[0].mxu0
    %v443 = vadd.f32 0.0, %v442
    %v444 = vpop.f32.mrb[0].mxu0
    %v445 = vpop.f32.mrb[0].mxu0
    %v446 = vadd.f32 0.0, %v445
    %v447 = vpop.f32.mrb[0].mxu0
    %448 = vmatprep.mubr.bf16.mxu0 0
    %449 = vmatmul.mubr.bf16.gmra.mrb[0].mxu0 %v238
    %v450 = vpop.f32.mrb[0].mxu0
    %v451 = vadd.f32 0.0, %v450
    %v452 = vpop.f32.mrb[0].mxu0
    %v453 = vpop.f32.mrb[0].mxu0
    %v454 = vadd.f32 0.0, %v453
    %v455 = vpop.f32.mrb[0].mxu0
    %456 = vmatprep.mubr.bf16.mxu0 0
    %457 = vmatmul.mubr.bf16.gmra.mrb[0].mxu0 %v239
    %v458 = vpop.f32.mrb[0].mxu0
    %v459 = vadd.f32 0.0, %v458
    %v460 = vpop.f32.mrb[0].mxu0
    %v461 = vpop.f32.mrb[0].mxu0
    %v462 = vadd.f32 0.0, %v461
    %v463 = vpop.f32.mrb[0].mxu0
    %464 = vdwg.mxu0
    %v465 = vld [vmem:[#allocation2] sm:$0xff]
    %v466 = vld [vmem:[#allocation2 + $0x8] sm:$0xff]
    %v467 = vld [vmem:[#allocation2 + $0x10] sm:$0xff]
    %v468 = vld [vmem:[#allocation2 + $0x18] sm:$0xff]
    %v469 = vld [vmem:[#allocation2 + $0x20] sm:$0xff]
    %v470 = vld [vmem:[#allocation2 + $0x28] sm:$0xff]
    %v471 = vld [vmem:[#allocation2 + $0x30] sm:$0xff]
    %v472 = vld [vmem:[#allocation2 + $0x38] sm:$0xff]
    %v473 = vld [vmem:[#allocation2 + $0x40] sm:$0xff]
    %v474 = vld [vmem:[#allocation2 + $0x48] sm:$0xff]
    %v475 = vld [vmem:[#allocation2 + $0x50] sm:$0xff]
    %v476 = vld [vmem:[#allocation2 + $0x58] sm:$0xff]
    %v477 = vld [vmem:[#allocation2 + $0x60] sm:$0xff]
    %v478 = vld [vmem:[#allocation2 + $0x68] sm:$0xff]
    %v479 = vld [vmem:[#allocation2 + $0x70] sm:$0xff]
    %v480 = vld [vmem:[#allocation2 + $0x78] sm:$0xff]
    %v481 = vld [vmem:[#allocation2 + $0x80] sm:$0xff]
    %v482 = vld [vmem:[#allocation2 + $0x88] sm:$0xff]
    %v483 = vld [vmem:[#allocation2 + $0x90] sm:$0xff]
    %v484 = vld [vmem:[#allocation2 + $0x98] sm:$0xff]
    %v485 = vld [vmem:[#allocation2 + $0xa0] sm:$0xff]
    %v486 = vld [vmem:[#allocation2 + $0xa8] sm:$0xff]
    %v487 = vld [vmem:[#allocation2 + $0xb0] sm:$0xff]
    %v488 = vld [vmem:[#allocation2 + $0xb8] sm:$0xff]
    %v489 = vld [vmem:[#allocation2 + $0xc0] sm:$0xff]
    %v490 = vld [vmem:[#allocation2 + $0xc8] sm:$0xff]
    %v491 = vld [vmem:[#allocation2 + $0xd0] sm:$0xff]
    %v492 = vld [vmem:[#allocation2 + $0xd8] sm:$0xff]
    %v493 = vld [vmem:[#allocation2 + $0xe0] sm:$0xff]
    %v494 = vld [vmem:[#allocation2 + $0xe8] sm:$0xff]
    %v495 = vld [vmem:[#allocation2 + $0xf0] sm:$0xff]
    %v496 = vld [vmem:[#allocation2 + $0xf8] sm:$0xff]
    %v497 = vld [vmem:[%s55] sm:$0xff]
    %v498 = vld [vmem:[%s55 + $0x8] sm:$0xff]
    %v499 = vld [vmem:[%s55 + $0x10] sm:$0xff]
    %v500 = vld [vmem:[%s55 + $0x18] sm:$0xff]
    %v501 = vld [vmem:[%s55 + $0x20] sm:$0xff]
    %v502 = vld [vmem:[%s55 + $0x28] sm:$0xff]
    %v503 = vld [vmem:[%s55 + $0x30] sm:$0xff]
    %v504 = vld [vmem:[%s55 + $0x38] sm:$0xff]
    %v505 = vld [vmem:[%s55 + $0x40] sm:$0xff]
    %v506 = vld [vmem:[%s55 + $0x48] sm:$0xff]
    %v507 = vld [vmem:[%s55 + $0x50] sm:$0xff]
    %v508 = vld [vmem:[%s55 + $0x58] sm:$0xff]
    %v509 = vld [vmem:[%s55 + $0x60] sm:$0xff]
    %v510 = vld [vmem:[%s55 + $0x68] sm:$0xff]
    %v511 = vld [vmem:[%s55 + $0x70] sm:$0xff]
    %v512 = vld [vmem:[%s55 + $0x78] sm:$0xff]
    %v513 = vld [vmem:[%s55 + $0x80] sm:$0xff]
    %v514 = vld [vmem:[%s55 + $0x88] sm:$0xff]
    %v515 = vld [vmem:[%s55 + $0x90] sm:$0xff]
    %v516 = vld [vmem:[%s55 + $0x98] sm:$0xff]
    %v517 = vld [vmem:[%s55 + $0xa0] sm:$0xff]
    %v518 = vld [vmem:[%s55 + $0xa8] sm:$0xff]
    %v519 = vld [vmem:[%s55 + $0xb0] sm:$0xff]
    %v520 = vld [vmem:[%s55 + $0xb8] sm:$0xff]
    %v521 = vld [vmem:[%s55 + $0xc0] sm:$0xff]
    %v522 = vld [vmem:[%s55 + $0xc8] sm:$0xff]
    %v523 = vld [vmem:[%s55 + $0xd0] sm:$0xff]
    %v524 = vld [vmem:[%s55 + $0xd8] sm:$0xff]
    %v525 = vld [vmem:[%s55 + $0xe0] sm:$0xff]
    %v526 = vld [vmem:[%s55 + $0xe8] sm:$0xff]
    %v527 = vld [vmem:[%s55 + $0xf0] sm:$0xff]
    %v528 = vld [vmem:[%s55 + $0xf8] sm:$0xff]
    %v529 = vpack.c.bf16 %v342, %v339
    %v530 = vpack.c.bf16 %v350, %v347
    %v531 = vpack.c.bf16 %v358, %v355
    %v532 = vpack.c.bf16 %v366, %v363
    %v533 = vpack.c.bf16 %v374, %v371
    %v534 = vpack.c.bf16 %v382, %v379
    %v535 = vpack.c.bf16 %v390, %v387
    %v536 = vpack.c.bf16 %v398, %v395
    %v537 = vpack.c.bf16 %v406, %v403
    %v538 = vpack.c.bf16 %v414, %v411
    %v539 = vpack.c.bf16 %v422, %v419
    %v540 = vpack.c.bf16 %v430, %v427
    %v541 = vpack.c.bf16 %v438, %v435
    %v542 = vpack.c.bf16 %v446, %v443
    %v543 = vpack.c.bf16 %v454, %v451
    %v544 = vpack.c.bf16 %v462, %v459
    %v577 = vunpack.c.l.b16 %v497
    %v578 = vunpack.c.h.b16 %v497
    %v579 = vunpack.c.l.b16 %v498
    %v580 = vunpack.c.h.b16 %v498
    %v581 = vunpack.c.l.b16 %v499
    %v582 = vunpack.c.h.b16 %v499
    %v583 = vunpack.c.l.b16 %v500
    %v584 = vunpack.c.h.b16 %v500
    %v585 = vunpack.c.l.b16 %v501
    %v586 = vunpack.c.h.b16 %v501
    %v587 = vunpack.c.l.b16 %v502
    %v588 = vunpack.c.h.b16 %v502
    %v589 = vunpack.c.l.b16 %v503
    %v590 = vunpack.c.h.b16 %v503
    %v591 = vunpack.c.l.b16 %v504
    %v592 = vunpack.c.h.b16 %v504
    %v593 = vunpack.c.l.b16 %v505
    %v594 = vunpack.c.h.b16 %v505
    %v595 = vunpack.c.l.b16 %v506
    %v596 = vunpack.c.h.b16 %v506
    %v597 = vunpack.c.l.b16 %v507
    %v598 = vunpack.c.h.b16 %v507
    %v599 = vunpack.c.l.b16 %v508
    %v600 = vunpack.c.h.b16 %v508
    %v601 = vunpack.c.l.b16 %v509
    %v602 = vunpack.c.h.b16 %v509
    %v603 = vunpack.c.l.b16 %v510
    %v604 = vunpack.c.h.b16 %v510
    %v605 = vunpack.c.l.b16 %v511
    %v606 = vunpack.c.h.b16 %v511
    %v607 = vunpack.c.l.b16 %v512
    %v608 = vunpack.c.h.b16 %v512
    %v609 = vunpack.c.l.b16 %v513
    %v610 = vunpack.c.h.b16 %v513
    %v611 = vunpack.c.l.b16 %v514
    %v612 = vunpack.c.h.b16 %v514
    %v613 = vunpack.c.l.b16 %v515
    %v614 = vunpack.c.h.b16 %v515
    %v615 = vunpack.c.l.b16 %v516
    %v616 = vunpack.c.h.b16 %v516
    %v617 = vunpack.c.l.b16 %v517
    %v618 = vunpack.c.h.b16 %v517
    %v619 = vunpack.c.l.b16 %v518
    %v620 = vunpack.c.h.b16 %v518
    %v621 = vunpack.c.l.b16 %v519
    %v622 = vunpack.c.h.b16 %v519
    %v623 = vunpack.c.l.b16 %v520
    %v624 = vunpack.c.h.b16 %v520
    %v625 = vunpack.c.l.b16 %v521
    %v626 = vunpack.c.h.b16 %v521
    %v627 = vunpack.c.l.b16 %v522
    %v628 = vunpack.c.h.b16 %v522
    %v629 = vunpack.c.l.b16 %v523
    %v630 = vunpack.c.h.b16 %v523
    %v631 = vunpack.c.l.b16 %v524
    %v632 = vunpack.c.h.b16 %v524
    %v633 = vunpack.c.l.b16 %v525
    %v634 = vunpack.c.h.b16 %v525
    %v635 = vunpack.c.l.b16 %v526
    %v636 = vunpack.c.h.b16 %v526
    %v637 = vunpack.c.l.b16 %v527
    %v638 = vunpack.c.h.b16 %v527
    %v639 = vunpack.c.l.b16 %v528
    %v640 = vunpack.c.h.b16 %v528
    %v641 = vpack.c.b16 %v579, %v577
    %v642 = vpack.c.b16 %v580, %v578
    %v643 = vpack.c.b16 %v583, %v581
    %v644 = vpack.c.b16 %v584, %v582
    %v645 = vpack.c.b16 %v587, %v585
    %v646 = vpack.c.b16 %v588, %v586
    %v647 = vpack.c.b16 %v591, %v589
    %v648 = vpack.c.b16 %v592, %v590
    %v649 = vpack.c.b16 %v595, %v593
    %v650 = vpack.c.b16 %v596, %v594
    %v651 = vpack.c.b16 %v599, %v597
    %v652 = vpack.c.b16 %v600, %v598
    %v653 = vpack.c.b16 %v603, %v601
    %v654 = vpack.c.b16 %v604, %v602
    %v655 = vpack.c.b16 %v607, %v605
    %v656 = vpack.c.b16 %v608, %v606
    %v657 = vpack.c.b16 %v611, %v609
    %v658 = vpack.c.b16 %v612, %v610
    %v659 = vpack.c.b16 %v615, %v613
    %v660 = vpack.c.b16 %v616, %v614
    %v661 = vpack.c.b16 %v619, %v617
    %v662 = vpack.c.b16 %v620, %v618
    %v663 = vpack.c.b16 %v623, %v621
    %v664 = vpack.c.b16 %v624, %v622
    %v665 = vpack.c.b16 %v627, %v625
    %v666 = vpack.c.b16 %v628, %v626
    %v667 = vpack.c.b16 %v631, %v629
    %v668 = vpack.c.b16 %v632, %v630
    %v669 = vpack.c.b16 %v635, %v633
    %v670 = vpack.c.b16 %v636, %v634
    %v671 = vpack.c.b16 %v639, %v637
    %v672 = vpack.c.b16 %v640, %v638
    %705 = vmatprep.subr.bf16.mxu0 0
    %706 = vmatpush1.bf16.msra.mxu0 %v529
    %707 = vmatprep.subr.bf16.mxu0 0
    %708 = vmatpush1.bf16.msra.mxu0 %v530
    %709 = vmatprep.subr.bf16.mxu0 0
    %710 = vmatpush1.bf16.msra.mxu0 %v531
    %711 = vmatprep.subr.bf16.mxu0 0
    %712 = vmatpush1.bf16.msra.mxu0 %v532
    %713 = vmatprep.subr.bf16.mxu0 0
    %714 = vmatpush1.bf16.msra.mxu0 %v533
    %715 = vmatprep.subr.bf16.mxu0 0
    %716 = vmatpush1.bf16.msra.mxu0 %v534
    %717 = vmatprep.subr.bf16.mxu0 0
    %718 = vmatpush1.bf16.msra.mxu0 %v535
    %719 = vmatprep.subr.bf16.mxu0 0
    %720 = vmatpush1.bf16.msra.mxu0 %v536
    %721 = vmatprep.subr.bf16.mxu0 0
    %722 = vmatpush1.bf16.msra.mxu0 %v537
    %723 = vmatprep.subr.bf16.mxu0 0
    %724 = vmatpush1.bf16.msra.mxu0 %v538
    %725 = vmatprep.subr.bf16.mxu0 0
    %726 = vmatpush1.bf16.msra.mxu0 %v539
    %727 = vmatprep.subr.bf16.mxu0 0
    %728 = vmatpush1.bf16.msra.mxu0 %v540
    %729 = vmatprep.subr.bf16.mxu0 0
    %730 = vmatpush1.bf16.msra.mxu0 %v541
    %731 = vmatprep.subr.bf16.mxu0 0
    %732 = vmatpush1.bf16.msra.mxu0 %v542
    %733 = vmatprep.subr.bf16.mxu0 0
    %734 = vmatpush1.bf16.msra.mxu0 %v543
    %735 = vmatprep.subr.bf16.mxu0 0
    %736 = vmatpush1.bf16.msra.mxu0 %v544
    %737 = vmatprep.mubr.bf16.mxu0 %v642
    %738 = vmatmul.mubr.bf16.gmra.mrb[0].mxu0 %v641
    %v739 = vpop.f32.mrb[0].mxu0
    %v740 = vadd.f32 0.0, %v739
    %v741 = vpop.f32.mrb[0].mxu0
    %v742 = vpop.f32.mrb[0].mxu0
    %v743 = vadd.f32 0.0, %v742
    %v744 = vpop.f32.mrb[0].mxu0
    %745 = vmatprep.mubr.bf16.mxu0 %v644
    %746 = vmatmul.mubr.bf16.gmra.mrb[0].mxu0 %v643
    %v747 = vpop.f32.mrb[0].mxu0
    %v748 = vadd.f32 0.0, %v747
    %v749 = vpop.f32.mrb[0].mxu0
    %v750 = vpop.f32.mrb[0].mxu0
    %v751 = vadd.f32 0.0, %v750
    %v752 = vpop.f32.mrb[0].mxu0
    %753 = vmatprep.mubr.bf16.mxu0 %v646
    %754 = vmatmul.mubr.bf16.gmra.mrb[0].mxu0 %v645
    %v755 = vpop.f32.mrb[0].mxu0
    %v756 = vadd.f32 0.0, %v755
    %v757 = vpop.f32.mrb[0].mxu0
    %v758 = vpop.f32.mrb[0].mxu0
    %v759 = vadd.f32 0.0, %v758
    %v760 = vpop.f32.mrb[0].mxu0
    %761 = vmatprep.mubr.bf16.mxu0 %v648
    %762 = vmatmul.mubr.bf16.gmra.mrb[0].mxu0 %v647
    %v763 = vpop.f32.mrb[0].mxu0
    %v764 = vadd.f32 0.0, %v763
    %v765 = vpop.f32.mrb[0].mxu0
    %v766 = vpop.f32.mrb[0].mxu0
    %v767 = vadd.f32 0.0, %v766
    %v768 = vpop.f32.mrb[0].mxu0
    %769 = vmatprep.mubr.bf16.mxu0 %v650
    %770 = vmatmul.mubr.bf16.gmra.mrb[0].mxu0 %v649
    %v771 = vpop.f32.mrb[0].mxu0
    %v772 = vadd.f32 0.0, %v771
    %v773 = vpop.f32.mrb[0].mxu0
    %v774 = vpop.f32.mrb[0].mxu0
    %v775 = vadd.f32 0.0, %v774
    %v776 = vpop.f32.mrb[0].mxu0
    %777 = vmatprep.mubr.bf16.mxu0 %v652
    %778 = vmatmul.mubr.bf16.gmra.mrb[0].mxu0 %v651
    %v779 = vpop.f32.mrb[0].mxu0
    %v780 = vadd.f32 0.0, %v779
    %v781 = vpop.f32.mrb[0].mxu0
    %v782 = vpop.f32.mrb[0].mxu0
    %v783 = vadd.f32 0.0, %v782
    %v784 = vpop.f32.mrb[0].mxu0
    %785 = vmatprep.mubr.bf16.mxu0 %v654
    %786 = vmatmul.mubr.bf16.gmra.mrb[0].mxu0 %v653
    %v787 = vpop.f32.mrb[0].mxu0
    %v788 = vadd.f32 0.0, %v787
    %v789 = vpop.f32.mrb[0].mxu0
    %v790 = vpop.f32.mrb[0].mxu0
    %v791 = vadd.f32 0.0, %v790
    %v792 = vpop.f32.mrb[0].mxu0
    %793 = vmatprep.mubr.bf16.mxu0 %v656
    %794 = vmatmul.mubr.bf16.gmra.mrb[0].mxu0 %v655
    %v795 = vpop.f32.mrb[0].mxu0
    %v796 = vadd.f32 0.0, %v795
    %v797 = vpop.f32.mrb[0].mxu0
    %v798 = vpop.f32.mrb[0].mxu0
    %v799 = vadd.f32 0.0, %v798
    %v800 = vpop.f32.mrb[0].mxu0
    %801 = vmatprep.mubr.bf16.mxu0 %v658
    %802 = vmatmul.mubr.bf16.gmra.mrb[0].mxu0 %v657
    %v803 = vpop.f32.mrb[0].mxu0
    %v804 = vadd.f32 0.0, %v803
    %v805 = vpop.f32.mrb[0].mxu0
    %v806 = vpop.f32.mrb[0].mxu0
    %v807 = vadd.f32 0.0, %v806
    %v808 = vpop.f32.mrb[0].mxu0
    %809 = vmatprep.mubr.bf16.mxu0 %v660
    %810 = vmatmul.mubr.bf16.gmra.mrb[0].mxu0 %v659
    %v811 = vpop.f32.mrb[0].mxu0
    %v812 = vadd.f32 0.0, %v811
    %v813 = vpop.f32.mrb[0].mxu0
    %v814 = vpop.f32.mrb[0].mxu0
    %v815 = vadd.f32 0.0, %v814
    %v816 = vpop.f32.mrb[0].mxu0
    %817 = vmatprep.mubr.bf16.mxu0 %v662
    %818 = vmatmul.mubr.bf16.gmra.mrb[0].mxu0 %v661
    %v819 = vpop.f32.mrb[0].mxu0
    %v820 = vadd.f32 0.0, %v819
    %v821 = vpop.f32.mrb[0].mxu0
    %v822 = vpop.f32.mrb[0].mxu0
    %v823 = vadd.f32 0.0, %v822
    %v824 = vpop.f32.mrb[0].mxu0
    %825 = vmatprep.mubr.bf16.mxu0 %v664
    %826 = vmatmul.mubr.bf16.gmra.mrb[0].mxu0 %v663
    %v827 = vpop.f32.mrb[0].mxu0
    %v828 = vadd.f32 0.0, %v827
    %v829 = vpop.f32.mrb[0].mxu0
    %v830 = vpop.f32.mrb[0].mxu0
    %v831 = vadd.f32 0.0, %v830
    %v832 = vpop.f32.mrb[0].mxu0
    %833 = vmatprep.mubr.bf16.mxu0 %v666
    %834 = vmatmul.mubr.bf16.gmra.mrb[0].mxu0 %v665
    %v835 = vpop.f32.mrb[0].mxu0
    %v836 = vadd.f32 0.0, %v835
    %v837 = vpop.f32.mrb[0].mxu0
    %v838 = vpop.f32.mrb[0].mxu0
    %v839 = vadd.f32 0.0, %v838
    %v840 = vpop.f32.mrb[0].mxu0
    %841 = vmatprep.mubr.bf16.mxu0 %v668
    %842 = vmatmul.mubr.bf16.gmra.mrb[0].mxu0 %v667
    %v843 = vpop.f32.mrb[0].mxu0
    %v844 = vadd.f32 0.0, %v843
    %v845 = vpop.f32.mrb[0].mxu0
    %v846 = vpop.f32.mrb[0].mxu0
    %v847 = vadd.f32 0.0, %v846
    %v848 = vpop.f32.mrb[0].mxu0
    %849 = vmatprep.mubr.bf16.mxu0 %v670
    %850 = vmatmul.mubr.bf16.gmra.mrb[0].mxu0 %v669
    %v851 = vpop.f32.mrb[0].mxu0
    %v852 = vadd.f32 0.0, %v851
    %v853 = vpop.f32.mrb[0].mxu0
    %v854 = vpop.f32.mrb[0].mxu0
    %v855 = vadd.f32 0.0, %v854
    %v856 = vpop.f32.mrb[0].mxu0
    %857 = vmatprep.mubr.bf16.mxu0 %v672
    %858 = vmatmul.mubr.bf16.gmra.mrb[0].mxu0 %v671
    %v859 = vpop.f32.mrb[0].mxu0
    %v860 = vadd.f32 0.0, %v859
    %v861 = vpop.f32.mrb[0].mxu0
    %v862 = vpop.f32.mrb[0].mxu0
    %v863 = vadd.f32 0.0, %v862
    %v864 = vpop.f32.mrb[0].mxu0
    %865 = vdwg.mxu0
    %v866 = vadd.f32 %v465, %v740
    %v867 = vadd.f32 %v466, %v743
    %v868 = vadd.f32 %v467, %v748
    %v869 = vadd.f32 %v468, %v751
    %v870 = vadd.f32 %v469, %v756
    %v871 = vadd.f32 %v470, %v759
    %v872 = vadd.f32 %v471, %v764
    %v873 = vadd.f32 %v472, %v767
    %v874 = vadd.f32 %v473, %v772
    %v875 = vadd.f32 %v474, %v775
    %v876 = vadd.f32 %v475, %v780
    %v877 = vadd.f32 %v476, %v783
    %v878 = vadd.f32 %v477, %v788
    %v879 = vadd.f32 %v478, %v791
    %v880 = vadd.f32 %v479, %v796
    %v881 = vadd.f32 %v480, %v799
    %v882 = vadd.f32 %v481, %v804
    %v883 = vadd.f32 %v482, %v807
    %v884 = vadd.f32 %v483, %v812
    %v885 = vadd.f32 %v484, %v815
    %v886 = vadd.f32 %v485, %v820
    %v887 = vadd.f32 %v486, %v823
    %v888 = vadd.f32 %v487, %v828
    %v889 = vadd.f32 %v488, %v831
    %v890 = vadd.f32 %v489, %v836
    %v891 = vadd.f32 %v490, %v839
    %v892 = vadd.f32 %v491, %v844
    %v893 = vadd.f32 %v492, %v847
    %v894 = vadd.f32 %v493, %v852
    %v895 = vadd.f32 %v494, %v855
    %v896 = vadd.f32 %v495, %v860
    %v897 = vadd.f32 %v496, %v863
    %898 = vst [vmem:[#allocation2] sm:$0xff] %v866
    %899 = vst [vmem:[#allocation2 + $0x8] sm:$0xff] %v867
    %900 = vst [vmem:[#allocation2 + $0x10] sm:$0xff] %v868
    %901 = vst [vmem:[#allocation2 + $0x18] sm:$0xff] %v869
    %902 = vst [vmem:[#allocation2 + $0x20] sm:$0xff] %v870
    %903 = vst [vmem:[#allocation2 + $0x28] sm:$0xff] %v871
    %904 = vst [vmem:[#allocation2 + $0x30] sm:$0xff] %v872
    %905 = vst [vmem:[#allocation2 + $0x38] sm:$0xff] %v873
    %906 = vst [vmem:[#allocation2 + $0x40] sm:$0xff] %v874
    %907 = vst [vmem:[#allocation2 + $0x48] sm:$0xff] %v875
    %908 = vst [vmem:[#allocation2 + $0x50] sm:$0xff] %v876
    %909 = vst [vmem:[#allocation2 + $0x58] sm:$0xff] %v877
    %910 = vst [vmem:[#allocation2 + $0x60] sm:$0xff] %v878
    %911 = vst [vmem:[#allocation2 + $0x68] sm:$0xff] %v879
    %912 = vst [vmem:[#allocation2 + $0x70] sm:$0xff] %v880
    %913 = vst [vmem:[#allocation2 + $0x78] sm:$0xff] %v881
    %914 = vst [vmem:[#allocation2 + $0x80] sm:$0xff] %v882
    %915 = vst [vmem:[#allocation2 + $0x88] sm:$0xff] %v883
    %916 = vst [vmem:[#allocation2 + $0x90] sm:$0xff] %v884
    %917 = vst [vmem:[#allocation2 + $0x98] sm:$0xff] %v885
    %918 = vst [vmem:[#allocation2 + $0xa0] sm:$0xff] %v886
    %919 = vst [vmem:[#allocation2 + $0xa8] sm:$0xff] %v887
    %920 = vst [vmem:[#allocation2 + $0xb0] sm:$0xff] %v888
    %921 = vst [vmem:[#allocation2 + $0xb8] sm:$0xff] %v889
    %922 = vst [vmem:[#allocation2 + $0xc0] sm:$0xff] %v890
    %923 = vst [vmem:[#allocation2 + $0xc8] sm:$0xff] %v891
    %924 = vst [vmem:[#allocation2 + $0xd0] sm:$0xff] %v892
    %925 = vst [vmem:[#allocation2 + $0xd8] sm:$0xff] %v893
    %926 = vst [vmem:[#allocation2 + $0xe0] sm:$0xff] %v894
    %927 = vst [vmem:[#allocation2 + $0xe8] sm:$0xff] %v895
    %928 = vst [vmem:[#allocation2 + $0xf0] sm:$0xff] %v896
    %929 = vst [vmem:[#allocation2 + $0xf8] sm:$0xff] %v897
  $region29: #{gcn_model_forward.7} parent=0 // pred_fallthru
    _
  // Predicated region
  $region30: #{gcn_model_forward.7} parent=0 // pred_check
    %p930 = pneg %p62
  $region31: #{gcn_model_forward.7} parent=0 // pred_check_branch
    %932 = sbr.rel (%p930) target = $region33
  $region32: #{gcn_model_forward.7} parent=0 // pred_region
    %v933 = vld [vmem:[#allocation2] sm:$0xff]
    %v934 = vld [vmem:[#allocation2 + $0x8] sm:$0xff]
    %v935 = vld [vmem:[#allocation2 + $0x10] sm:$0xff]
    %v936 = vld [vmem:[#allocation2 + $0x18] sm:$0xff]
    %v937 = vld [vmem:[#allocation2 + $0x20] sm:$0xff]
    %v938 = vld [vmem:[#allocation2 + $0x28] sm:$0xff]
    %v939 = vld [vmem:[#allocation2 + $0x30] sm:$0xff]
    %v940 = vld [vmem:[#allocation2 + $0x38] sm:$0xff]
    %v941 = vld [vmem:[#allocation2 + $0x40] sm:$0xff]
    %v942 = vld [vmem:[#allocation2 + $0x48] sm:$0xff]
    %v943 = vld [vmem:[#allocation2 + $0x50] sm:$0xff]
    %v944 = vld [vmem:[#allocation2 + $0x58] sm:$0xff]
    %v945 = vld [vmem:[#allocation2 + $0x60] sm:$0xff]
    %v946 = vld [vmem:[#allocation2 + $0x68] sm:$0xff]
    %v947 = vld [vmem:[#allocation2 + $0x70] sm:$0xff]
    %v948 = vld [vmem:[#allocation2 + $0x78] sm:$0xff]
    %v949 = vld [vmem:[#allocation2 + $0x80] sm:$0xff]
    %v950 = vld [vmem:[#allocation2 + $0x88] sm:$0xff]
    %v951 = vld [vmem:[#allocation2 + $0x90] sm:$0xff]
    %v952 = vld [vmem:[#allocation2 + $0x98] sm:$0xff]
    %v953 = vld [vmem:[#allocation2 + $0xa0] sm:$0xff]
    %v954 = vld [vmem:[#allocation2 + $0xa8] sm:$0xff]
    %v955 = vld [vmem:[#allocation2 + $0xb0] sm:$0xff]
    %v956 = vld [vmem:[#allocation2 + $0xb8] sm:$0xff]
    %v957 = vld [vmem:[#allocation2 + $0xc0] sm:$0xff]
    %v958 = vld [vmem:[#allocation2 + $0xc8] sm:$0xff]
    %v959 = vld [vmem:[#allocation2 + $0xd0] sm:$0xff]
    %v960 = vld [vmem:[#allocation2 + $0xd8] sm:$0xff]
    %v961 = vld [vmem:[#allocation2 + $0xe0] sm:$0xff]
    %v962 = vld [vmem:[#allocation2 + $0xe8] sm:$0xff]
    %v963 = vld [vmem:[#allocation2 + $0xf0] sm:$0xff]
    %v964 = vld [vmem:[#allocation2 + $0xf8] sm:$0xff]
    %v965 = vld [vmem:[%s5] sm:$0x1]
    %v967 = vlaneseq
    %v968 = vshrl.u32 %v967, 7
    %v969 = vsub.s32 0, %v968
    %v970 = vrot.slane %v965, %v969
    %v972 = vmul.f32 %v933, %v970
    %v973 = vmul.f32 %v934, %v970
    %v974 = vmul.f32 %v935, %v970
    %v975 = vmul.f32 %v936, %v970
    %v976 = vmul.f32 %v937, %v970
    %v977 = vmul.f32 %v938, %v970
    %v978 = vmul.f32 %v939, %v970
    %v979 = vmul.f32 %v940, %v970
    %v980 = vmul.f32 %v941, %v970
    %v981 = vmul.f32 %v942, %v970
    %v982 = vmul.f32 %v943, %v970
    %v983 = vmul.f32 %v944, %v970
    %v984 = vmul.f32 %v945, %v970
    %v985 = vmul.f32 %v946, %v970
    %v986 = vmul.f32 %v947, %v970
    %v987 = vmul.f32 %v948, %v970
    %v988 = vmul.f32 %v949, %v970
    %v989 = vmul.f32 %v950, %v970
    %v990 = vmul.f32 %v951, %v970
    %v991 = vmul.f32 %v952, %v970
    %v992 = vmul.f32 %v953, %v970
    %v993 = vmul.f32 %v954, %v970
    %v994 = vmul.f32 %v955, %v970
    %v995 = vmul.f32 %v956, %v970
    %v996 = vmul.f32 %v957, %v970
    %v997 = vmul.f32 %v958, %v970
    %v998 = vmul.f32 %v959, %v970
    %v999 = vmul.f32 %v960, %v970
    %v1000 = vmul.f32 %v961, %v970
    %v1001 = vmul.f32 %v962, %v970
    %v1002 = vmul.f32 %v963, %v970
    %v1003 = vmul.f32 %v964, %v970
    %v1004 = vld [vmem:[%s6] sm:$0x1]
    %v1006 = vlaneseq
    %v1007 = vshrl.u32 %v1006, 7
    %v1008 = vsub.s32 0, %v1007
    %v1009 = vrot.slane %v1004, %v1008
    %v1011 = vadd.f32 %v972, %v1009
    %v1012 = vadd.f32 %v973, %v1009
    %v1013 = vadd.f32 %v974, %v1009
    %v1014 = vadd.f32 %v975, %v1009
    %v1015 = vadd.f32 %v976, %v1009
    %v1016 = vadd.f32 %v977, %v1009
    %v1017 = vadd.f32 %v978, %v1009
    %v1018 = vadd.f32 %v979, %v1009
    %v1019 = vadd.f32 %v980, %v1009
    %v1020 = vadd.f32 %v981, %v1009
    %v1021 = vadd.f32 %v982, %v1009
    %v1022 = vadd.f32 %v983, %v1009
    %v1023 = vadd.f32 %v984, %v1009
    %v1024 = vadd.f32 %v985, %v1009
    %v1025 = vadd.f32 %v986, %v1009
    %v1026 = vadd.f32 %v987, %v1009
    %v1027 = vadd.f32 %v988, %v1009
    %v1028 = vadd.f32 %v989, %v1009
    %v1029 = vadd.f32 %v990, %v1009
    %v1030 = vadd.f32 %v991, %v1009
    %v1031 = vadd.f32 %v992, %v1009
    %v1032 = vadd.f32 %v993, %v1009
    %v1033 = vadd.f32 %v994, %v1009
    %v1034 = vadd.f32 %v995, %v1009
    %v1035 = vadd.f32 %v996, %v1009
    %v1036 = vadd.f32 %v997, %v1009
    %v1037 = vadd.f32 %v998, %v1009
    %v1038 = vadd.f32 %v999, %v1009
    %v1039 = vadd.f32 %v1000, %v1009
    %v1040 = vadd.f32 %v1001, %v1009
    %v1041 = vadd.f32 %v1002, %v1009
    %v1042 = vadd.f32 %v1003, %v1009
    %vm1043 = vcmp.ge.f32.partialorder %v1011, 0.0
    %vm1044 = vcmp.ge.f32.partialorder %v1012, 0.0
    %vm1045 = vcmp.ge.f32.partialorder %v1013, 0.0
    %vm1046 = vcmp.ge.f32.partialorder %v1014, 0.0
    %vm1047 = vcmp.ge.f32.partialorder %v1015, 0.0
    %vm1048 = vcmp.ge.f32.partialorder %v1016, 0.0
    %vm1049 = vcmp.ge.f32.partialorder %v1017, 0.0
    %vm1050 = vcmp.ge.f32.partialorder %v1018, 0.0
    %vm1051 = vcmp.ge.f32.partialorder %v1019, 0.0
    %vm1052 = vcmp.ge.f32.partialorder %v1020, 0.0
    %vm1053 = vcmp.ge.f32.partialorder %v1021, 0.0
    %vm1054 = vcmp.ge.f32.partialorder %v1022, 0.0
    %vm1055 = vcmp.ge.f32.partialorder %v1023, 0.0
    %vm1056 = vcmp.ge.f32.partialorder %v1024, 0.0
    %vm1057 = vcmp.ge.f32.partialorder %v1025, 0.0
    %vm1058 = vcmp.ge.f32.partialorder %v1026, 0.0
    %vm1059 = vcmp.ge.f32.partialorder %v1027, 0.0
    %vm1060 = vcmp.ge.f32.partialorder %v1028, 0.0
    %vm1061 = vcmp.ge.f32.partialorder %v1029, 0.0
    %vm1062 = vcmp.ge.f32.partialorder %v1030, 0.0
    %vm1063 = vcmp.ge.f32.partialorder %v1031, 0.0
    %vm1064 = vcmp.ge.f32.partialorder %v1032, 0.0
    %vm1065 = vcmp.ge.f32.partialorder %v1033, 0.0
    %vm1066 = vcmp.ge.f32.partialorder %v1034, 0.0
    %vm1067 = vcmp.ge.f32.partialorder %v1035, 0.0
    %vm1068 = vcmp.ge.f32.partialorder %v1036, 0.0
    %vm1069 = vcmp.ge.f32.partialorder %v1037, 0.0
    %vm1070 = vcmp.ge.f32.partialorder %v1038, 0.0
    %vm1071 = vcmp.ge.f32.partialorder %v1039, 0.0
    %vm1072 = vcmp.ge.f32.partialorder %v1040, 0.0
    %vm1073 = vcmp.ge.f32.partialorder %v1041, 0.0
    %vm1074 = vcmp.ge.f32.partialorder %v1042, 0.0
    %v1075 = vmul.f32 %v1011, 0.01
    %v1076 = vmul.f32 %v1012, 0.01
    %v1077 = vmul.f32 %v1013, 0.01
    %v1078 = vmul.f32 %v1014, 0.01
    %v1079 = vmul.f32 %v1015, 0.01
    %v1080 = vmul.f32 %v1016, 0.01
    %v1081 = vmul.f32 %v1017, 0.01
    %v1082 = vmul.f32 %v1018, 0.01
    %v1083 = vmul.f32 %v1019, 0.01
    %v1084 = vmul.f32 %v1020, 0.01
    %v1085 = vmul.f32 %v1021, 0.01
    %v1086 = vmul.f32 %v1022, 0.01
    %v1087 = vmul.f32 %v1023, 0.01
    %v1088 = vmul.f32 %v1024, 0.01
    %v1089 = vmul.f32 %v1025, 0.01
    %v1090 = vmul.f32 %v1026, 0.01
    %v1091 = vmul.f32 %v1027, 0.01
    %v1092 = vmul.f32 %v1028, 0.01
    %v1093 = vmul.f32 %v1029, 0.01
    %v1094 = vmul.f32 %v1030, 0.01
    %v1095 = vmul.f32 %v1031, 0.01
    %v1096 = vmul.f32 %v1032, 0.01
    %v1097 = vmul.f32 %v1033, 0.01
    %v1098 = vmul.f32 %v1034, 0.01
    %v1099 = vmul.f32 %v1035, 0.01
    %v1100 = vmul.f32 %v1036, 0.01
    %v1101 = vmul.f32 %v1037, 0.01
    %v1102 = vmul.f32 %v1038, 0.01
    %v1103 = vmul.f32 %v1039, 0.01
    %v1104 = vmul.f32 %v1040, 0.01
    %v1105 = vmul.f32 %v1041, 0.01
    %v1106 = vmul.f32 %v1042, 0.01
    %v1107 = vsel %vm1043, %v1011, %v1075
    %v1108 = vsel %vm1044, %v1012, %v1076
    %v1109 = vsel %vm1045, %v1013, %v1077
    %v1110 = vsel %vm1046, %v1014, %v1078
    %v1111 = vsel %vm1047, %v1015, %v1079
    %v1112 = vsel %vm1048, %v1016, %v1080
    %v1113 = vsel %vm1049, %v1017, %v1081
    %v1114 = vsel %vm1050, %v1018, %v1082
    %v1115 = vsel %vm1051, %v1019, %v1083
    %v1116 = vsel %vm1052, %v1020, %v1084
    %v1117 = vsel %vm1053, %v1021, %v1085
    %v1118 = vsel %vm1054, %v1022, %v1086
    %v1119 = vsel %vm1055, %v1023, %v1087
    %v1120 = vsel %vm1056, %v1024, %v1088
    %v1121 = vsel %vm1057, %v1025, %v1089
    %v1122 = vsel %vm1058, %v1026, %v1090
    %v1123 = vsel %vm1059, %v1027, %v1091
    %v1124 = vsel %vm1060, %v1028, %v1092
    %v1125 = vsel %vm1061, %v1029, %v1093
    %v1126 = vsel %vm1062, %v1030, %v1094
    %v1127 = vsel %vm1063, %v1031, %v1095
    %v1128 = vsel %vm1064, %v1032, %v1096
    %v1129 = vsel %vm1065, %v1033, %v1097
    %v1130 = vsel %vm1066, %v1034, %v1098
    %v1131 = vsel %vm1067, %v1035, %v1099
    %v1132 = vsel %vm1068, %v1036, %v1100
    %v1133 = vsel %vm1069, %v1037, %v1101
    %v1134 = vsel %vm1070, %v1038, %v1102
    %v1135 = vsel %vm1071, %v1039, %v1103
    %v1136 = vsel %vm1072, %v1040, %v1104
    %v1137 = vsel %vm1073, %v1041, %v1105
    %v1138 = vsel %vm1074, %v1042, %v1106
    %v1139 = vpack.c.bf16 %v1108, %v1107
    %v1140 = vpack.c.bf16 %v1110, %v1109
    %v1141 = vpack.c.bf16 %v1112, %v1111
    %v1142 = vpack.c.bf16 %v1114, %v1113
    %v1143 = vpack.c.bf16 %v1116, %v1115
    %v1144 = vpack.c.bf16 %v1118, %v1117
    %v1145 = vpack.c.bf16 %v1120, %v1119
    %v1146 = vpack.c.bf16 %v1122, %v1121
    %v1147 = vpack.c.bf16 %v1124, %v1123
    %v1148 = vpack.c.bf16 %v1126, %v1125
    %v1149 = vpack.c.bf16 %v1128, %v1127
    %v1150 = vpack.c.bf16 %v1130, %v1129
    %v1151 = vpack.c.bf16 %v1132, %v1131
    %v1152 = vpack.c.bf16 %v1134, %v1133
    %v1153 = vpack.c.bf16 %v1136, %v1135
    %v1154 = vpack.c.bf16 %v1138, %v1137
    %v1171 = vunpack.c.l.b16 %v1139
    %v1172 = vunpack.c.h.b16 %v1139
    %v1173 = vunpack.c.l.b16 %v1140
    %v1174 = vunpack.c.h.b16 %v1140
    %v1175 = vunpack.c.l.b16 %v1141
    %v1176 = vunpack.c.h.b16 %v1141
    %v1177 = vunpack.c.l.b16 %v1142
    %v1178 = vunpack.c.h.b16 %v1142
    %v1179 = vunpack.c.l.b16 %v1143
    %v1180 = vunpack.c.h.b16 %v1143
    %v1181 = vunpack.c.l.b16 %v1144
    %v1182 = vunpack.c.h.b16 %v1144
    %v1183 = vunpack.c.l.b16 %v1145
    %v1184 = vunpack.c.h.b16 %v1145
    %v1185 = vunpack.c.l.b16 %v1146
    %v1186 = vunpack.c.h.b16 %v1146
    %v1187 = vunpack.c.l.b16 %v1147
    %v1188 = vunpack.c.h.b16 %v1147
    %v1189 = vunpack.c.l.b16 %v1148
    %v1190 = vunpack.c.h.b16 %v1148
    %v1191 = vunpack.c.l.b16 %v1149
    %v1192 = vunpack.c.h.b16 %v1149
    %v1193 = vunpack.c.l.b16 %v1150
    %v1194 = vunpack.c.h.b16 %v1150
    %v1195 = vunpack.c.l.b16 %v1151
    %v1196 = vunpack.c.h.b16 %v1151
    %v1197 = vunpack.c.l.b16 %v1152
    %v1198 = vunpack.c.h.b16 %v1152
    %v1199 = vunpack.c.l.b16 %v1153
    %v1200 = vunpack.c.h.b16 %v1153
    %v1201 = vunpack.c.l.b16 %v1154
    %v1202 = vunpack.c.h.b16 %v1154
    %v1203 = vpack.c.b16 %v1171, %v1171
    %v1204 = vpack.c.b16 %v1172, %v1172
    %v1205 = vpack.c.b16 %v1173, %v1173
    %v1206 = vpack.c.b16 %v1174, %v1174
    %v1207 = vpack.c.b16 %v1175, %v1175
    %v1208 = vpack.c.b16 %v1176, %v1176
    %v1209 = vpack.c.b16 %v1177, %v1177
    %v1210 = vpack.c.b16 %v1178, %v1178
    %v1211 = vpack.c.b16 %v1179, %v1179
    %v1212 = vpack.c.b16 %v1180, %v1180
    %v1213 = vpack.c.b16 %v1181, %v1181
    %v1214 = vpack.c.b16 %v1182, %v1182
    %v1215 = vpack.c.b16 %v1183, %v1183
    %v1216 = vpack.c.b16 %v1184, %v1184
    %v1217 = vpack.c.b16 %v1185, %v1185
    %v1218 = vpack.c.b16 %v1186, %v1186
    %v1219 = vpack.c.b16 %v1187, %v1187
    %v1220 = vpack.c.b16 %v1188, %v1188
    %v1221 = vpack.c.b16 %v1189, %v1189
    %v1222 = vpack.c.b16 %v1190, %v1190
    %v1223 = vpack.c.b16 %v1191, %v1191
    %v1224 = vpack.c.b16 %v1192, %v1192
    %v1225 = vpack.c.b16 %v1193, %v1193
    %v1226 = vpack.c.b16 %v1194, %v1194
    %v1227 = vpack.c.b16 %v1195, %v1195
    %v1228 = vpack.c.b16 %v1196, %v1196
    %v1229 = vpack.c.b16 %v1197, %v1197
    %v1230 = vpack.c.b16 %v1198, %v1198
    %v1231 = vpack.c.b16 %v1199, %v1199
    %v1232 = vpack.c.b16 %v1200, %v1200
    %v1233 = vpack.c.b16 %v1201, %v1201
    %v1234 = vpack.c.b16 %v1202, %v1202
    %1267 = vst [vmem:[%s7] sm:$0xf] %v1203
    %1268 = vst [vmem:[%s7 + $0x4] sm:$0xf] %v1204
    %1269 = vst [vmem:[%s7 + $0x8] sm:$0xf] %v1205
    %1270 = vst [vmem:[%s7 + $0xc] sm:$0xf] %v1206
    %1271 = vst [vmem:[%s7 + $0x10] sm:$0xf] %v1207
    %1272 = vst [vmem:[%s7 + $0x14] sm:$0xf] %v1208
    %1273 = vst [vmem:[%s7 + $0x18] sm:$0xf] %v1209
    %1274 = vst [vmem:[%s7 + $0x1c] sm:$0xf] %v1210
    %1275 = vst [vmem:[%s7 + $0x20] sm:$0xf] %v1211
    %1276 = vst [vmem:[%s7 + $0x24] sm:$0xf] %v1212
    %1277 = vst [vmem:[%s7 + $0x28] sm:$0xf] %v1213
    %1278 = vst [vmem:[%s7 + $0x2c] sm:$0xf] %v1214
    %1279 = vst [vmem:[%s7 + $0x30] sm:$0xf] %v1215
    %1280 = vst [vmem:[%s7 + $0x34] sm:$0xf] %v1216
    %1281 = vst [vmem:[%s7 + $0x38] sm:$0xf] %v1217
    %1282 = vst [vmem:[%s7 + $0x3c] sm:$0xf] %v1218
    %1283 = vst [vmem:[%s7 + $0x40] sm:$0xf] %v1219
    %1284 = vst [vmem:[%s7 + $0x44] sm:$0xf] %v1220
    %1285 = vst [vmem:[%s7 + $0x48] sm:$0xf] %v1221
    %1286 = vst [vmem:[%s7 + $0x4c] sm:$0xf] %v1222
    %1287 = vst [vmem:[%s7 + $0x50] sm:$0xf] %v1223
    %1288 = vst [vmem:[%s7 + $0x54] sm:$0xf] %v1224
    %1289 = vst [vmem:[%s7 + $0x58] sm:$0xf] %v1225
    %1290 = vst [vmem:[%s7 + $0x5c] sm:$0xf] %v1226
    %1291 = vst [vmem:[%s7 + $0x60] sm:$0xf] %v1227
    %1292 = vst [vmem:[%s7 + $0x64] sm:$0xf] %v1228
    %1293 = vst [vmem:[%s7 + $0x68] sm:$0xf] %v1229
    %1294 = vst [vmem:[%s7 + $0x6c] sm:$0xf] %v1230
    %1295 = vst [vmem:[%s7 + $0x70] sm:$0xf] %v1231
    %1296 = vst [vmem:[%s7 + $0x74] sm:$0xf] %v1232
    %1297 = vst [vmem:[%s7 + $0x78] sm:$0xf] %v1233
    %1298 = vst [vmem:[%s7 + $0x7c] sm:$0xf] %v1234
  $region33: #{gcn_model_forward.7} parent=0 // pred_fallthru
    _
  // Predicated region
  $region34: #{gcn_model_forward.7} parent=0 // pred_check
    _
  $region35: #{gcn_model_forward.7} parent=0 // pred_check_branch
    %1300 = sbr.rel (0) target = $region37
  $region36: #{gcn_model_forward.7} parent=0 // pred_region
    _
  $region37: #{gcn_model_forward.7} parent=0 // pred_fallthru
    _
  // Predicated region
  $region38: #{gcn_model_forward.7} parent=0 // pred_check
    _
  $region39: #{gcn_model_forward.7} parent=0 // pred_check_branch
    %1302 = sbr.rel (0) target = $region41
  $region40: #{gcn_model_forward.7} parent=0 // pred_region
    _
  $region41: #{gcn_model_forward.7} parent=0 // pred_fallthru
    _

</llo_original>
